<compile_context>
chip_gen: v7x
topology: tpu7x:2x2x1
jax: 0.10.0
libtpu: 0.0.40
codegen_flags: <defaults>
</compile_context>

<pallas_src>
import jax
import jax.numpy as jnp
from jax.experimental import pallas as pl
from jax.experimental.pallas import tpu as pltpu

HIDDEN = 128      # H
N_CLASSES = 10
D_IN = 28         # GRUCell_1 input features (= W * C)
D_PAD = 128       # lane-padded input feature width
OUT_PAD = 128     # lane-padded classifier width


def _rnn_kernel(x_ref, wi1_ref, bi1_ref, wh1_ref, bh1_ref,
                w2_ref, b2_ref, wo_ref, bo_ref, out_ref):
    """2-layer GRU recurrence + linear head; one batch tile, fully VMEM resident.

    x_ref  : (T, nb, D_PAD)   time-major, feature dim zero-padded to 128 lanes
    wi1_ref: (D_PAD, 3H)      layer-1 input weights  [ r | z | n ] (zero-padded rows)
    bi1_ref: (1, 3H)          [ b_ir+b_hr | b_iz+b_hz | b_in ]
    wh1_ref: (H, 3H)          layer-1 recurrent weights [ r | z | n ]
    bh1_ref: (1, 3H)          [ 0 | 0 | b_hn ]   (b_hn must stay inside r*(...))
    w2_ref : (2H, 4H)         fused layer-2 weights  [ r|z | i_n | h_n ]
    b2_ref : (1, 4H)          [ b_irz+b_hrz | b_in | b_hn ]
    wo_ref : (H, OUT_PAD), bo_ref: (1, OUT_PAD)
    out_ref: (nb, OUT_PAD)
    """
    T, nb, _ = x_ref.shape
    H = HIDDEN

    # ---- hoisted layer-1 input projection: ONE MXU pass for all T steps ----
    # Data-parallel in t, so it comes off the serial per-step chain entirely.
    x2 = x_ref[...].reshape(T * nb, D_PAD).astype(wi1_ref.dtype)
    gi1_all = (jnp.dot(x2, wi1_ref[...], preferred_element_type=jnp.float32)
               + bi1_ref[...])                                    # (T*nb, 3H)

    # ---- hoisted bias broadcasts (JAX does not CSE broadcast_in_dim) -------
    bh1b = jnp.broadcast_to(bh1_ref[...], (nb, 3 * H))
    b2b = jnp.broadcast_to(b2_ref[...], (nb, 4 * H))

    h1 = jnp.zeros((nb, H), jnp.float32)
    h2 = jnp.zeros((nb, H), jnp.float32)

    # Fully-unrolled recurrence (T static and small): one big basic block so the
    # scheduler can overlap step t+1 layer-1 with step t layer-2 MXU drains.
    for t in range(T):
        # ---- layer 1: per-step work is only the recurrent K=128 matmul -----
        gi1 = gi1_all[t * nb:(t + 1) * nb]                        # (nb, 3H)
        gh1 = (jnp.dot(h1.astype(wh1_ref.dtype), wh1_ref[...],
                       preferred_element_type=jnp.float32) + bh1b)
        rz1 = jax.nn.sigmoid(gi1[:, :2 * H] + gh1[:, :2 * H])     # fused r|z
        r1, z1 = rz1[:, :H], rz1[:, H:]
        n1 = jnp.tanh(gi1[:, 2 * H:] + r1 * gh1[:, 2 * H:])
        h1 = jnp.maximum((1.0 - z1) * n1 + z1 * h1, 0.0)          # ReLU

        # ---- layer 2: single fused K=256 MXU pass  [h1 | h2] @ w2_fused -----
        hh = jnp.concatenate([h1, h2], axis=-1).astype(w2_ref.dtype)
        g2 = (jnp.dot(hh, w2_ref[...],
                      preferred_element_type=jnp.float32) + b2b)  # (nb, 4H)
        rz2 = jax.nn.sigmoid(g2[:, :2 * H])                       # fused r|z
        r2, z2 = rz2[:, :H], rz2[:, H:]
        n2 = jnp.tanh(g2[:, 2 * H:3 * H] + r2 * g2[:, 3 * H:])
        h2 = jnp.maximum((1.0 - z2) * n2 + z2 * h2, 0.0)          # ReLU

    # ---- classifier head (lane-padded to 128; sliced to 10 outside) --------
    out_ref[...] = (jnp.dot(h2.astype(wo_ref.dtype), wo_ref[...],
                            preferred_element_type=jnp.float32) + bo_ref[...])


def _prep_params(params, matmul_dtype):
    """Build the padded / fused weight layout consumed by the kernel."""
    H = HIDDEN
    w_ih1, w_hh1 = params["w_ih1"], params["w_hh1"]
    b_ih1, b_hh1 = params["b_ih1"], params["b_hh1"]
    w_ih2, w_hh2 = params["w_ih2"], params["w_hh2"]
    b_ih2, b_hh2 = params["b_ih2"], params["b_hh2"]

    d_in = w_ih1.shape[0]

    # Layer 1: input projection hoisted -> keep W_ih1 and W_hh1 separate.
    # r/z biases (both) and b_in go into the hoisted projection bias; b_hn must
    # stay on the recurrent side (inside r*(...)).
    wi1 = jnp.zeros((D_PAD, 3 * H), jnp.float32).at[:d_in].set(w_ih1)
    bi1 = jnp.concatenate(
        [b_ih1[:, :2 * H] + b_hh1[:, :2 * H], b_ih1[:, 2 * H:]], axis=1)
    wh1 = w_hh1
    bh1 = jnp.concatenate(
        [jnp.zeros((1, 2 * H), jnp.float32), b_hh1[:, 2 * H:]], axis=1)

    # Layer 2: fused [h1|h2] @ w2 with block-diagonal n-gate.
    # Rows 0:H multiply h1 (the cell input), rows H:2H multiply h2 (the hidden).
    # Column blocks: [ r|z fused | i_n | h_n ].
    zeros_hh = jnp.zeros((H, H), jnp.float32)
    w2_top = jnp.concatenate(
        [w_ih2[:, :2 * H], w_ih2[:, 2 * H:], zeros_hh], axis=1)
    w2_bot = jnp.concatenate(
        [w_hh2[:, :2 * H], zeros_hh, w_hh2[:, 2 * H:]], axis=1)
    w2 = jnp.concatenate([w2_top, w2_bot], axis=0)                # (2H, 4H)
    b2 = jnp.concatenate(
        [b_ih2[:, :2 * H] + b_hh2[:, :2 * H],                     # pre-summed r/z
         b_ih2[:, 2 * H:], b_hh2[:, 2 * H:]], axis=1)             # (1, 4H)

    wo = jnp.zeros((H, OUT_PAD), jnp.float32).at[:, :N_CLASSES].set(params["w_out"])
    bo = jnp.zeros((1, OUT_PAD), jnp.float32).at[:, :N_CLASSES].set(params["b_out"])

    cast = lambda w: w.astype(matmul_dtype)
    return cast(wi1), bi1, cast(wh1), bh1, cast(w2), b2, cast(wo), bo


def _round_up(v, m):
    return -(-v // m) * m


def my_rnn2_pallas(x_nchw, params, *, batch_tile=128, matmul_dtype=jnp.float32):
    """x_nchw: (N, C, H, W) float32 with W*C == 28.  Returns (N, 10).

    matmul_dtype=jnp.bfloat16 halves MXU latency / weight traffic on v5e/v6e/v7x
    but loosens accuracy beyond ~1e-4; the default f32 matches the reference.
    """
    n, c, h, w = x_nchw.shape
    d_in = w * c
    assert d_in == D_IN, "GRUCell_1 expects input feature size 28 (= W*C)"

    # Glue reshapes in plain JAX: NCHW -> NHWC -> (N, T, D) -> pad D -> (T, N, D_PAD)
    x = jnp.transpose(x_nchw, (0, 2, 3, 1)).reshape(n, h, d_in).astype(jnp.float32)
    x = jnp.pad(x, ((0, 0), (0, 0), (0, D_PAD - d_in)))

    # Sublane-aligned batch tile (>= 8 rows => unmasked (8,128) tiles).  For
    # 8 < n, aim for >= 2 grid tiles so both v7x TensorCores get work on the
    # "parallel" batch axis; v5e/v6e are single-TC so the extra tile is benign.
    batch_tile = _round_up(max(batch_tile, 8), 8)
    if n <= 8:
        nb = 8
    else:
        nb = min(batch_tile, _round_up(-(-n // 2), 8))
    n_pad = _round_up(n, nb)
    if n_pad != n:
        x = jnp.pad(x, ((0, n_pad - n), (0, 0), (0, 0)))
    x_tmaj = jnp.transpose(x, (1, 0, 2))                          # (T, n_pad, D_PAD)

    wi1, bi1, wh1, bh1, w2, b2, wo, bo = _prep_params(params, matmul_dtype)

    T = h
    grid = (n_pad // nb,)
    # VMEM footprint per block is a few MiB (weights + one batch tile + the
    # hoisted (T*nb, 3H) projection): well under the default scoped VMEM on
    # v5e/v6e/v7x, so no vmem_limit_bytes override is needed at these shapes.
    out_pad = pl.pallas_call(
        _rnn_kernel,
        out_shape=jax.ShapeDtypeStruct((n_pad, OUT_PAD), jnp.float32),
        grid=grid,
        in_specs=[
            pl.BlockSpec((T, nb, D_PAD), lambda i: (0, i, 0)),             # x
            pl.BlockSpec((D_PAD, 3 * HIDDEN), lambda i: (0, 0)),           # W_ih1 (padded)
            pl.BlockSpec((1, 3 * HIDDEN), lambda i: (0, 0)),               # bi1
            pl.BlockSpec((HIDDEN, 3 * HIDDEN), lambda i: (0, 0)),          # W_hh1
            pl.BlockSpec((1, 3 * HIDDEN), lambda i: (0, 0)),               # bh1 (n only)
            pl.BlockSpec((2 * HIDDEN, 4 * HIDDEN), lambda i: (0, 0)),      # w2 fused
            pl.BlockSpec((1, 4 * HIDDEN), lambda i: (0, 0)),               # b2 fused
            pl.BlockSpec((HIDDEN, OUT_PAD), lambda i: (0, 0)),             # w_out
            pl.BlockSpec((1, OUT_PAD), lambda i: (0, 0)),                  # b_out
        ],
        out_specs=pl.BlockSpec((nb, OUT_PAD), lambda i: (i, 0)),
        compiler_params=pltpu.CompilerParams(
            dimension_semantics=("parallel",)),
    )(x_tmaj, wi1, bi1, wh1, bh1, w2, b2, wo, bo)

    return out_pad[:n, :N_CLASSES]


# ----------------------------------------------------------------------------
# Deterministic synthetic parameters + pure-JAX reference (PyTorch semantics).
# ----------------------------------------------------------------------------
def init_params(key, d_in=D_IN, hidden=HIDDEN, n_out=N_CLASSES):
    ks = jax.random.split(key, 10)
    s = 1.0 / jnp.sqrt(hidden)

    def u(k, shape):
        return jax.random.uniform(k, shape, jnp.float32, -s, s)

    # Stored transposed relative to PyTorch: (in_features, 3*hidden)
    return {
        "w_ih1": u(ks[0], (d_in, 3 * hidden)),
        "w_hh1": u(ks[1], (hidden, 3 * hidden)),
        "b_ih1": u(ks[2], (1, 3 * hidden)),
        "b_hh1": u(ks[3], (1, 3 * hidden)),
        "w_ih2": u(ks[4], (hidden, 3 * hidden)),
        "w_hh2": u(ks[5], (hidden, 3 * hidden)),
        "b_ih2": u(ks[6], (1, 3 * hidden)),
        "b_hh2": u(ks[7], (1, 3 * hidden)),
        "w_out": u(ks[8], (hidden, n_out)),
        "b_out": u(ks[9], (1, n_out)),
    }


def _gru_cell_ref(x, h, w_ih, w_hh, b_ih, b_hh):
    """PyTorch nn.GRUCell semantics (gate order r, z, n)."""
    H = HIDDEN
    gi = jnp.dot(x, w_ih) + b_ih
    gh = jnp.dot(h, w_hh) + b_hh
    r = jax.nn.sigmoid(gi[:, :H] + gh[:, :H])
    z = jax.nn.sigmoid(gi[:, H:2 * H] + gh[:, H:2 * H])
    n = jnp.tanh(gi[:, 2 * H:] + r * gh[:, 2 * H:])
    return (1.0 - z) * n + z * h


def _reference(x_nchw, params):
    n, c, h, w = x_nchw.shape
    x = jnp.transpose(x_nchw, (0, 2, 3, 1)).reshape(n, h, w * c)
    h1 = jnp.zeros((n, HIDDEN), jnp.float32)
    h2 = jnp.zeros((n, HIDDEN), jnp.float32)
    for t in range(h):
        h1 = jnp.maximum(_gru_cell_ref(x[:, t, :], h1, params["w_ih1"],
                                       params["w_hh1"], params["b_ih1"],
                                       params["b_hh1"]), 0.0)
        h2 = jnp.maximum(_gru_cell_ref(h1, h2, params["w_ih2"], params["w_hh2"],
                                       params["b_ih2"], params["b_hh2"]), 0.0)
    return jnp.dot(h2, params["w_out"]) + params["b_out"]


if __name__ == "__main__":
    key = jax.random.PRNGKey(0)
    k_x, k_p = jax.random.split(key)

    # Shapes consistent with the module: C*W must be 28 (GRUCell_1 input).
    # batch=2, channels=1, H (time steps)=8, W=28.
    x = jax.random.normal(k_x, (2, 1, 8, 28), jnp.float32)
    params = init_params(k_p)

    out = my_rnn2_pallas(x, params)
    out = jax.block_until_ready(out)

    ref = jax.block_until_ready(_reference(x, params))
    assert out.shape == (2, N_CLASSES)
    assert jnp.allclose(out, ref, atol=1e-4, rtol=1e-4), "mismatch vs reference"

    print("KERNEL_OK")
</pallas_src>

<mosaic_0001>
module attributes {stable_mosaic.version = 11 : i64} {
  func.func @_rnn_kernel(%arg0: i32, %arg1: memref<8x8x128xf32, #tpu.memory_space<vmem>>, %arg2: memref<128x384xf32, #tpu.memory_space<vmem>>, %arg3: memref<1x384xf32, #tpu.memory_space<vmem>>, %arg4: memref<128x384xf32, #tpu.memory_space<vmem>>, %arg5: memref<1x384xf32, #tpu.memory_space<vmem>>, %arg6: memref<256x512xf32, #tpu.memory_space<vmem>>, %arg7: memref<1x512xf32, #tpu.memory_space<vmem>>, %arg8: memref<128x128xf32, #tpu.memory_space<vmem>>, %arg9: memref<1x128xf32, #tpu.memory_space<vmem>>, %arg10: memref<8x128xf32, #tpu.memory_space<vmem>>) attributes {dimension_semantics = [#tpu.dimension_semantics<parallel>], iteration_bounds = array<i64: 1>, scalar_prefetch = 0 : i64, scratch_operands = 0 : i64, tpu.core_type = #tpu.core_type<tc>, window_params = [{transform_indices = @transform_0, window_bounds = array<i64: 8, 8, 128>}, {pipeline_mode = #tpu.pipeline_mode<synchronous>, transform_indices = @transform_1, window_bounds = array<i64: 128, 384>}, {pipeline_mode = #tpu.pipeline_mode<synchronous>, transform_indices = @transform_2, window_bounds = array<i64: 1, 384>}, {pipeline_mode = #tpu.pipeline_mode<synchronous>, transform_indices = @transform_3, window_bounds = array<i64: 128, 384>}, {pipeline_mode = #tpu.pipeline_mode<synchronous>, transform_indices = @transform_4, window_bounds = array<i64: 1, 384>}, {pipeline_mode = #tpu.pipeline_mode<synchronous>, transform_indices = @transform_5, window_bounds = array<i64: 256, 512>}, {pipeline_mode = #tpu.pipeline_mode<synchronous>, transform_indices = @transform_6, window_bounds = array<i64: 1, 512>}, {pipeline_mode = #tpu.pipeline_mode<synchronous>, transform_indices = @transform_7, window_bounds = array<i64: 128, 128>}, {pipeline_mode = #tpu.pipeline_mode<synchronous>, transform_indices = @transform_8, window_bounds = array<i64: 1, 128>}, {transform_indices = @transform_9, window_bounds = array<i64: 8, 128>}]} {
    %c0 = arith.constant 0 : index
    %c0_0 = arith.constant 0 : index
    %c0_1 = arith.constant 0 : index
    %0 = vector.load %arg1[%c0, %c0_0, %c0_1] : memref<8x8x128xf32, #tpu.memory_space<vmem>>, vector<8x8x128xf32>
    %1 = vector.shape_cast %0 : vector<8x8x128xf32> to vector<64x128xf32>
    %c0_2 = arith.constant 0 : index
    %c0_3 = arith.constant 0 : index
    %2 = vector.load %arg2[%c0_2, %c0_3] : memref<128x384xf32, #tpu.memory_space<vmem>>, vector<128x384xf32>
    %cst = arith.constant dense<0.000000e+00> : vector<64x384xf32>
    %3 = tpu.matmul %1, %2, %cst {dimension_numbers = #tpu.dot_dimension_numbers<[1], [0], [0], [1], [0, 0, 1, 1], [], []>} : vector<64x128xf32>, vector<128x384xf32>, vector<64x384xf32> -> vector<64x384xf32>
    %c0_4 = arith.constant 0 : index
    %c0_5 = arith.constant 0 : index
    %4 = vector.load %arg3[%c0_4, %c0_5] : memref<1x384xf32, #tpu.memory_space<vmem>>, vector<1x384xf32>
    %5 = vector.broadcast %4 : vector<1x384xf32> to vector<64x384xf32>
    %6 = arith.addf %3, %5 : vector<64x384xf32>
    %c0_6 = arith.constant 0 : index
    %c0_7 = arith.constant 0 : index
    %7 = vector.load %arg5[%c0_6, %c0_7] : memref<1x384xf32, #tpu.memory_space<vmem>>, vector<1x384xf32>
    %8 = vector.shape_cast %7 : vector<1x384xf32> to vector<1x384xf32>
    %9 = vector.broadcast %8 : vector<1x384xf32> to vector<8x384xf32>
    %c0_8 = arith.constant 0 : index
    %c0_9 = arith.constant 0 : index
    %10 = vector.load %arg7[%c0_8, %c0_9] : memref<1x512xf32, #tpu.memory_space<vmem>>, vector<1x512xf32>
    %11 = vector.shape_cast %10 : vector<1x512xf32> to vector<1x512xf32>
    %12 = vector.broadcast %11 : vector<1x512xf32> to vector<8x512xf32>
    %cst_10 = arith.constant 0.000000e+00 : f32
    %13 = vector.broadcast %cst_10 : f32 to vector<8x128xf32>
    %cst_11 = arith.constant 0.000000e+00 : f32
    %14 = vector.broadcast %cst_11 : f32 to vector<8x128xf32>
    %15 = vector.extract_strided_slice %6 {offsets = [0, 0], sizes = [8, 384], strides = [1, 1]} : vector<64x384xf32> to vector<8x384xf32>
    %c0_12 = arith.constant 0 : index
    %c0_13 = arith.constant 0 : index
    %16 = vector.load %arg4[%c0_12, %c0_13] : memref<128x384xf32, #tpu.memory_space<vmem>>, vector<128x384xf32>
    %cst_14 = arith.constant dense<0.000000e+00> : vector<8x384xf32>
    %17 = tpu.matmul %13, %16, %cst_14 {dimension_numbers = #tpu.dot_dimension_numbers<[1], [0], [0], [1], [0, 0, 1, 1], [], []>} : vector<8x128xf32>, vector<128x384xf32>, vector<8x384xf32> -> vector<8x384xf32>
    %18 = arith.addf %17, %9 : vector<8x384xf32>
    %19 = vector.extract_strided_slice %15 {offsets = [0, 0], sizes = [8, 256], strides = [1, 1]} : vector<8x384xf32> to vector<8x256xf32>
    %20 = vector.extract_strided_slice %18 {offsets = [0, 0], sizes = [8, 256], strides = [1, 1]} : vector<8x384xf32> to vector<8x256xf32>
    %21 = arith.addf %19, %20 : vector<8x256xf32>
    %22 = arith.negf %21 : vector<8x256xf32>
    %23 = math.exp %22 : vector<8x256xf32>
    %cst_15 = arith.constant 1.000000e+00 : f32
    %24 = vector.broadcast %cst_15 : f32 to vector<8x256xf32>
    %25 = arith.addf %24, %23 : vector<8x256xf32>
    %26 = arith.divf %24, %25 : vector<8x256xf32>
    %27 = vector.extract_strided_slice %26 {offsets = [0, 0], sizes = [8, 128], strides = [1, 1]} : vector<8x256xf32> to vector<8x128xf32>
    %28 = vector.extract_strided_slice %26 {offsets = [0, 128], sizes = [8, 128], strides = [1, 1]} : vector<8x256xf32> to vector<8x128xf32>
    %29 = vector.extract_strided_slice %15 {offsets = [0, 256], sizes = [8, 128], strides = [1, 1]} : vector<8x384xf32> to vector<8x128xf32>
    %30 = vector.extract_strided_slice %18 {offsets = [0, 256], sizes = [8, 128], strides = [1, 1]} : vector<8x384xf32> to vector<8x128xf32>
    %31 = arith.mulf %27, %30 : vector<8x128xf32>
    %32 = arith.addf %29, %31 : vector<8x128xf32>
    %33 = math.tanh %32 : vector<8x128xf32>
    %cst_16 = arith.constant 1.000000e+00 : f32
    %34 = vector.broadcast %cst_16 : f32 to vector<8x128xf32>
    %35 = arith.subf %34, %28 : vector<8x128xf32>
    %36 = arith.mulf %35, %33 : vector<8x128xf32>
    %37 = arith.mulf %28, %13 : vector<8x128xf32>
    %38 = arith.addf %36, %37 : vector<8x128xf32>
    %cst_17 = arith.constant 0.000000e+00 : f32
    %39 = vector.broadcast %cst_17 : f32 to vector<8x128xf32>
    %40 = arith.maximumf %38, %39 : vector<8x128xf32>
    %41 = tpu.concatenate %40, %14 in 1 : vector<8x128xf32>, vector<8x128xf32> -> vector<8x256xf32>
    %c0_18 = arith.constant 0 : index
    %c0_19 = arith.constant 0 : index
    %42 = vector.load %arg6[%c0_18, %c0_19] : memref<256x512xf32, #tpu.memory_space<vmem>>, vector<256x512xf32>
    %cst_20 = arith.constant dense<0.000000e+00> : vector<8x512xf32>
    %43 = tpu.matmul %41, %42, %cst_20 {dimension_numbers = #tpu.dot_dimension_numbers<[1], [0], [0], [1], [0, 0, 1, 1], [], []>} : vector<8x256xf32>, vector<256x512xf32>, vector<8x512xf32> -> vector<8x512xf32>
    %44 = arith.addf %43, %12 : vector<8x512xf32>
    %45 = vector.extract_strided_slice %44 {offsets = [0, 0], sizes = [8, 256], strides = [1, 1]} : vector<8x512xf32> to vector<8x256xf32>
    %46 = arith.negf %45 : vector<8x256xf32>
    %47 = math.exp %46 : vector<8x256xf32>
    %cst_21 = arith.constant 1.000000e+00 : f32
    %48 = vector.broadcast %cst_21 : f32 to vector<8x256xf32>
    %49 = arith.addf %48, %47 : vector<8x256xf32>
    %50 = arith.divf %48, %49 : vector<8x256xf32>
    %51 = vector.extract_strided_slice %50 {offsets = [0, 0], sizes = [8, 128], strides = [1, 1]} : vector<8x256xf32> to vector<8x128xf32>
    %52 = vector.extract_strided_slice %50 {offsets = [0, 128], sizes = [8, 128], strides = [1, 1]} : vector<8x256xf32> to vector<8x128xf32>
    %53 = vector.extract_strided_slice %44 {offsets = [0, 256], sizes = [8, 128], strides = [1, 1]} : vector<8x512xf32> to vector<8x128xf32>
    %54 = vector.extract_strided_slice %44 {offsets = [0, 384], sizes = [8, 128], strides = [1, 1]} : vector<8x512xf32> to vector<8x128xf32>
    %55 = arith.mulf %51, %54 : vector<8x128xf32>
    %56 = arith.addf %53, %55 : vector<8x128xf32>
    %57 = math.tanh %56 : vector<8x128xf32>
    %cst_22 = arith.constant 1.000000e+00 : f32
    %58 = vector.broadcast %cst_22 : f32 to vector<8x128xf32>
    %59 = arith.subf %58, %52 : vector<8x128xf32>
    %60 = arith.mulf %59, %57 : vector<8x128xf32>
    %61 = arith.mulf %52, %14 : vector<8x128xf32>
    %62 = arith.addf %60, %61 : vector<8x128xf32>
    %cst_23 = arith.constant 0.000000e+00 : f32
    %63 = vector.broadcast %cst_23 : f32 to vector<8x128xf32>
    %64 = arith.maximumf %62, %63 : vector<8x128xf32>
    %65 = vector.extract_strided_slice %6 {offsets = [8, 0], sizes = [8, 384], strides = [1, 1]} : vector<64x384xf32> to vector<8x384xf32>
    %c0_24 = arith.constant 0 : index
    %c0_25 = arith.constant 0 : index
    %66 = vector.load %arg4[%c0_24, %c0_25] : memref<128x384xf32, #tpu.memory_space<vmem>>, vector<128x384xf32>
    %cst_26 = arith.constant dense<0.000000e+00> : vector<8x384xf32>
    %67 = tpu.matmul %40, %66, %cst_26 {dimension_numbers = #tpu.dot_dimension_numbers<[1], [0], [0], [1], [0, 0, 1, 1], [], []>} : vector<8x128xf32>, vector<128x384xf32>, vector<8x384xf32> -> vector<8x384xf32>
    %68 = arith.addf %67, %9 : vector<8x384xf32>
    %69 = vector.extract_strided_slice %65 {offsets = [0, 0], sizes = [8, 256], strides = [1, 1]} : vector<8x384xf32> to vector<8x256xf32>
    %70 = vector.extract_strided_slice %68 {offsets = [0, 0], sizes = [8, 256], strides = [1, 1]} : vector<8x384xf32> to vector<8x256xf32>
    %71 = arith.addf %69, %70 : vector<8x256xf32>
    %72 = arith.negf %71 : vector<8x256xf32>
    %73 = math.exp %72 : vector<8x256xf32>
    %cst_27 = arith.constant 1.000000e+00 : f32
    %74 = vector.broadcast %cst_27 : f32 to vector<8x256xf32>
    %75 = arith.addf %74, %73 : vector<8x256xf32>
    %76 = arith.divf %74, %75 : vector<8x256xf32>
    %77 = vector.extract_strided_slice %76 {offsets = [0, 0], sizes = [8, 128], strides = [1, 1]} : vector<8x256xf32> to vector<8x128xf32>
    %78 = vector.extract_strided_slice %76 {offsets = [0, 128], sizes = [8, 128], strides = [1, 1]} : vector<8x256xf32> to vector<8x128xf32>
    %79 = vector.extract_strided_slice %65 {offsets = [0, 256], sizes = [8, 128], strides = [1, 1]} : vector<8x384xf32> to vector<8x128xf32>
    %80 = vector.extract_strided_slice %68 {offsets = [0, 256], sizes = [8, 128], strides = [1, 1]} : vector<8x384xf32> to vector<8x128xf32>
    %81 = arith.mulf %77, %80 : vector<8x128xf32>
    %82 = arith.addf %79, %81 : vector<8x128xf32>
    %83 = math.tanh %82 : vector<8x128xf32>
    %cst_28 = arith.constant 1.000000e+00 : f32
    %84 = vector.broadcast %cst_28 : f32 to vector<8x128xf32>
    %85 = arith.subf %84, %78 : vector<8x128xf32>
    %86 = arith.mulf %85, %83 : vector<8x128xf32>
    %87 = arith.mulf %78, %40 : vector<8x128xf32>
    %88 = arith.addf %86, %87 : vector<8x128xf32>
    %cst_29 = arith.constant 0.000000e+00 : f32
    %89 = vector.broadcast %cst_29 : f32 to vector<8x128xf32>
    %90 = arith.maximumf %88, %89 : vector<8x128xf32>
    %91 = tpu.concatenate %90, %64 in 1 : vector<8x128xf32>, vector<8x128xf32> -> vector<8x256xf32>
    %c0_30 = arith.constant 0 : index
    %c0_31 = arith.constant 0 : index
    %92 = vector.load %arg6[%c0_30, %c0_31] : memref<256x512xf32, #tpu.memory_space<vmem>>, vector<256x512xf32>
    %cst_32 = arith.constant dense<0.000000e+00> : vector<8x512xf32>
    %93 = tpu.matmul %91, %92, %cst_32 {dimension_numbers = #tpu.dot_dimension_numbers<[1], [0], [0], [1], [0, 0, 1, 1], [], []>} : vector<8x256xf32>, vector<256x512xf32>, vector<8x512xf32> -> vector<8x512xf32>
    %94 = arith.addf %93, %12 : vector<8x512xf32>
    %95 = vector.extract_strided_slice %94 {offsets = [0, 0], sizes = [8, 256], strides = [1, 1]} : vector<8x512xf32> to vector<8x256xf32>
    %96 = arith.negf %95 : vector<8x256xf32>
    %97 = math.exp %96 : vector<8x256xf32>
    %cst_33 = arith.constant 1.000000e+00 : f32
    %98 = vector.broadcast %cst_33 : f32 to vector<8x256xf32>
    %99 = arith.addf %98, %97 : vector<8x256xf32>
    %100 = arith.divf %98, %99 : vector<8x256xf32>
    %101 = vector.extract_strided_slice %100 {offsets = [0, 0], sizes = [8, 128], strides = [1, 1]} : vector<8x256xf32> to vector<8x128xf32>
    %102 = vector.extract_strided_slice %100 {offsets = [0, 128], sizes = [8, 128], strides = [1, 1]} : vector<8x256xf32> to vector<8x128xf32>
    %103 = vector.extract_strided_slice %94 {offsets = [0, 256], sizes = [8, 128], strides = [1, 1]} : vector<8x512xf32> to vector<8x128xf32>
    %104 = vector.extract_strided_slice %94 {offsets = [0, 384], sizes = [8, 128], strides = [1, 1]} : vector<8x512xf32> to vector<8x128xf32>
    %105 = arith.mulf %101, %104 : vector<8x128xf32>
    %106 = arith.addf %103, %105 : vector<8x128xf32>
    %107 = math.tanh %106 : vector<8x128xf32>
    %cst_34 = arith.constant 1.000000e+00 : f32
    %108 = vector.broadcast %cst_34 : f32 to vector<8x128xf32>
    %109 = arith.subf %108, %102 : vector<8x128xf32>
    %110 = arith.mulf %109, %107 : vector<8x128xf32>
    %111 = arith.mulf %102, %64 : vector<8x128xf32>
    %112 = arith.addf %110, %111 : vector<8x128xf32>
    %cst_35 = arith.constant 0.000000e+00 : f32
    %113 = vector.broadcast %cst_35 : f32 to vector<8x128xf32>
    %114 = arith.maximumf %112, %113 : vector<8x128xf32>
    %115 = vector.extract_strided_slice %6 {offsets = [16, 0], sizes = [8, 384], strides = [1, 1]} : vector<64x384xf32> to vector<8x384xf32>
    %c0_36 = arith.constant 0 : index
    %c0_37 = arith.constant 0 : index
    %116 = vector.load %arg4[%c0_36, %c0_37] : memref<128x384xf32, #tpu.memory_space<vmem>>, vector<128x384xf32>
    %cst_38 = arith.constant dense<0.000000e+00> : vector<8x384xf32>
    %117 = tpu.matmul %90, %116, %cst_38 {dimension_numbers = #tpu.dot_dimension_numbers<[1], [0], [0], [1], [0, 0, 1, 1], [], []>} : vector<8x128xf32>, vector<128x384xf32>, vector<8x384xf32> -> vector<8x384xf32>
    %118 = arith.addf %117, %9 : vector<8x384xf32>
    %119 = vector.extract_strided_slice %115 {offsets = [0, 0], sizes = [8, 256], strides = [1, 1]} : vector<8x384xf32> to vector<8x256xf32>
    %120 = vector.extract_strided_slice %118 {offsets = [0, 0], sizes = [8, 256], strides = [1, 1]} : vector<8x384xf32> to vector<8x256xf32>
    %121 = arith.addf %119, %120 : vector<8x256xf32>
    %122 = arith.negf %121 : vector<8x256xf32>
    %123 = math.exp %122 : vector<8x256xf32>
    %cst_39 = arith.constant 1.000000e+00 : f32
    %124 = vector.broadcast %cst_39 : f32 to vector<8x256xf32>
    %125 = arith.addf %124, %123 : vector<8x256xf32>
    %126 = arith.divf %124, %125 : vector<8x256xf32>
    %127 = vector.extract_strided_slice %126 {offsets = [0, 0], sizes = [8, 128], strides = [1, 1]} : vector<8x256xf32> to vector<8x128xf32>
    %128 = vector.extract_strided_slice %126 {offsets = [0, 128], sizes = [8, 128], strides = [1, 1]} : vector<8x256xf32> to vector<8x128xf32>
    %129 = vector.extract_strided_slice %115 {offsets = [0, 256], sizes = [8, 128], strides = [1, 1]} : vector<8x384xf32> to vector<8x128xf32>
    %130 = vector.extract_strided_slice %118 {offsets = [0, 256], sizes = [8, 128], strides = [1, 1]} : vector<8x384xf32> to vector<8x128xf32>
    %131 = arith.mulf %127, %130 : vector<8x128xf32>
    %132 = arith.addf %129, %131 : vector<8x128xf32>
    %133 = math.tanh %132 : vector<8x128xf32>
    %cst_40 = arith.constant 1.000000e+00 : f32
    %134 = vector.broadcast %cst_40 : f32 to vector<8x128xf32>
    %135 = arith.subf %134, %128 : vector<8x128xf32>
    %136 = arith.mulf %135, %133 : vector<8x128xf32>
    %137 = arith.mulf %128, %90 : vector<8x128xf32>
    %138 = arith.addf %136, %137 : vector<8x128xf32>
    %cst_41 = arith.constant 0.000000e+00 : f32
    %139 = vector.broadcast %cst_41 : f32 to vector<8x128xf32>
    %140 = arith.maximumf %138, %139 : vector<8x128xf32>
    %141 = tpu.concatenate %140, %114 in 1 : vector<8x128xf32>, vector<8x128xf32> -> vector<8x256xf32>
    %c0_42 = arith.constant 0 : index
    %c0_43 = arith.constant 0 : index
    %142 = vector.load %arg6[%c0_42, %c0_43] : memref<256x512xf32, #tpu.memory_space<vmem>>, vector<256x512xf32>
    %cst_44 = arith.constant dense<0.000000e+00> : vector<8x512xf32>
    %143 = tpu.matmul %141, %142, %cst_44 {dimension_numbers = #tpu.dot_dimension_numbers<[1], [0], [0], [1], [0, 0, 1, 1], [], []>} : vector<8x256xf32>, vector<256x512xf32>, vector<8x512xf32> -> vector<8x512xf32>
    %144 = arith.addf %143, %12 : vector<8x512xf32>
    %145 = vector.extract_strided_slice %144 {offsets = [0, 0], sizes = [8, 256], strides = [1, 1]} : vector<8x512xf32> to vector<8x256xf32>
    %146 = arith.negf %145 : vector<8x256xf32>
    %147 = math.exp %146 : vector<8x256xf32>
    %cst_45 = arith.constant 1.000000e+00 : f32
    %148 = vector.broadcast %cst_45 : f32 to vector<8x256xf32>
    %149 = arith.addf %148, %147 : vector<8x256xf32>
    %150 = arith.divf %148, %149 : vector<8x256xf32>
    %151 = vector.extract_strided_slice %150 {offsets = [0, 0], sizes = [8, 128], strides = [1, 1]} : vector<8x256xf32> to vector<8x128xf32>
    %152 = vector.extract_strided_slice %150 {offsets = [0, 128], sizes = [8, 128], strides = [1, 1]} : vector<8x256xf32> to vector<8x128xf32>
    %153 = vector.extract_strided_slice %144 {offsets = [0, 256], sizes = [8, 128], strides = [1, 1]} : vector<8x512xf32> to vector<8x128xf32>
    %154 = vector.extract_strided_slice %144 {offsets = [0, 384], sizes = [8, 128], strides = [1, 1]} : vector<8x512xf32> to vector<8x128xf32>
    %155 = arith.mulf %151, %154 : vector<8x128xf32>
    %156 = arith.addf %153, %155 : vector<8x128xf32>
    %157 = math.tanh %156 : vector<8x128xf32>
    %cst_46 = arith.constant 1.000000e+00 : f32
    %158 = vector.broadcast %cst_46 : f32 to vector<8x128xf32>
    %159 = arith.subf %158, %152 : vector<8x128xf32>
    %160 = arith.mulf %159, %157 : vector<8x128xf32>
    %161 = arith.mulf %152, %114 : vector<8x128xf32>
    %162 = arith.addf %160, %161 : vector<8x128xf32>
    %cst_47 = arith.constant 0.000000e+00 : f32
    %163 = vector.broadcast %cst_47 : f32 to vector<8x128xf32>
    %164 = arith.maximumf %162, %163 : vector<8x128xf32>
    %165 = vector.extract_strided_slice %6 {offsets = [24, 0], sizes = [8, 384], strides = [1, 1]} : vector<64x384xf32> to vector<8x384xf32>
    %c0_48 = arith.constant 0 : index
    %c0_49 = arith.constant 0 : index
    %166 = vector.load %arg4[%c0_48, %c0_49] : memref<128x384xf32, #tpu.memory_space<vmem>>, vector<128x384xf32>
    %cst_50 = arith.constant dense<0.000000e+00> : vector<8x384xf32>
    %167 = tpu.matmul %140, %166, %cst_50 {dimension_numbers = #tpu.dot_dimension_numbers<[1], [0], [0], [1], [0, 0, 1, 1], [], []>} : vector<8x128xf32>, vector<128x384xf32>, vector<8x384xf32> -> vector<8x384xf32>
    %168 = arith.addf %167, %9 : vector<8x384xf32>
    %169 = vector.extract_strided_slice %165 {offsets = [0, 0], sizes = [8, 256], strides = [1, 1]} : vector<8x384xf32> to vector<8x256xf32>
    %170 = vector.extract_strided_slice %168 {offsets = [0, 0], sizes = [8, 256], strides = [1, 1]} : vector<8x384xf32> to vector<8x256xf32>
    %171 = arith.addf %169, %170 : vector<8x256xf32>
    %172 = arith.negf %171 : vector<8x256xf32>
    %173 = math.exp %172 : vector<8x256xf32>
    %cst_51 = arith.constant 1.000000e+00 : f32
    %174 = vector.broadcast %cst_51 : f32 to vector<8x256xf32>
    %175 = arith.addf %174, %173 : vector<8x256xf32>
    %176 = arith.divf %174, %175 : vector<8x256xf32>
    %177 = vector.extract_strided_slice %176 {offsets = [0, 0], sizes = [8, 128], strides = [1, 1]} : vector<8x256xf32> to vector<8x128xf32>
    %178 = vector.extract_strided_slice %176 {offsets = [0, 128], sizes = [8, 128], strides = [1, 1]} : vector<8x256xf32> to vector<8x128xf32>
    %179 = vector.extract_strided_slice %165 {offsets = [0, 256], sizes = [8, 128], strides = [1, 1]} : vector<8x384xf32> to vector<8x128xf32>
    %180 = vector.extract_strided_slice %168 {offsets = [0, 256], sizes = [8, 128], strides = [1, 1]} : vector<8x384xf32> to vector<8x128xf32>
    %181 = arith.mulf %177, %180 : vector<8x128xf32>
    %182 = arith.addf %179, %181 : vector<8x128xf32>
    %183 = math.tanh %182 : vector<8x128xf32>
    %cst_52 = arith.constant 1.000000e+00 : f32
    %184 = vector.broadcast %cst_52 : f32 to vector<8x128xf32>
    %185 = arith.subf %184, %178 : vector<8x128xf32>
    %186 = arith.mulf %185, %183 : vector<8x128xf32>
    %187 = arith.mulf %178, %140 : vector<8x128xf32>
    %188 = arith.addf %186, %187 : vector<8x128xf32>
    %cst_53 = arith.constant 0.000000e+00 : f32
    %189 = vector.broadcast %cst_53 : f32 to vector<8x128xf32>
    %190 = arith.maximumf %188, %189 : vector<8x128xf32>
    %191 = tpu.concatenate %190, %164 in 1 : vector<8x128xf32>, vector<8x128xf32> -> vector<8x256xf32>
    %c0_54 = arith.constant 0 : index
    %c0_55 = arith.constant 0 : index
    %192 = vector.load %arg6[%c0_54, %c0_55] : memref<256x512xf32, #tpu.memory_space<vmem>>, vector<256x512xf32>
    %cst_56 = arith.constant dense<0.000000e+00> : vector<8x512xf32>
    %193 = tpu.matmul %191, %192, %cst_56 {dimension_numbers = #tpu.dot_dimension_numbers<[1], [0], [0], [1], [0, 0, 1, 1], [], []>} : vector<8x256xf32>, vector<256x512xf32>, vector<8x512xf32> -> vector<8x512xf32>
    %194 = arith.addf %193, %12 : vector<8x512xf32>
    %195 = vector.extract_strided_slice %194 {offsets = [0, 0], sizes = [8, 256], strides = [1, 1]} : vector<8x512xf32> to vector<8x256xf32>
    %196 = arith.negf %195 : vector<8x256xf32>
    %197 = math.exp %196 : vector<8x256xf32>
    %cst_57 = arith.constant 1.000000e+00 : f32
    %198 = vector.broadcast %cst_57 : f32 to vector<8x256xf32>
    %199 = arith.addf %198, %197 : vector<8x256xf32>
    %200 = arith.divf %198, %199 : vector<8x256xf32>
    %201 = vector.extract_strided_slice %200 {offsets = [0, 0], sizes = [8, 128], strides = [1, 1]} : vector<8x256xf32> to vector<8x128xf32>
    %202 = vector.extract_strided_slice %200 {offsets = [0, 128], sizes = [8, 128], strides = [1, 1]} : vector<8x256xf32> to vector<8x128xf32>
    %203 = vector.extract_strided_slice %194 {offsets = [0, 256], sizes = [8, 128], strides = [1, 1]} : vector<8x512xf32> to vector<8x128xf32>
    %204 = vector.extract_strided_slice %194 {offsets = [0, 384], sizes = [8, 128], strides = [1, 1]} : vector<8x512xf32> to vector<8x128xf32>
    %205 = arith.mulf %201, %204 : vector<8x128xf32>
    %206 = arith.addf %203, %205 : vector<8x128xf32>
    %207 = math.tanh %206 : vector<8x128xf32>
    %cst_58 = arith.constant 1.000000e+00 : f32
    %208 = vector.broadcast %cst_58 : f32 to vector<8x128xf32>
    %209 = arith.subf %208, %202 : vector<8x128xf32>
    %210 = arith.mulf %209, %207 : vector<8x128xf32>
    %211 = arith.mulf %202, %164 : vector<8x128xf32>
    %212 = arith.addf %210, %211 : vector<8x128xf32>
    %cst_59 = arith.constant 0.000000e+00 : f32
    %213 = vector.broadcast %cst_59 : f32 to vector<8x128xf32>
    %214 = arith.maximumf %212, %213 : vector<8x128xf32>
    %215 = vector.extract_strided_slice %6 {offsets = [32, 0], sizes = [8, 384], strides = [1, 1]} : vector<64x384xf32> to vector<8x384xf32>
    %c0_60 = arith.constant 0 : index
    %c0_61 = arith.constant 0 : index
    %216 = vector.load %arg4[%c0_60, %c0_61] : memref<128x384xf32, #tpu.memory_space<vmem>>, vector<128x384xf32>
    %cst_62 = arith.constant dense<0.000000e+00> : vector<8x384xf32>
    %217 = tpu.matmul %190, %216, %cst_62 {dimension_numbers = #tpu.dot_dimension_numbers<[1], [0], [0], [1], [0, 0, 1, 1], [], []>} : vector<8x128xf32>, vector<128x384xf32>, vector<8x384xf32> -> vector<8x384xf32>
    %218 = arith.addf %217, %9 : vector<8x384xf32>
    %219 = vector.extract_strided_slice %215 {offsets = [0, 0], sizes = [8, 256], strides = [1, 1]} : vector<8x384xf32> to vector<8x256xf32>
    %220 = vector.extract_strided_slice %218 {offsets = [0, 0], sizes = [8, 256], strides = [1, 1]} : vector<8x384xf32> to vector<8x256xf32>
    %221 = arith.addf %219, %220 : vector<8x256xf32>
    %222 = arith.negf %221 : vector<8x256xf32>
    %223 = math.exp %222 : vector<8x256xf32>
    %cst_63 = arith.constant 1.000000e+00 : f32
    %224 = vector.broadcast %cst_63 : f32 to vector<8x256xf32>
    %225 = arith.addf %224, %223 : vector<8x256xf32>
    %226 = arith.divf %224, %225 : vector<8x256xf32>
    %227 = vector.extract_strided_slice %226 {offsets = [0, 0], sizes = [8, 128], strides = [1, 1]} : vector<8x256xf32> to vector<8x128xf32>
    %228 = vector.extract_strided_slice %226 {offsets = [0, 128], sizes = [8, 128], strides = [1, 1]} : vector<8x256xf32> to vector<8x128xf32>
    %229 = vector.extract_strided_slice %215 {offsets = [0, 256], sizes = [8, 128], strides = [1, 1]} : vector<8x384xf32> to vector<8x128xf32>
    %230 = vector.extract_strided_slice %218 {offsets = [0, 256], sizes = [8, 128], strides = [1, 1]} : vector<8x384xf32> to vector<8x128xf32>
    %231 = arith.mulf %227, %230 : vector<8x128xf32>
    %232 = arith.addf %229, %231 : vector<8x128xf32>
    %233 = math.tanh %232 : vector<8x128xf32>
    %cst_64 = arith.constant 1.000000e+00 : f32
    %234 = vector.broadcast %cst_64 : f32 to vector<8x128xf32>
    %235 = arith.subf %234, %228 : vector<8x128xf32>
    %236 = arith.mulf %235, %233 : vector<8x128xf32>
    %237 = arith.mulf %228, %190 : vector<8x128xf32>
    %238 = arith.addf %236, %237 : vector<8x128xf32>
    %cst_65 = arith.constant 0.000000e+00 : f32
    %239 = vector.broadcast %cst_65 : f32 to vector<8x128xf32>
    %240 = arith.maximumf %238, %239 : vector<8x128xf32>
    %241 = tpu.concatenate %240, %214 in 1 : vector<8x128xf32>, vector<8x128xf32> -> vector<8x256xf32>
    %c0_66 = arith.constant 0 : index
    %c0_67 = arith.constant 0 : index
    %242 = vector.load %arg6[%c0_66, %c0_67] : memref<256x512xf32, #tpu.memory_space<vmem>>, vector<256x512xf32>
    %cst_68 = arith.constant dense<0.000000e+00> : vector<8x512xf32>
    %243 = tpu.matmul %241, %242, %cst_68 {dimension_numbers = #tpu.dot_dimension_numbers<[1], [0], [0], [1], [0, 0, 1, 1], [], []>} : vector<8x256xf32>, vector<256x512xf32>, vector<8x512xf32> -> vector<8x512xf32>
    %244 = arith.addf %243, %12 : vector<8x512xf32>
    %245 = vector.extract_strided_slice %244 {offsets = [0, 0], sizes = [8, 256], strides = [1, 1]} : vector<8x512xf32> to vector<8x256xf32>
    %246 = arith.negf %245 : vector<8x256xf32>
    %247 = math.exp %246 : vector<8x256xf32>
    %cst_69 = arith.constant 1.000000e+00 : f32
    %248 = vector.broadcast %cst_69 : f32 to vector<8x256xf32>
    %249 = arith.addf %248, %247 : vector<8x256xf32>
    %250 = arith.divf %248, %249 : vector<8x256xf32>
    %251 = vector.extract_strided_slice %250 {offsets = [0, 0], sizes = [8, 128], strides = [1, 1]} : vector<8x256xf32> to vector<8x128xf32>
    %252 = vector.extract_strided_slice %250 {offsets = [0, 128], sizes = [8, 128], strides = [1, 1]} : vector<8x256xf32> to vector<8x128xf32>
    %253 = vector.extract_strided_slice %244 {offsets = [0, 256], sizes = [8, 128], strides = [1, 1]} : vector<8x512xf32> to vector<8x128xf32>
    %254 = vector.extract_strided_slice %244 {offsets = [0, 384], sizes = [8, 128], strides = [1, 1]} : vector<8x512xf32> to vector<8x128xf32>
    %255 = arith.mulf %251, %254 : vector<8x128xf32>
    %256 = arith.addf %253, %255 : vector<8x128xf32>
    %257 = math.tanh %256 : vector<8x128xf32>
    %cst_70 = arith.constant 1.000000e+00 : f32
    %258 = vector.broadcast %cst_70 : f32 to vector<8x128xf32>
    %259 = arith.subf %258, %252 : vector<8x128xf32>
    %260 = arith.mulf %259, %257 : vector<8x128xf32>
    %261 = arith.mulf %252, %214 : vector<8x128xf32>
    %262 = arith.addf %260, %261 : vector<8x128xf32>
    %cst_71 = arith.constant 0.000000e+00 : f32
    %263 = vector.broadcast %cst_71 : f32 to vector<8x128xf32>
    %264 = arith.maximumf %262, %263 : vector<8x128xf32>
    %265 = vector.extract_strided_slice %6 {offsets = [40, 0], sizes = [8, 384], strides = [1, 1]} : vector<64x384xf32> to vector<8x384xf32>
    %c0_72 = arith.constant 0 : index
    %c0_73 = arith.constant 0 : index
    %266 = vector.load %arg4[%c0_72, %c0_73] : memref<128x384xf32, #tpu.memory_space<vmem>>, vector<128x384xf32>
    %cst_74 = arith.constant dense<0.000000e+00> : vector<8x384xf32>
    %267 = tpu.matmul %240, %266, %cst_74 {dimension_numbers = #tpu.dot_dimension_numbers<[1], [0], [0], [1], [0, 0, 1, 1], [], []>} : vector<8x128xf32>, vector<128x384xf32>, vector<8x384xf32> -> vector<8x384xf32>
    %268 = arith.addf %267, %9 : vector<8x384xf32>
    %269 = vector.extract_strided_slice %265 {offsets = [0, 0], sizes = [8, 256], strides = [1, 1]} : vector<8x384xf32> to vector<8x256xf32>
    %270 = vector.extract_strided_slice %268 {offsets = [0, 0], sizes = [8, 256], strides = [1, 1]} : vector<8x384xf32> to vector<8x256xf32>
    %271 = arith.addf %269, %270 : vector<8x256xf32>
    %272 = arith.negf %271 : vector<8x256xf32>
    %273 = math.exp %272 : vector<8x256xf32>
    %cst_75 = arith.constant 1.000000e+00 : f32
    %274 = vector.broadcast %cst_75 : f32 to vector<8x256xf32>
    %275 = arith.addf %274, %273 : vector<8x256xf32>
    %276 = arith.divf %274, %275 : vector<8x256xf32>
    %277 = vector.extract_strided_slice %276 {offsets = [0, 0], sizes = [8, 128], strides = [1, 1]} : vector<8x256xf32> to vector<8x128xf32>
    %278 = vector.extract_strided_slice %276 {offsets = [0, 128], sizes = [8, 128], strides = [1, 1]} : vector<8x256xf32> to vector<8x128xf32>
    %279 = vector.extract_strided_slice %265 {offsets = [0, 256], sizes = [8, 128], strides = [1, 1]} : vector<8x384xf32> to vector<8x128xf32>
    %280 = vector.extract_strided_slice %268 {offsets = [0, 256], sizes = [8, 128], strides = [1, 1]} : vector<8x384xf32> to vector<8x128xf32>
    %281 = arith.mulf %277, %280 : vector<8x128xf32>
    %282 = arith.addf %279, %281 : vector<8x128xf32>
    %283 = math.tanh %282 : vector<8x128xf32>
    %cst_76 = arith.constant 1.000000e+00 : f32
    %284 = vector.broadcast %cst_76 : f32 to vector<8x128xf32>
    %285 = arith.subf %284, %278 : vector<8x128xf32>
    %286 = arith.mulf %285, %283 : vector<8x128xf32>
    %287 = arith.mulf %278, %240 : vector<8x128xf32>
    %288 = arith.addf %286, %287 : vector<8x128xf32>
    %cst_77 = arith.constant 0.000000e+00 : f32
    %289 = vector.broadcast %cst_77 : f32 to vector<8x128xf32>
    %290 = arith.maximumf %288, %289 : vector<8x128xf32>
    %291 = tpu.concatenate %290, %264 in 1 : vector<8x128xf32>, vector<8x128xf32> -> vector<8x256xf32>
    %c0_78 = arith.constant 0 : index
    %c0_79 = arith.constant 0 : index
    %292 = vector.load %arg6[%c0_78, %c0_79] : memref<256x512xf32, #tpu.memory_space<vmem>>, vector<256x512xf32>
    %cst_80 = arith.constant dense<0.000000e+00> : vector<8x512xf32>
    %293 = tpu.matmul %291, %292, %cst_80 {dimension_numbers = #tpu.dot_dimension_numbers<[1], [0], [0], [1], [0, 0, 1, 1], [], []>} : vector<8x256xf32>, vector<256x512xf32>, vector<8x512xf32> -> vector<8x512xf32>
    %294 = arith.addf %293, %12 : vector<8x512xf32>
    %295 = vector.extract_strided_slice %294 {offsets = [0, 0], sizes = [8, 256], strides = [1, 1]} : vector<8x512xf32> to vector<8x256xf32>
    %296 = arith.negf %295 : vector<8x256xf32>
    %297 = math.exp %296 : vector<8x256xf32>
    %cst_81 = arith.constant 1.000000e+00 : f32
    %298 = vector.broadcast %cst_81 : f32 to vector<8x256xf32>
    %299 = arith.addf %298, %297 : vector<8x256xf32>
    %300 = arith.divf %298, %299 : vector<8x256xf32>
    %301 = vector.extract_strided_slice %300 {offsets = [0, 0], sizes = [8, 128], strides = [1, 1]} : vector<8x256xf32> to vector<8x128xf32>
    %302 = vector.extract_strided_slice %300 {offsets = [0, 128], sizes = [8, 128], strides = [1, 1]} : vector<8x256xf32> to vector<8x128xf32>
    %303 = vector.extract_strided_slice %294 {offsets = [0, 256], sizes = [8, 128], strides = [1, 1]} : vector<8x512xf32> to vector<8x128xf32>
    %304 = vector.extract_strided_slice %294 {offsets = [0, 384], sizes = [8, 128], strides = [1, 1]} : vector<8x512xf32> to vector<8x128xf32>
    %305 = arith.mulf %301, %304 : vector<8x128xf32>
    %306 = arith.addf %303, %305 : vector<8x128xf32>
    %307 = math.tanh %306 : vector<8x128xf32>
    %cst_82 = arith.constant 1.000000e+00 : f32
    %308 = vector.broadcast %cst_82 : f32 to vector<8x128xf32>
    %309 = arith.subf %308, %302 : vector<8x128xf32>
    %310 = arith.mulf %309, %307 : vector<8x128xf32>
    %311 = arith.mulf %302, %264 : vector<8x128xf32>
    %312 = arith.addf %310, %311 : vector<8x128xf32>
    %cst_83 = arith.constant 0.000000e+00 : f32
    %313 = vector.broadcast %cst_83 : f32 to vector<8x128xf32>
    %314 = arith.maximumf %312, %313 : vector<8x128xf32>
    %315 = vector.extract_strided_slice %6 {offsets = [48, 0], sizes = [8, 384], strides = [1, 1]} : vector<64x384xf32> to vector<8x384xf32>
    %c0_84 = arith.constant 0 : index
    %c0_85 = arith.constant 0 : index
    %316 = vector.load %arg4[%c0_84, %c0_85] : memref<128x384xf32, #tpu.memory_space<vmem>>, vector<128x384xf32>
    %cst_86 = arith.constant dense<0.000000e+00> : vector<8x384xf32>
    %317 = tpu.matmul %290, %316, %cst_86 {dimension_numbers = #tpu.dot_dimension_numbers<[1], [0], [0], [1], [0, 0, 1, 1], [], []>} : vector<8x128xf32>, vector<128x384xf32>, vector<8x384xf32> -> vector<8x384xf32>
    %318 = arith.addf %317, %9 : vector<8x384xf32>
    %319 = vector.extract_strided_slice %315 {offsets = [0, 0], sizes = [8, 256], strides = [1, 1]} : vector<8x384xf32> to vector<8x256xf32>
    %320 = vector.extract_strided_slice %318 {offsets = [0, 0], sizes = [8, 256], strides = [1, 1]} : vector<8x384xf32> to vector<8x256xf32>
    %321 = arith.addf %319, %320 : vector<8x256xf32>
    %322 = arith.negf %321 : vector<8x256xf32>
    %323 = math.exp %322 : vector<8x256xf32>
    %cst_87 = arith.constant 1.000000e+00 : f32
    %324 = vector.broadcast %cst_87 : f32 to vector<8x256xf32>
    %325 = arith.addf %324, %323 : vector<8x256xf32>
    %326 = arith.divf %324, %325 : vector<8x256xf32>
    %327 = vector.extract_strided_slice %326 {offsets = [0, 0], sizes = [8, 128], strides = [1, 1]} : vector<8x256xf32> to vector<8x128xf32>
    %328 = vector.extract_strided_slice %326 {offsets = [0, 128], sizes = [8, 128], strides = [1, 1]} : vector<8x256xf32> to vector<8x128xf32>
    %329 = vector.extract_strided_slice %315 {offsets = [0, 256], sizes = [8, 128], strides = [1, 1]} : vector<8x384xf32> to vector<8x128xf32>
    %330 = vector.extract_strided_slice %318 {offsets = [0, 256], sizes = [8, 128], strides = [1, 1]} : vector<8x384xf32> to vector<8x128xf32>
    %331 = arith.mulf %327, %330 : vector<8x128xf32>
    %332 = arith.addf %329, %331 : vector<8x128xf32>
    %333 = math.tanh %332 : vector<8x128xf32>
    %cst_88 = arith.constant 1.000000e+00 : f32
    %334 = vector.broadcast %cst_88 : f32 to vector<8x128xf32>
    %335 = arith.subf %334, %328 : vector<8x128xf32>
    %336 = arith.mulf %335, %333 : vector<8x128xf32>
    %337 = arith.mulf %328, %290 : vector<8x128xf32>
    %338 = arith.addf %336, %337 : vector<8x128xf32>
    %cst_89 = arith.constant 0.000000e+00 : f32
    %339 = vector.broadcast %cst_89 : f32 to vector<8x128xf32>
    %340 = arith.maximumf %338, %339 : vector<8x128xf32>
    %341 = tpu.concatenate %340, %314 in 1 : vector<8x128xf32>, vector<8x128xf32> -> vector<8x256xf32>
    %c0_90 = arith.constant 0 : index
    %c0_91 = arith.constant 0 : index
    %342 = vector.load %arg6[%c0_90, %c0_91] : memref<256x512xf32, #tpu.memory_space<vmem>>, vector<256x512xf32>
    %cst_92 = arith.constant dense<0.000000e+00> : vector<8x512xf32>
    %343 = tpu.matmul %341, %342, %cst_92 {dimension_numbers = #tpu.dot_dimension_numbers<[1], [0], [0], [1], [0, 0, 1, 1], [], []>} : vector<8x256xf32>, vector<256x512xf32>, vector<8x512xf32> -> vector<8x512xf32>
    %344 = arith.addf %343, %12 : vector<8x512xf32>
    %345 = vector.extract_strided_slice %344 {offsets = [0, 0], sizes = [8, 256], strides = [1, 1]} : vector<8x512xf32> to vector<8x256xf32>
    %346 = arith.negf %345 : vector<8x256xf32>
    %347 = math.exp %346 : vector<8x256xf32>
    %cst_93 = arith.constant 1.000000e+00 : f32
    %348 = vector.broadcast %cst_93 : f32 to vector<8x256xf32>
    %349 = arith.addf %348, %347 : vector<8x256xf32>
    %350 = arith.divf %348, %349 : vector<8x256xf32>
    %351 = vector.extract_strided_slice %350 {offsets = [0, 0], sizes = [8, 128], strides = [1, 1]} : vector<8x256xf32> to vector<8x128xf32>
    %352 = vector.extract_strided_slice %350 {offsets = [0, 128], sizes = [8, 128], strides = [1, 1]} : vector<8x256xf32> to vector<8x128xf32>
    %353 = vector.extract_strided_slice %344 {offsets = [0, 256], sizes = [8, 128], strides = [1, 1]} : vector<8x512xf32> to vector<8x128xf32>
    %354 = vector.extract_strided_slice %344 {offsets = [0, 384], sizes = [8, 128], strides = [1, 1]} : vector<8x512xf32> to vector<8x128xf32>
    %355 = arith.mulf %351, %354 : vector<8x128xf32>
    %356 = arith.addf %353, %355 : vector<8x128xf32>
    %357 = math.tanh %356 : vector<8x128xf32>
    %cst_94 = arith.constant 1.000000e+00 : f32
    %358 = vector.broadcast %cst_94 : f32 to vector<8x128xf32>
    %359 = arith.subf %358, %352 : vector<8x128xf32>
    %360 = arith.mulf %359, %357 : vector<8x128xf32>
    %361 = arith.mulf %352, %314 : vector<8x128xf32>
    %362 = arith.addf %360, %361 : vector<8x128xf32>
    %cst_95 = arith.constant 0.000000e+00 : f32
    %363 = vector.broadcast %cst_95 : f32 to vector<8x128xf32>
    %364 = arith.maximumf %362, %363 : vector<8x128xf32>
    %365 = vector.extract_strided_slice %6 {offsets = [56, 0], sizes = [8, 384], strides = [1, 1]} : vector<64x384xf32> to vector<8x384xf32>
    %c0_96 = arith.constant 0 : index
    %c0_97 = arith.constant 0 : index
    %366 = vector.load %arg4[%c0_96, %c0_97] : memref<128x384xf32, #tpu.memory_space<vmem>>, vector<128x384xf32>
    %cst_98 = arith.constant dense<0.000000e+00> : vector<8x384xf32>
    %367 = tpu.matmul %340, %366, %cst_98 {dimension_numbers = #tpu.dot_dimension_numbers<[1], [0], [0], [1], [0, 0, 1, 1], [], []>} : vector<8x128xf32>, vector<128x384xf32>, vector<8x384xf32> -> vector<8x384xf32>
    %368 = arith.addf %367, %9 : vector<8x384xf32>
    %369 = vector.extract_strided_slice %365 {offsets = [0, 0], sizes = [8, 256], strides = [1, 1]} : vector<8x384xf32> to vector<8x256xf32>
    %370 = vector.extract_strided_slice %368 {offsets = [0, 0], sizes = [8, 256], strides = [1, 1]} : vector<8x384xf32> to vector<8x256xf32>
    %371 = arith.addf %369, %370 : vector<8x256xf32>
    %372 = arith.negf %371 : vector<8x256xf32>
    %373 = math.exp %372 : vector<8x256xf32>
    %cst_99 = arith.constant 1.000000e+00 : f32
    %374 = vector.broadcast %cst_99 : f32 to vector<8x256xf32>
    %375 = arith.addf %374, %373 : vector<8x256xf32>
    %376 = arith.divf %374, %375 : vector<8x256xf32>
    %377 = vector.extract_strided_slice %376 {offsets = [0, 0], sizes = [8, 128], strides = [1, 1]} : vector<8x256xf32> to vector<8x128xf32>
    %378 = vector.extract_strided_slice %376 {offsets = [0, 128], sizes = [8, 128], strides = [1, 1]} : vector<8x256xf32> to vector<8x128xf32>
    %379 = vector.extract_strided_slice %365 {offsets = [0, 256], sizes = [8, 128], strides = [1, 1]} : vector<8x384xf32> to vector<8x128xf32>
    %380 = vector.extract_strided_slice %368 {offsets = [0, 256], sizes = [8, 128], strides = [1, 1]} : vector<8x384xf32> to vector<8x128xf32>
    %381 = arith.mulf %377, %380 : vector<8x128xf32>
    %382 = arith.addf %379, %381 : vector<8x128xf32>
    %383 = math.tanh %382 : vector<8x128xf32>
    %cst_100 = arith.constant 1.000000e+00 : f32
    %384 = vector.broadcast %cst_100 : f32 to vector<8x128xf32>
    %385 = arith.subf %384, %378 : vector<8x128xf32>
    %386 = arith.mulf %385, %383 : vector<8x128xf32>
    %387 = arith.mulf %378, %340 : vector<8x128xf32>
    %388 = arith.addf %386, %387 : vector<8x128xf32>
    %cst_101 = arith.constant 0.000000e+00 : f32
    %389 = vector.broadcast %cst_101 : f32 to vector<8x128xf32>
    %390 = arith.maximumf %388, %389 : vector<8x128xf32>
    %391 = tpu.concatenate %390, %364 in 1 : vector<8x128xf32>, vector<8x128xf32> -> vector<8x256xf32>
    %c0_102 = arith.constant 0 : index
    %c0_103 = arith.constant 0 : index
    %392 = vector.load %arg6[%c0_102, %c0_103] : memref<256x512xf32, #tpu.memory_space<vmem>>, vector<256x512xf32>
    %cst_104 = arith.constant dense<0.000000e+00> : vector<8x512xf32>
    %393 = tpu.matmul %391, %392, %cst_104 {dimension_numbers = #tpu.dot_dimension_numbers<[1], [0], [0], [1], [0, 0, 1, 1], [], []>} : vector<8x256xf32>, vector<256x512xf32>, vector<8x512xf32> -> vector<8x512xf32>
    %394 = arith.addf %393, %12 : vector<8x512xf32>
    %395 = vector.extract_strided_slice %394 {offsets = [0, 0], sizes = [8, 256], strides = [1, 1]} : vector<8x512xf32> to vector<8x256xf32>
    %396 = arith.negf %395 : vector<8x256xf32>
    %397 = math.exp %396 : vector<8x256xf32>
    %cst_105 = arith.constant 1.000000e+00 : f32
    %398 = vector.broadcast %cst_105 : f32 to vector<8x256xf32>
    %399 = arith.addf %398, %397 : vector<8x256xf32>
    %400 = arith.divf %398, %399 : vector<8x256xf32>
    %401 = vector.extract_strided_slice %400 {offsets = [0, 0], sizes = [8, 128], strides = [1, 1]} : vector<8x256xf32> to vector<8x128xf32>
    %402 = vector.extract_strided_slice %400 {offsets = [0, 128], sizes = [8, 128], strides = [1, 1]} : vector<8x256xf32> to vector<8x128xf32>
    %403 = vector.extract_strided_slice %394 {offsets = [0, 256], sizes = [8, 128], strides = [1, 1]} : vector<8x512xf32> to vector<8x128xf32>
    %404 = vector.extract_strided_slice %394 {offsets = [0, 384], sizes = [8, 128], strides = [1, 1]} : vector<8x512xf32> to vector<8x128xf32>
    %405 = arith.mulf %401, %404 : vector<8x128xf32>
    %406 = arith.addf %403, %405 : vector<8x128xf32>
    %407 = math.tanh %406 : vector<8x128xf32>
    %cst_106 = arith.constant 1.000000e+00 : f32
    %408 = vector.broadcast %cst_106 : f32 to vector<8x128xf32>
    %409 = arith.subf %408, %402 : vector<8x128xf32>
    %410 = arith.mulf %409, %407 : vector<8x128xf32>
    %411 = arith.mulf %402, %364 : vector<8x128xf32>
    %412 = arith.addf %410, %411 : vector<8x128xf32>
    %cst_107 = arith.constant 0.000000e+00 : f32
    %413 = vector.broadcast %cst_107 : f32 to vector<8x128xf32>
    %414 = arith.maximumf %412, %413 : vector<8x128xf32>
    %c0_108 = arith.constant 0 : index
    %c0_109 = arith.constant 0 : index
    %415 = vector.load %arg8[%c0_108, %c0_109] : memref<128x128xf32, #tpu.memory_space<vmem>>, vector<128x128xf32>
    %cst_110 = arith.constant dense<0.000000e+00> : vector<8x128xf32>
    %416 = tpu.matmul %414, %415, %cst_110 {dimension_numbers = #tpu.dot_dimension_numbers<[1], [0], [0], [1], [0, 0, 1, 1], [], []>} : vector<8x128xf32>, vector<128x128xf32>, vector<8x128xf32> -> vector<8x128xf32>
    %c0_111 = arith.constant 0 : index
    %c0_112 = arith.constant 0 : index
    %417 = vector.load %arg9[%c0_111, %c0_112] : memref<1x128xf32, #tpu.memory_space<vmem>>, vector<1x128xf32>
    %418 = vector.broadcast %417 : vector<1x128xf32> to vector<8x128xf32>
    %419 = arith.addf %416, %418 : vector<8x128xf32>
    %c0_113 = arith.constant 0 : index
    %c0_114 = arith.constant 0 : index
    %420 = vector.load %arg10[%c0_113, %c0_114] : memref<8x128xf32, #tpu.memory_space<vmem>>, vector<8x128xf32>
    tpu.vector_store %arg10[%c0_113, %c0_114], %419 {strides = array<i32>} : memref<8x128xf32, #tpu.memory_space<vmem>>, vector<8x128xf32>,
    return
  }
  func.func @transform_0(%arg0: i32) -> (i32, i32, i32) {
    %c0_i32 = arith.constant 0 : i32
    %c0_i32_0 = arith.constant 0 : i32
    %c0_i32_1 = arith.constant 0 : i32
    return %c0_i32, %arg0, %c0_i32_0 : i32, i32, i32
  }
  func.func @transform_1(%arg0: i32) -> (i32, i32) {
    %c0_i32 = arith.constant 0 : i32
    %c0_i32_0 = arith.constant 0 : i32
    %c0_i32_1 = arith.constant 0 : i32
    return %c0_i32, %c0_i32_0 : i32, i32
  }
  func.func @transform_2(%arg0: i32) -> (i32, i32) {
    %c0_i32 = arith.constant 0 : i32
    %c0_i32_0 = arith.constant 0 : i32
    %c0_i32_1 = arith.constant 0 : i32
    return %c0_i32, %c0_i32_0 : i32, i32
  }
  func.func @transform_3(%arg0: i32) -> (i32, i32) {
    %c0_i32 = arith.constant 0 : i32
    %c0_i32_0 = arith.constant 0 : i32
    %c0_i32_1 = arith.constant 0 : i32
    return %c0_i32, %c0_i32_0 : i32, i32
  }
  func.func @transform_4(%arg0: i32) -> (i32, i32) {
    %c0_i32 = arith.constant 0 : i32
    %c0_i32_0 = arith.constant 0 : i32
    %c0_i32_1 = arith.constant 0 : i32
    return %c0_i32, %c0_i32_0 : i32, i32
  }
  func.func @transform_5(%arg0: i32) -> (i32, i32) {
    %c0_i32 = arith.constant 0 : i32
    %c0_i32_0 = arith.constant 0 : i32
    %c0_i32_1 = arith.constant 0 : i32
    return %c0_i32, %c0_i32_0 : i32, i32
  }
  func.func @transform_6(%arg0: i32) -> (i32, i32) {
    %c0_i32 = arith.constant 0 : i32
    %c0_i32_0 = arith.constant 0 : i32
    %c0_i32_1 = arith.constant 0 : i32
    return %c0_i32, %c0_i32_0 : i32, i32
  }
  func.func @transform_7(%arg0: i32) -> (i32, i32) {
    %c0_i32 = arith.constant 0 : i32
    %c0_i32_0 = arith.constant 0 : i32
    %c0_i32_1 = arith.constant 0 : i32
    return %c0_i32, %c0_i32_0 : i32, i32
  }
  func.func @transform_8(%arg0: i32) -> (i32, i32) {
    %c0_i32 = arith.constant 0 : i32
    %c0_i32_0 = arith.constant 0 : i32
    %c0_i32_1 = arith.constant 0 : i32
    return %c0_i32, %c0_i32_0 : i32, i32
  }
  func.func @transform_9(%arg0: i32) -> (i32, i32) {
    %c0_i32 = arith.constant 0 : i32
    %c0_i32_0 = arith.constant 0 : i32
    return %arg0, %c0_i32 : i32, i32
  }
}

</mosaic_0001>

<llo_original>
// kernel: tpu_custom_call.1
$region0: #{tpu_custom_call.1}
  #allocation0 [shape = 'u32[]', space=smem, size = 0x4, offset = 0x4, fixed_abs, tag = 'smem constant byte address 0x4 - core index']
  #allocation1 [shape = 'u32[144,128]{1,0:T(1,128)}', space=vmem, size = 0x12000, scoped, tag = 'internal scratch']
  %s0 = inlined_call_operand.hbm [shape: f32[8,8,128], index: 0, kind: input, shape index: {}]
  %s1 = inlined_call_operand.hbm [shape: f32[128,384], index: 1, kind: input, shape index: {}]
  %s2 = inlined_call_operand.vmem [shape: f32[1,384], index: 2, kind: input, shape index: {}]
  %s3 = inlined_call_operand.hbm [shape: f32[128,384], index: 3, kind: input, shape index: {}]
  %s4 = inlined_call_operand.vmem [shape: f32[1,384], index: 4, kind: input, shape index: {}]
  %s5 = inlined_call_operand.hbm [shape: f32[256,512], index: 5, kind: input, shape index: {}]
  %s6 = inlined_call_operand.vmem [shape: f32[1,512], index: 6, kind: input, shape index: {}]
  %s7 = inlined_call_operand.hbm [shape: f32[128,128], index: 7, kind: input, shape index: {}]
  %s8 = inlined_call_operand.vmem [shape: f32[1,128], index: 8, kind: input, shape index: {}]
  %s9 = inlined_call_operand.hbm [shape: f32[8,128], index: 9, kind: output, shape index: {}]
  %s10 = sld [smem:[#allocation0]]
  $region66: #{tpu_custom_call.1} parent=0
    _
  %s12 = ssub.s32 1, %s10
  %s13 = scalar_select 0, %s12, %s10
  $region1: #{tpu_custom_call.1} parent=0
    #allocation2 [shape = 'u8[32768]{0}', space=vmem, size = 0x8000, scoped, tag = 'input window, operand 0, single buffered']
    #allocation3 [shape = 's32[1]{0}', space=sflag, size = 0x4, scoped, tag = 'scoped memory for tpu_custom_call.1']
    #allocation4 [shape = 's32[1]{0}', space=sflag, size = 0x4, scoped, tag = 'scoped memory for tpu_custom_call.1']
    #allocation5 [shape = 'u8[196608]{0}', space=vmem, size = 0x30000, scoped, tag = 'input window, operand 1, single buffered']
    #allocation6 [shape = 's32[1]{0}', space=sflag, size = 0x4, scoped, tag = 'scoped memory for tpu_custom_call.1']
    #allocation7 [shape = 'u8[196608]{0}', space=vmem, size = 0x30000, scoped, tag = 'input window, operand 3, single buffered']
    #allocation8 [shape = 'u8[524288]{0}', space=vmem, size = 0x80000, scoped, tag = 'input window, operand 5, single buffered']
    #allocation9 [shape = 's32[1]{0}', space=sflag, size = 0x4, scoped, tag = 'scoped memory for tpu_custom_call.1']
    #allocation10 [shape = 'u8[65536]{0}', space=vmem, size = 0x10000, scoped, tag = 'input window, operand 7, single buffered']
    #allocation11 [shape = 'u8[4096]{0}', space=vmem, size = 0x1000, scoped, tag = 'output window, operand 0, single buffered']
    %14 = vsyncpa [#allocation3], 0
    %15 = vsyncpa [#allocation6], 0
    %16 = vsyncpa [#allocation9], 0
    %17 = vsyncpa [#allocation4], 0
    // Predicated region
    $region2: #{tpu_custom_call.1} parent=1 // pred_check
      _
    $region3: #{tpu_custom_call.1} parent=1 // pred_check_branch
      %19 = sbr.rel (0) target = $region5
    $region4: #{tpu_custom_call.1} parent=1 // pred_region
      %s21 = ssub.s32 1024, 1024
      %22 = vsyncadd [#allocation3], %s21
      %s23 = sshll.u32 [#allocation2], 4
      %s24 = int_to_ptr.vmem [resolvable:$true] %s23
      %29 = dma.hbm_to_vmem [thread:$0]  %s0, 1024, %s24, [#allocation3], 128, 128, 8
    $region5: #{tpu_custom_call.1} parent=1 // pred_fallthru
      _
    // Predicated region
    $region6: #{tpu_custom_call.1} parent=1 // pred_check
      _
    $region7: #{tpu_custom_call.1} parent=1 // pred_check_branch
      %31 = sbr.rel (0) target = $region9
    $region8: #{tpu_custom_call.1} parent=1 // pred_region
      %s33 = ssub.s32 6144, 6144
      %34 = vsyncadd [#allocation6], %s33
      %s35 = sshll.u32 [#allocation5], 4
      %s36 = int_to_ptr.vmem [resolvable:$true] %s35
      %41 = dma.hbm_to_vmem [thread:$0]  %s1, 6144, %s36, [#allocation6], 384, 384, 24
    $region9: #{tpu_custom_call.1} parent=1 // pred_fallthru
      _
    // Predicated region
    $region10: #{tpu_custom_call.1} parent=1 // pred_check
      _
    $region11: #{tpu_custom_call.1} parent=1 // pred_check_branch
      %43 = sbr.rel (0) target = $region13
    $region12: #{tpu_custom_call.1} parent=1 // pred_region
      _
    $region13: #{tpu_custom_call.1} parent=1 // pred_fallthru
      _
    // Predicated region
    $region14: #{tpu_custom_call.1} parent=1 // pred_check
      _
    $region15: #{tpu_custom_call.1} parent=1 // pred_check_branch
      %45 = sbr.rel (0) target = $region17
    $region16: #{tpu_custom_call.1} parent=1 // pred_region
      %s47 = ssub.s32 6144, 6144
      %48 = vsyncadd [#allocation6], %s47
      %s49 = sshll.u32 [#allocation7], 4
      %s50 = int_to_ptr.vmem [resolvable:$true] %s49
      %55 = dma.hbm_to_vmem [thread:$0]  %s3, 6144, %s50, [#allocation6], 384, 384, 24
    $region17: #{tpu_custom_call.1} parent=1 // pred_fallthru
      _
    // Predicated region
    $region18: #{tpu_custom_call.1} parent=1 // pred_check
      _
    $region19: #{tpu_custom_call.1} parent=1 // pred_check_branch
      %57 = sbr.rel (0) target = $region21
    $region20: #{tpu_custom_call.1} parent=1 // pred_region
      _
    $region21: #{tpu_custom_call.1} parent=1 // pred_fallthru
      _
    // Predicated region
    $region22: #{tpu_custom_call.1} parent=1 // pred_check
      _
    $region23: #{tpu_custom_call.1} parent=1 // pred_check_branch
      %59 = sbr.rel (0) target = $region25
    $region24: #{tpu_custom_call.1} parent=1 // pred_region
      %s61 = ssub.s32 16384, 16384
      %62 = vsyncadd [#allocation9], %s61
      %s63 = sshll.u32 [#allocation8], 4
      %s64 = int_to_ptr.vmem [resolvable:$true] %s63
      %69 = dma.hbm_to_vmem [thread:$0]  %s5, 16384, %s64, [#allocation9], 512, 512, 32
    $region25: #{tpu_custom_call.1} parent=1 // pred_fallthru
      _
    // Predicated region
    $region26: #{tpu_custom_call.1} parent=1 // pred_check
      _
    $region27: #{tpu_custom_call.1} parent=1 // pred_check_branch
      %71 = sbr.rel (0) target = $region29
    $region28: #{tpu_custom_call.1} parent=1 // pred_region
      _
    $region29: #{tpu_custom_call.1} parent=1 // pred_fallthru
      _
    // Predicated region
    $region30: #{tpu_custom_call.1} parent=1 // pred_check
      _
    $region31: #{tpu_custom_call.1} parent=1 // pred_check_branch
      %73 = sbr.rel (0) target = $region33
    $region32: #{tpu_custom_call.1} parent=1 // pred_region
      %s75 = ssub.s32 2048, 2048
      %76 = vsyncadd [#allocation9], %s75
      %s77 = sshll.u32 [#allocation10], 4
      %s78 = int_to_ptr.vmem [resolvable:$true] %s77
      %83 = dma.hbm_to_vmem [thread:$0]  %s7, 2048, %s78, [#allocation9], 128, 128, 8
    $region33: #{tpu_custom_call.1} parent=1 // pred_fallthru
      _
    // Predicated region
    $region34: #{tpu_custom_call.1} parent=1 // pred_check
      _
    $region35: #{tpu_custom_call.1} parent=1 // pred_check_branch
      %85 = sbr.rel (0) target = $region37
    $region36: #{tpu_custom_call.1} parent=1 // pred_region
      _
    $region37: #{tpu_custom_call.1} parent=1 // pred_fallthru
      _
    // Predicated region
    $region38: #{tpu_custom_call.1} parent=1 // pred_check
      _
    $region39: #{tpu_custom_call.1} parent=1 // pred_check_branch
      %87 = sbr.rel (0) target = $region41
    $region40: #{tpu_custom_call.1} parent=1 // pred_region
      %88 = dma.done [#allocation3], 1024
    $region41: #{tpu_custom_call.1} parent=1 // pred_fallthru
      _
    // Predicated region
    $region42: #{tpu_custom_call.1} parent=1 // pred_check
      _
    $region43: #{tpu_custom_call.1} parent=1 // pred_check_branch
      %90 = sbr.rel (0) target = $region45
    $region44: #{tpu_custom_call.1} parent=1 // pred_region
      %91 = dma.done [#allocation6], 6144
    $region45: #{tpu_custom_call.1} parent=1 // pred_fallthru
      _
    // Predicated region
    $region46: #{tpu_custom_call.1} parent=1 // pred_check
      _
    $region47: #{tpu_custom_call.1} parent=1 // pred_check_branch
      %93 = sbr.rel (0) target = $region49
    $region48: #{tpu_custom_call.1} parent=1 // pred_region
      %94 = dma.done [#allocation6], 6144
    $region49: #{tpu_custom_call.1} parent=1 // pred_fallthru
      _
    // Predicated region
    $region50: #{tpu_custom_call.1} parent=1 // pred_check
      _
    $region51: #{tpu_custom_call.1} parent=1 // pred_check_branch
      %96 = sbr.rel (0) target = $region53
    $region52: #{tpu_custom_call.1} parent=1 // pred_region
      %97 = dma.done [#allocation9], 16384
    $region53: #{tpu_custom_call.1} parent=1 // pred_fallthru
      _
    // Predicated region
    $region54: #{tpu_custom_call.1} parent=1 // pred_check
      _
    $region55: #{tpu_custom_call.1} parent=1 // pred_check_branch
      %99 = sbr.rel (0) target = $region57
    $region56: #{tpu_custom_call.1} parent=1 // pred_region
      %100 = dma.done [#allocation9], 2048
    $region57: #{tpu_custom_call.1} parent=1 // pred_fallthru
      _
    %v101 = vld [vmem:[#allocation2] sm:$0xff]
    %v102 = vld [vmem:[#allocation2 + $0x8] sm:$0xff]
    %v103 = vld [vmem:[#allocation2 + $0x10] sm:$0xff]
    %v104 = vld [vmem:[#allocation2 + $0x18] sm:$0xff]
    %v105 = vld [vmem:[#allocation2 + $0x20] sm:$0xff]
    %v106 = vld [vmem:[#allocation2 + $0x28] sm:$0xff]
    %v107 = vld [vmem:[#allocation2 + $0x30] sm:$0xff]
    %v108 = vld [vmem:[#allocation2 + $0x38] sm:$0xff]
    %v109 = vld [vmem:[#allocation5] sm:$0xff]
    %v110 = vld [vmem:[#allocation5 + $0x8] sm:$0xff]
    %v111 = vld [vmem:[#allocation5 + $0x10] sm:$0xff]
    %v112 = vld [vmem:[#allocation5 + $0x18] sm:$0xff]
    %v113 = vld [vmem:[#allocation5 + $0x20] sm:$0xff]
    %v114 = vld [vmem:[#allocation5 + $0x28] sm:$0xff]
    %v115 = vld [vmem:[#allocation5 + $0x30] sm:$0xff]
    %v116 = vld [vmem:[#allocation5 + $0x38] sm:$0xff]
    %v117 = vld [vmem:[#allocation5 + $0x40] sm:$0xff]
    %v118 = vld [vmem:[#allocation5 + $0x48] sm:$0xff]
    %v119 = vld [vmem:[#allocation5 + $0x50] sm:$0xff]
    %v120 = vld [vmem:[#allocation5 + $0x58] sm:$0xff]
    %v121 = vld [vmem:[#allocation5 + $0x60] sm:$0xff]
    %v122 = vld [vmem:[#allocation5 + $0x68] sm:$0xff]
    %v123 = vld [vmem:[#allocation5 + $0x70] sm:$0xff]
    %v124 = vld [vmem:[#allocation5 + $0x78] sm:$0xff]
    %v125 = vld [vmem:[#allocation5 + $0x80] sm:$0xff]
    %v126 = vld [vmem:[#allocation5 + $0x88] sm:$0xff]
    %v127 = vld [vmem:[#allocation5 + $0x90] sm:$0xff]
    %v128 = vld [vmem:[#allocation5 + $0x98] sm:$0xff]
    %v129 = vld [vmem:[#allocation5 + $0xa0] sm:$0xff]
    %v130 = vld [vmem:[#allocation5 + $0xa8] sm:$0xff]
    %v131 = vld [vmem:[#allocation5 + $0xb0] sm:$0xff]
    %v132 = vld [vmem:[#allocation5 + $0xb8] sm:$0xff]
    %v133 = vld [vmem:[#allocation5 + $0xc0] sm:$0xff]
    %v134 = vld [vmem:[#allocation5 + $0xc8] sm:$0xff]
    %v135 = vld [vmem:[#allocation5 + $0xd0] sm:$0xff]
    %v136 = vld [vmem:[#allocation5 + $0xd8] sm:$0xff]
    %v137 = vld [vmem:[#allocation5 + $0xe0] sm:$0xff]
    %v138 = vld [vmem:[#allocation5 + $0xe8] sm:$0xff]
    %v139 = vld [vmem:[#allocation5 + $0xf0] sm:$0xff]
    %v140 = vld [vmem:[#allocation5 + $0xf8] sm:$0xff]
    %v141 = vld [vmem:[#allocation5 + $0x100] sm:$0xff]
    %v142 = vld [vmem:[#allocation5 + $0x108] sm:$0xff]
    %v143 = vld [vmem:[#allocation5 + $0x110] sm:$0xff]
    %v144 = vld [vmem:[#allocation5 + $0x118] sm:$0xff]
    %v145 = vld [vmem:[#allocation5 + $0x120] sm:$0xff]
    %v146 = vld [vmem:[#allocation5 + $0x128] sm:$0xff]
    %v147 = vld [vmem:[#allocation5 + $0x130] sm:$0xff]
    %v148 = vld [vmem:[#allocation5 + $0x138] sm:$0xff]
    %v149 = vld [vmem:[#allocation5 + $0x140] sm:$0xff]
    %v150 = vld [vmem:[#allocation5 + $0x148] sm:$0xff]
    %v151 = vld [vmem:[#allocation5 + $0x150] sm:$0xff]
    %v152 = vld [vmem:[#allocation5 + $0x158] sm:$0xff]
    %v153 = vld [vmem:[#allocation5 + $0x160] sm:$0xff]
    %v154 = vld [vmem:[#allocation5 + $0x168] sm:$0xff]
    %v155 = vld [vmem:[#allocation5 + $0x170] sm:$0xff]
    %v156 = vld [vmem:[#allocation5 + $0x178] sm:$0xff]
    %v157 = vld [vmem:[%s2] sm:$0x7]
    %v159 = vlaneseq
    %v160 = vshrl.u32 %v159, 7
    %v161 = vsub.s32 0, %v160
    %v162 = vrot.slane %v157, %v161
    %v163 = vlaneseq
    %v164 = vshrl.u32 %v163, 7
    %v165 = vsub.s32 1, %v164
    %v166 = vrot.slane %v157, %v165
    %v167 = vlaneseq
    %v168 = vshrl.u32 %v167, 7
    %v169 = vsub.s32 2, %v168
    %v170 = vrot.slane %v157, %v169
    %174 = vmatprep.subr.mxu0 %v110
    %175 = vmatpush1.msra.mxu0 %v109
    %176 = vmatprep.subr.mxu0 %v113
    %177 = vmatpush1.msra.mxu0 %v112
    %178 = vmatprep.subr.mxu0 %v116
    %179 = vmatpush1.msra.mxu0 %v115
    %180 = vmatprep.subr.mxu0 %v119
    %181 = vmatpush1.msra.mxu0 %v118
    %182 = vmatprep.subr.mxu0 %v122
    %183 = vmatpush1.msra.mxu0 %v121
    %184 = vmatprep.subr.mxu0 %v125
    %185 = vmatpush1.msra.mxu0 %v124
    %186 = vmatprep.subr.mxu0 %v128
    %187 = vmatpush1.msra.mxu0 %v127
    %188 = vmatprep.subr.mxu0 %v131
    %189 = vmatpush1.msra.mxu0 %v130
    %190 = vmatprep.subr.mxu0 %v134
    %191 = vmatpush1.msra.mxu0 %v133
    %192 = vmatprep.subr.mxu0 %v137
    %193 = vmatpush1.msra.mxu0 %v136
    %194 = vmatprep.subr.mxu0 %v140
    %195 = vmatpush1.msra.mxu0 %v139
    %196 = vmatprep.subr.mxu0 %v143
    %197 = vmatpush1.msra.mxu0 %v142
    %198 = vmatprep.subr.mxu0 %v146
    %199 = vmatpush1.msra.mxu0 %v145
    %200 = vmatprep.subr.mxu0 %v149
    %201 = vmatpush1.msra.mxu0 %v148
    %202 = vmatprep.subr.mxu0 %v152
    %203 = vmatpush1.msra.mxu0 %v151
    %204 = vmatprep.subr.mxu0 %v155
    %205 = vmatpush1.msra.mxu0 %v154
    %206 = vmatprep.subr.mxu0 0.0
    %207 = vmatpush1.msra.mxu0 0.0
    %208 = vmatprep.subr.mxu0 0.0
    %209 = vmatpush1.msra.mxu0 0.0
    %210 = vmatprep.subr.mxu0 0.0
    %211 = vmatpush1.msra.mxu0 0.0
    %212 = vmatprep.subr.mxu0 0.0
    %213 = vmatpush1.msra.mxu0 0.0
    %214 = vmatprep.subr.mxu0 0.0
    %215 = vmatpush1.msra.mxu0 0.0
    %216 = vmatprep.subr.mxu0 0.0
    %217 = vmatpush1.msra.mxu0 0.0
    %218 = vmatprep.subr.mxu0 0.0
    %219 = vmatpush1.msra.mxu0 0.0
    %220 = vmatprep.subr.mxu0 0.0
    %221 = vmatpush1.msra.mxu0 0.0
    %222 = vmatprep.subr.mxu0 0.0
    %223 = vmatpush1.msra.mxu0 0.0
    %224 = vmatprep.subr.mxu0 0.0
    %225 = vmatpush1.msra.mxu0 0.0
    %226 = vmatprep.subr.mxu0 0.0
    %227 = vmatpush1.msra.mxu0 0.0
    %228 = vmatprep.subr.mxu0 0.0
    %229 = vmatpush1.msra.mxu0 0.0
    %230 = vmatprep.subr.mxu0 0.0
    %231 = vmatpush1.msra.mxu0 0.0
    %232 = vmatprep.subr.mxu0 0.0
    %233 = vmatpush1.msra.mxu0 0.0
    %234 = vmatprep.subr.mxu0 0.0
    %235 = vmatpush1.msra.mxu0 0.0
    %236 = vmatprep.subr.mxu0 0.0
    %237 = vmatpush1.msra.mxu0 0.0
    %238 = vmatprep.mubr.f32.mxu0 0.0
    %239 = vmatmul.mubr.f32.gmra.mrb[0].mxu0 %v101
    %v240 = vpop.f32.mrb[0].mxu0
    %v241 = vadd.f32 %v162, %v240
    %v242 = vpop.f32.mrb[0].mxu0
    %v243 = vadd.f32 %v166, %v242
    %244 = vmatprep.mubr.f32.mxu0 0.0
    %245 = vmatmul.mubr.f32.gmra.mrb[0].mxu0 %v102
    %v246 = vpop.f32.mrb[0].mxu0
    %v247 = vadd.f32 %v162, %v246
    %v248 = vpop.f32.mrb[0].mxu0
    %v249 = vadd.f32 %v166, %v248
    %250 = vmatprep.mubr.f32.mxu0 0.0
    %251 = vmatmul.mubr.f32.gmra.mrb[0].mxu0 %v103
    %v252 = vpop.f32.mrb[0].mxu0
    %v253 = vadd.f32 %v162, %v252
    %v254 = vpop.f32.mrb[0].mxu0
    %v255 = vadd.f32 %v166, %v254
    %256 = vmatprep.mubr.f32.mxu0 0.0
    %257 = vmatmul.mubr.f32.gmra.mrb[0].mxu0 %v104
    %v258 = vpop.f32.mrb[0].mxu0
    %v259 = vadd.f32 %v162, %v258
    %v260 = vpop.f32.mrb[0].mxu0
    %v261 = vadd.f32 %v166, %v260
    %262 = vmatprep.mubr.f32.mxu0 0.0
    %263 = vmatmul.mubr.f32.gmra.mrb[0].mxu0 %v105
    %v264 = vpop.f32.mrb[0].mxu0
    %v265 = vadd.f32 %v162, %v264
    %v266 = vpop.f32.mrb[0].mxu0
    %v267 = vadd.f32 %v166, %v266
    %268 = vmatprep.mubr.f32.mxu0 0.0
    %269 = vmatmul.mubr.f32.gmra.mrb[0].mxu0 %v106
    %v270 = vpop.f32.mrb[0].mxu0
    %v271 = vadd.f32 %v162, %v270
    %v272 = vpop.f32.mrb[0].mxu0
    %v273 = vadd.f32 %v166, %v272
    %274 = vmatprep.mubr.f32.mxu0 0.0
    %275 = vmatmul.mubr.f32.gmra.mrb[0].mxu0 %v107
    %v276 = vpop.f32.mrb[0].mxu0
    %v277 = vadd.f32 %v162, %v276
    %v278 = vpop.f32.mrb[0].mxu0
    %v279 = vadd.f32 %v166, %v278
    %280 = vmatprep.mubr.f32.mxu0 0.0
    %281 = vmatmul.mubr.f32.gmra.mrb[0].mxu0 %v108
    %v282 = vpop.f32.mrb[0].mxu0
    %v283 = vadd.f32 %v162, %v282
    %v284 = vpop.f32.mrb[0].mxu0
    %v285 = vadd.f32 %v166, %v284
    %286 = vdwg.mxu0
    %287 = vmatprep.subr.mxu0 0.0
    %288 = vmatpush1.msra.mxu0 %v111
    %289 = vmatprep.subr.mxu0 0.0
    %290 = vmatpush1.msra.mxu0 %v114
    %291 = vmatprep.subr.mxu0 0.0
    %292 = vmatpush1.msra.mxu0 %v117
    %293 = vmatprep.subr.mxu0 0.0
    %294 = vmatpush1.msra.mxu0 %v120
    %295 = vmatprep.subr.mxu0 0.0
    %296 = vmatpush1.msra.mxu0 %v123
    %297 = vmatprep.subr.mxu0 0.0
    %298 = vmatpush1.msra.mxu0 %v126
    %299 = vmatprep.subr.mxu0 0.0
    %300 = vmatpush1.msra.mxu0 %v129
    %301 = vmatprep.subr.mxu0 0.0
    %302 = vmatpush1.msra.mxu0 %v132
    %303 = vmatprep.subr.mxu0 0.0
    %304 = vmatpush1.msra.mxu0 %v135
    %305 = vmatprep.subr.mxu0 0.0
    %306 = vmatpush1.msra.mxu0 %v138
    %307 = vmatprep.subr.mxu0 0.0
    %308 = vmatpush1.msra.mxu0 %v141
    %309 = vmatprep.subr.mxu0 0.0
    %310 = vmatpush1.msra.mxu0 %v144
    %311 = vmatprep.subr.mxu0 0.0
    %312 = vmatpush1.msra.mxu0 %v147
    %313 = vmatprep.subr.mxu0 0.0
    %314 = vmatpush1.msra.mxu0 %v150
    %315 = vmatprep.subr.mxu0 0.0
    %316 = vmatpush1.msra.mxu0 %v153
    %317 = vmatprep.subr.mxu0 0.0
    %318 = vmatpush1.msra.mxu0 %v156
    %319 = vmatprep.subr.mxu0 0.0
    %320 = vmatpush1.msra.mxu0 0.0
    %321 = vmatprep.subr.mxu0 0.0
    %322 = vmatpush1.msra.mxu0 0.0
    %323 = vmatprep.subr.mxu0 0.0
    %324 = vmatpush1.msra.mxu0 0.0
    %325 = vmatprep.subr.mxu0 0.0
    %326 = vmatpush1.msra.mxu0 0.0
    %327 = vmatprep.subr.mxu0 0.0
    %328 = vmatpush1.msra.mxu0 0.0
    %329 = vmatprep.subr.mxu0 0.0
    %330 = vmatpush1.msra.mxu0 0.0
    %331 = vmatprep.subr.mxu0 0.0
    %332 = vmatpush1.msra.mxu0 0.0
    %333 = vmatprep.subr.mxu0 0.0
    %334 = vmatpush1.msra.mxu0 0.0
    %335 = vmatprep.subr.mxu0 0.0
    %336 = vmatpush1.msra.mxu0 0.0
    %337 = vmatprep.subr.mxu0 0.0
    %338 = vmatpush1.msra.mxu0 0.0
    %339 = vmatprep.subr.mxu0 0.0
    %340 = vmatpush1.msra.mxu0 0.0
    %341 = vmatprep.subr.mxu0 0.0
    %342 = vmatpush1.msra.mxu0 0.0
    %343 = vmatprep.subr.mxu0 0.0
    %344 = vmatpush1.msra.mxu0 0.0
    %345 = vmatprep.subr.mxu0 0.0
    %346 = vmatpush1.msra.mxu0 0.0
    %347 = vmatprep.subr.mxu0 0.0
    %348 = vmatpush1.msra.mxu0 0.0
    %349 = vmatprep.subr.mxu0 0.0
    %350 = vmatpush1.msra.mxu0 0.0
    %351 = vmatprep.mubr.f32.mxu0 0.0
    %352 = vmatmul.mubr.f32.gmra.mrb[0].mxu0 %v101
    %v353 = vpop.f32.mrb[0].mxu0
    %v354 = vadd.f32 %v170, %v353
    %v355 = vpop.f32.mrb[0].mxu0
    %356 = vmatprep.mubr.f32.mxu0 0.0
    %357 = vmatmul.mubr.f32.gmra.mrb[0].mxu0 %v102
    %v358 = vpop.f32.mrb[0].mxu0
    %v359 = vadd.f32 %v170, %v358
    %v360 = vpop.f32.mrb[0].mxu0
    %361 = vmatprep.mubr.f32.mxu0 0.0
    %362 = vmatmul.mubr.f32.gmra.mrb[0].mxu0 %v103
    %v363 = vpop.f32.mrb[0].mxu0
    %v364 = vadd.f32 %v170, %v363
    %v365 = vpop.f32.mrb[0].mxu0
    %366 = vmatprep.mubr.f32.mxu0 0.0
    %367 = vmatmul.mubr.f32.gmra.mrb[0].mxu0 %v104
    %v368 = vpop.f32.mrb[0].mxu0
    %v369 = vadd.f32 %v170, %v368
    %v370 = vpop.f32.mrb[0].mxu0
    %371 = vmatprep.mubr.f32.mxu0 0.0
    %372 = vmatmul.mubr.f32.gmra.mrb[0].mxu0 %v105
    %v373 = vpop.f32.mrb[0].mxu0
    %v374 = vadd.f32 %v170, %v373
    %v375 = vpop.f32.mrb[0].mxu0
    %376 = vmatprep.mubr.f32.mxu0 0.0
    %377 = vmatmul.mubr.f32.gmra.mrb[0].mxu0 %v106
    %v378 = vpop.f32.mrb[0].mxu0
    %v379 = vadd.f32 %v170, %v378
    %v380 = vpop.f32.mrb[0].mxu0
    %381 = vmatprep.mubr.f32.mxu0 0.0
    %382 = vmatmul.mubr.f32.gmra.mrb[0].mxu0 %v107
    %v383 = vpop.f32.mrb[0].mxu0
    %v384 = vadd.f32 %v170, %v383
    %v385 = vpop.f32.mrb[0].mxu0
    %386 = vmatprep.mubr.f32.mxu0 0.0
    %387 = vmatmul.mubr.f32.gmra.mrb[0].mxu0 %v108
    %v388 = vpop.f32.mrb[0].mxu0
    %v389 = vadd.f32 %v170, %v388
    %v390 = vpop.f32.mrb[0].mxu0
    %391 = vdwg.mxu0
    %v392 = vld [vmem:[%s4] sm:$0x7]
    %v394 = vlaneseq
    %v395 = vshrl.u32 %v394, 7
    %v396 = vsub.s32 0, %v395
    %v397 = vrot.slane %v392, %v396
    %v398 = vlaneseq
    %v399 = vshrl.u32 %v398, 7
    %v400 = vsub.s32 1, %v399
    %v401 = vrot.slane %v392, %v400
    %v402 = vlaneseq
    %v403 = vshrl.u32 %v402, 7
    %v404 = vsub.s32 2, %v403
    %v405 = vrot.slane %v392, %v404
    %v409 = vld [vmem:[%s6] sm:$0xf]
    %v411 = vlaneseq
    %v412 = vshrl.u32 %v411, 7
    %v413 = vsub.s32 0, %v412
    %v414 = vrot.slane %v409, %v413
    %v415 = vlaneseq
    %v416 = vshrl.u32 %v415, 7
    %v417 = vsub.s32 1, %v416
    %v418 = vrot.slane %v409, %v417
    %v419 = vlaneseq
    %v420 = vshrl.u32 %v419, 7
    %v421 = vsub.s32 2, %v420
    %v422 = vrot.slane %v409, %v421
    %v423 = vlaneseq
    %v424 = vshrl.u32 %v423, 7
    %v425 = vsub.s32 3, %v424
    %v426 = vrot.slane %v409, %v425
    %v431 = vld [vmem:[#allocation7] sm:$0xff]
    %v432 = vld [vmem:[#allocation7 + $0x8] sm:$0xff]
    %v433 = vld [vmem:[#allocation7 + $0x10] sm:$0xff]
    %v434 = vld [vmem:[#allocation7 + $0x18] sm:$0xff]
    %v435 = vld [vmem:[#allocation7 + $0x20] sm:$0xff]
    %v436 = vld [vmem:[#allocation7 + $0x28] sm:$0xff]
    %v437 = vld [vmem:[#allocation7 + $0x30] sm:$0xff]
    %v438 = vld [vmem:[#allocation7 + $0x38] sm:$0xff]
    %v439 = vld [vmem:[#allocation7 + $0x40] sm:$0xff]
    %v440 = vld [vmem:[#allocation7 + $0x48] sm:$0xff]
    %v441 = vld [vmem:[#allocation7 + $0x50] sm:$0xff]
    %v442 = vld [vmem:[#allocation7 + $0x58] sm:$0xff]
    %v443 = vld [vmem:[#allocation7 + $0x60] sm:$0xff]
    %v444 = vld [vmem:[#allocation7 + $0x68] sm:$0xff]
    %v445 = vld [vmem:[#allocation7 + $0x70] sm:$0xff]
    %v446 = vld [vmem:[#allocation7 + $0x78] sm:$0xff]
    %v447 = vld [vmem:[#allocation7 + $0x80] sm:$0xff]
    %v448 = vld [vmem:[#allocation7 + $0x88] sm:$0xff]
    %v449 = vld [vmem:[#allocation7 + $0x90] sm:$0xff]
    %v450 = vld [vmem:[#allocation7 + $0x98] sm:$0xff]
    %v451 = vld [vmem:[#allocation7 + $0xa0] sm:$0xff]
    %v452 = vld [vmem:[#allocation7 + $0xa8] sm:$0xff]
    %v453 = vld [vmem:[#allocation7 + $0xb0] sm:$0xff]
    %v454 = vld [vmem:[#allocation7 + $0xb8] sm:$0xff]
    %v455 = vld [vmem:[#allocation7 + $0xc0] sm:$0xff]
    %v456 = vld [vmem:[#allocation7 + $0xc8] sm:$0xff]
    %v457 = vld [vmem:[#allocation7 + $0xd0] sm:$0xff]
    %v458 = vld [vmem:[#allocation7 + $0xd8] sm:$0xff]
    %v459 = vld [vmem:[#allocation7 + $0xe0] sm:$0xff]
    %v460 = vld [vmem:[#allocation7 + $0xe8] sm:$0xff]
    %v461 = vld [vmem:[#allocation7 + $0xf0] sm:$0xff]
    %v462 = vld [vmem:[#allocation7 + $0xf8] sm:$0xff]
    %v463 = vld [vmem:[#allocation7 + $0x100] sm:$0xff]
    %v464 = vld [vmem:[#allocation7 + $0x108] sm:$0xff]
    %v465 = vld [vmem:[#allocation7 + $0x110] sm:$0xff]
    %v466 = vld [vmem:[#allocation7 + $0x118] sm:$0xff]
    %v467 = vld [vmem:[#allocation7 + $0x120] sm:$0xff]
    %v468 = vld [vmem:[#allocation7 + $0x128] sm:$0xff]
    %v469 = vld [vmem:[#allocation7 + $0x130] sm:$0xff]
    %v470 = vld [vmem:[#allocation7 + $0x138] sm:$0xff]
    %v471 = vld [vmem:[#allocation7 + $0x140] sm:$0xff]
    %v472 = vld [vmem:[#allocation7 + $0x148] sm:$0xff]
    %v473 = vld [vmem:[#allocation7 + $0x150] sm:$0xff]
    %v474 = vld [vmem:[#allocation7 + $0x158] sm:$0xff]
    %v475 = vld [vmem:[#allocation7 + $0x160] sm:$0xff]
    %v476 = vld [vmem:[#allocation7 + $0x168] sm:$0xff]
    %v477 = vld [vmem:[#allocation7 + $0x170] sm:$0xff]
    %v478 = vld [vmem:[#allocation7 + $0x178] sm:$0xff]
    %479 = vmatprep.subr.mxu0 %v432
    %480 = vmatpush1.msra.mxu0 %v431
    %481 = vmatprep.subr.mxu0 %v435
    %482 = vmatpush1.msra.mxu0 %v434
    %483 = vmatprep.subr.mxu0 %v438
    %484 = vmatpush1.msra.mxu0 %v437
    %485 = vmatprep.subr.mxu0 %v441
    %486 = vmatpush1.msra.mxu0 %v440
    %487 = vmatprep.subr.mxu0 %v444
    %488 = vmatpush1.msra.mxu0 %v443
    %489 = vmatprep.subr.mxu0 %v447
    %490 = vmatpush1.msra.mxu0 %v446
    %491 = vmatprep.subr.mxu0 %v450
    %492 = vmatpush1.msra.mxu0 %v449
    %493 = vmatprep.subr.mxu0 %v453
    %494 = vmatpush1.msra.mxu0 %v452
    %495 = vmatprep.subr.mxu0 %v456
    %496 = vmatpush1.msra.mxu0 %v455
    %497 = vmatprep.subr.mxu0 %v459
    %498 = vmatpush1.msra.mxu0 %v458
    %499 = vmatprep.subr.mxu0 %v462
    %500 = vmatpush1.msra.mxu0 %v461
    %501 = vmatprep.subr.mxu0 %v465
    %502 = vmatpush1.msra.mxu0 %v464
    %503 = vmatprep.subr.mxu0 %v468
    %504 = vmatpush1.msra.mxu0 %v467
    %505 = vmatprep.subr.mxu0 %v471
    %506 = vmatpush1.msra.mxu0 %v470
    %507 = vmatprep.subr.mxu0 %v474
    %508 = vmatpush1.msra.mxu0 %v473
    %509 = vmatprep.subr.mxu0 %v477
    %510 = vmatpush1.msra.mxu0 %v476
    %511 = vmatprep.subr.mxu0 0.0
    %512 = vmatpush1.msra.mxu0 0.0
    %513 = vmatprep.subr.mxu0 0.0
    %514 = vmatpush1.msra.mxu0 0.0
    %515 = vmatprep.subr.mxu0 0.0
    %516 = vmatpush1.msra.mxu0 0.0
    %517 = vmatprep.subr.mxu0 0.0
    %518 = vmatpush1.msra.mxu0 0.0
    %519 = vmatprep.subr.mxu0 0.0
    %520 = vmatpush1.msra.mxu0 0.0
    %521 = vmatprep.subr.mxu0 0.0
    %522 = vmatpush1.msra.mxu0 0.0
    %523 = vmatprep.subr.mxu0 0.0
    %524 = vmatpush1.msra.mxu0 0.0
    %525 = vmatprep.subr.mxu0 0.0
    %526 = vmatpush1.msra.mxu0 0.0
    %527 = vmatprep.subr.mxu0 0.0
    %528 = vmatpush1.msra.mxu0 0.0
    %529 = vmatprep.subr.mxu0 0.0
    %530 = vmatpush1.msra.mxu0 0.0
    %531 = vmatprep.subr.mxu0 0.0
    %532 = vmatpush1.msra.mxu0 0.0
    %533 = vmatprep.subr.mxu0 0.0
    %534 = vmatpush1.msra.mxu0 0.0
    %535 = vmatprep.subr.mxu0 0.0
    %536 = vmatpush1.msra.mxu0 0.0
    %537 = vmatprep.subr.mxu0 0.0
    %538 = vmatpush1.msra.mxu0 0.0
    %539 = vmatprep.subr.mxu0 0.0
    %540 = vmatpush1.msra.mxu0 0.0
    %541 = vmatprep.subr.mxu0 0.0
    %542 = vmatpush1.msra.mxu0 0.0
    %543 = vmatprep.mubr.f32.mxu0 0.0
    %544 = vmatmul.mubr.f32.gmra.mrb[0].mxu0 0.0
    %v545 = vpop.f32.mrb[0].mxu0
    %v546 = vadd.f32 %v397, %v545
    %v547 = vpop.f32.mrb[0].mxu0
    %v548 = vadd.f32 %v401, %v547
    %549 = vdwg.mxu0
    %550 = vmatprep.subr.mxu0 0.0
    %551 = vmatpush1.msra.mxu0 %v433
    %552 = vmatprep.subr.mxu0 0.0
    %553 = vmatpush1.msra.mxu0 %v436
    %554 = vmatprep.subr.mxu0 0.0
    %555 = vmatpush1.msra.mxu0 %v439
    %556 = vmatprep.subr.mxu0 0.0
    %557 = vmatpush1.msra.mxu0 %v442
    %558 = vmatprep.subr.mxu0 0.0
    %559 = vmatpush1.msra.mxu0 %v445
    %560 = vmatprep.subr.mxu0 0.0
    %561 = vmatpush1.msra.mxu0 %v448
    %562 = vmatprep.subr.mxu0 0.0
    %563 = vmatpush1.msra.mxu0 %v451
    %564 = vmatprep.subr.mxu0 0.0
    %565 = vmatpush1.msra.mxu0 %v454
    %566 = vmatprep.subr.mxu0 0.0
    %567 = vmatpush1.msra.mxu0 %v457
    %568 = vmatprep.subr.mxu0 0.0
    %569 = vmatpush1.msra.mxu0 %v460
    %570 = vmatprep.subr.mxu0 0.0
    %571 = vmatpush1.msra.mxu0 %v463
    %572 = vmatprep.subr.mxu0 0.0
    %573 = vmatpush1.msra.mxu0 %v466
    %574 = vmatprep.subr.mxu0 0.0
    %575 = vmatpush1.msra.mxu0 %v469
    %576 = vmatprep.subr.mxu0 0.0
    %577 = vmatpush1.msra.mxu0 %v472
    %578 = vmatprep.subr.mxu0 0.0
    %579 = vmatpush1.msra.mxu0 %v475
    %580 = vmatprep.subr.mxu0 0.0
    %581 = vmatpush1.msra.mxu0 %v478
    %582 = vmatprep.subr.mxu0 0.0
    %583 = vmatpush1.msra.mxu0 0.0
    %584 = vmatprep.subr.mxu0 0.0
    %585 = vmatpush1.msra.mxu0 0.0
    %586 = vmatprep.subr.mxu0 0.0
    %587 = vmatpush1.msra.mxu0 0.0
    %588 = vmatprep.subr.mxu0 0.0
    %589 = vmatpush1.msra.mxu0 0.0
    %590 = vmatprep.subr.mxu0 0.0
    %591 = vmatpush1.msra.mxu0 0.0
    %592 = vmatprep.subr.mxu0 0.0
    %593 = vmatpush1.msra.mxu0 0.0
    %594 = vmatprep.subr.mxu0 0.0
    %595 = vmatpush1.msra.mxu0 0.0
    %596 = vmatprep.subr.mxu0 0.0
    %597 = vmatpush1.msra.mxu0 0.0
    %598 = vmatprep.subr.mxu0 0.0
    %599 = vmatpush1.msra.mxu0 0.0
    %600 = vmatprep.subr.mxu0 0.0
    %601 = vmatpush1.msra.mxu0 0.0
    %602 = vmatprep.subr.mxu0 0.0
    %603 = vmatpush1.msra.mxu0 0.0
    %604 = vmatprep.subr.mxu0 0.0
    %605 = vmatpush1.msra.mxu0 0.0
    %606 = vmatprep.subr.mxu0 0.0
    %607 = vmatpush1.msra.mxu0 0.0
    %608 = vmatprep.subr.mxu0 0.0
    %609 = vmatpush1.msra.mxu0 0.0
    %610 = vmatprep.subr.mxu0 0.0
    %611 = vmatpush1.msra.mxu0 0.0
    %612 = vmatprep.subr.mxu0 0.0
    %613 = vmatpush1.msra.mxu0 0.0
    %614 = vmatprep.mubr.f32.mxu0 0.0
    %615 = vmatmul.mubr.f32.gmra.mrb[0].mxu0 0.0
    %v616 = vpop.f32.mrb[0].mxu0
    %v617 = vadd.f32 %v405, %v616
    %v618 = vpop.f32.mrb[0].mxu0
    %619 = vdwg.mxu0
    %v620 = vadd.f32 %v241, %v546
    %v621 = vadd.f32 %v243, %v548
    %v622 = vxor.u32 %v620, 2147483648
    %v623 = vxor.u32 %v621, 2147483648
    %v624 = vmul.f32 %v622, 1.442695
    %v625 = vpow.pop %v624
    %v626 = vmul.f32 %v623, 1.442695
    %v627 = vpow.pop %v626
    %v628 = vadd.f32 %v625, 1.0
    %v629 = vadd.f32 %v627, 1.0
    %v630 = vrcp.pop %v628
    %v631 = vmul.f32 1.0, %v630
    %v632 = vrcp.pop %v629
    %v633 = vmul.f32 1.0, %v632
    %v634 = vmul.f32 %v631, %v617
    %v635 = vadd.f32 %v354, %v634
    %v636 = vtanh.pop %v635
    %v637 = vsub.f32 1.0, %v633
    %v638 = vmul.f32 %v637, %v636
    %v639 = vmul.f32 %v633, 0.0
    %v640 = vadd.f32 %v638, %v639
    %v641 = vmax.f32 %v640, 0.0
    %v642 = vld [vmem:[#allocation8] sm:$0xff]
    %v643 = vld [vmem:[#allocation8 + $0x8] sm:$0xff]
    %v644 = vld [vmem:[#allocation8 + $0x10] sm:$0xff]
    %v645 = vld [vmem:[#allocation8 + $0x18] sm:$0xff]
    %v646 = vld [vmem:[#allocation8 + $0x20] sm:$0xff]
    %v647 = vld [vmem:[#allocation8 + $0x28] sm:$0xff]
    %v648 = vld [vmem:[#allocation8 + $0x30] sm:$0xff]
    %v649 = vld [vmem:[#allocation8 + $0x38] sm:$0xff]
    %v650 = vld [vmem:[#allocation8 + $0x40] sm:$0xff]
    %v651 = vld [vmem:[#allocation8 + $0x48] sm:$0xff]
    %v652 = vld [vmem:[#allocation8 + $0x50] sm:$0xff]
    %v653 = vld [vmem:[#allocation8 + $0x58] sm:$0xff]
    %v654 = vld [vmem:[#allocation8 + $0x60] sm:$0xff]
    %v655 = vld [vmem:[#allocation8 + $0x68] sm:$0xff]
    %v656 = vld [vmem:[#allocation8 + $0x70] sm:$0xff]
    %v657 = vld [vmem:[#allocation8 + $0x78] sm:$0xff]
    %v658 = vld [vmem:[#allocation8 + $0x80] sm:$0xff]
    %v659 = vld [vmem:[#allocation8 + $0x88] sm:$0xff]
    %v660 = vld [vmem:[#allocation8 + $0x90] sm:$0xff]
    %v661 = vld [vmem:[#allocation8 + $0x98] sm:$0xff]
    %v662 = vld [vmem:[#allocation8 + $0xa0] sm:$0xff]
    %v663 = vld [vmem:[#allocation8 + $0xa8] sm:$0xff]
    %v664 = vld [vmem:[#allocation8 + $0xb0] sm:$0xff]
    %v665 = vld [vmem:[#allocation8 + $0xb8] sm:$0xff]
    %v666 = vld [vmem:[#allocation8 + $0xc0] sm:$0xff]
    %v667 = vld [vmem:[#allocation8 + $0xc8] sm:$0xff]
    %v668 = vld [vmem:[#allocation8 + $0xd0] sm:$0xff]
    %v669 = vld [vmem:[#allocation8 + $0xd8] sm:$0xff]
    %v670 = vld [vmem:[#allocation8 + $0xe0] sm:$0xff]
    %v671 = vld [vmem:[#allocation8 + $0xe8] sm:$0xff]
    %v672 = vld [vmem:[#allocation8 + $0xf0] sm:$0xff]
    %v673 = vld [vmem:[#allocation8 + $0xf8] sm:$0xff]
    %v674 = vld [vmem:[#allocation8 + $0x100] sm:$0xff]
    %v675 = vld [vmem:[#allocation8 + $0x108] sm:$0xff]
    %v676 = vld [vmem:[#allocation8 + $0x110] sm:$0xff]
    %v677 = vld [vmem:[#allocation8 + $0x118] sm:$0xff]
    %v678 = vld [vmem:[#allocation8 + $0x120] sm:$0xff]
    %v679 = vld [vmem:[#allocation8 + $0x128] sm:$0xff]
    %v680 = vld [vmem:[#allocation8 + $0x130] sm:$0xff]
    %v681 = vld [vmem:[#allocation8 + $0x138] sm:$0xff]
    %v682 = vld [vmem:[#allocation8 + $0x140] sm:$0xff]
    %v683 = vld [vmem:[#allocation8 + $0x148] sm:$0xff]
    %v684 = vld [vmem:[#allocation8 + $0x150] sm:$0xff]
    %v685 = vld [vmem:[#allocation8 + $0x158] sm:$0xff]
    %v686 = vld [vmem:[#allocation8 + $0x160] sm:$0xff]
    %v687 = vld [vmem:[#allocation8 + $0x168] sm:$0xff]
    %v688 = vld [vmem:[#allocation8 + $0x170] sm:$0xff]
    %v689 = vld [vmem:[#allocation8 + $0x178] sm:$0xff]
    %v690 = vld [vmem:[#allocation8 + $0x180] sm:$0xff]
    %v691 = vld [vmem:[#allocation8 + $0x188] sm:$0xff]
    %v692 = vld [vmem:[#allocation8 + $0x190] sm:$0xff]
    %v693 = vld [vmem:[#allocation8 + $0x198] sm:$0xff]
    %v694 = vld [vmem:[#allocation8 + $0x1a0] sm:$0xff]
    %v695 = vld [vmem:[#allocation8 + $0x1a8] sm:$0xff]
    %v696 = vld [vmem:[#allocation8 + $0x1b0] sm:$0xff]
    %v697 = vld [vmem:[#allocation8 + $0x1b8] sm:$0xff]
    %v698 = vld [vmem:[#allocation8 + $0x1c0] sm:$0xff]
    %v699 = vld [vmem:[#allocation8 + $0x1c8] sm:$0xff]
    %v700 = vld [vmem:[#allocation8 + $0x1d0] sm:$0xff]
    %v701 = vld [vmem:[#allocation8 + $0x1d8] sm:$0xff]
    %v702 = vld [vmem:[#allocation8 + $0x1e0] sm:$0xff]
    %v703 = vld [vmem:[#allocation8 + $0x1e8] sm:$0xff]
    %v704 = vld [vmem:[#allocation8 + $0x1f0] sm:$0xff]
    %v705 = vld [vmem:[#allocation8 + $0x1f8] sm:$0xff]
    %v706 = vld [vmem:[#allocation8 + $0x200] sm:$0xff]
    %v707 = vld [vmem:[#allocation8 + $0x208] sm:$0xff]
    %v708 = vld [vmem:[#allocation8 + $0x210] sm:$0xff]
    %v709 = vld [vmem:[#allocation8 + $0x218] sm:$0xff]
    %v710 = vld [vmem:[#allocation8 + $0x220] sm:$0xff]
    %v711 = vld [vmem:[#allocation8 + $0x228] sm:$0xff]
    %v712 = vld [vmem:[#allocation8 + $0x230] sm:$0xff]
    %v713 = vld [vmem:[#allocation8 + $0x238] sm:$0xff]
    %v714 = vld [vmem:[#allocation8 + $0x240] sm:$0xff]
    %v715 = vld [vmem:[#allocation8 + $0x248] sm:$0xff]
    %v716 = vld [vmem:[#allocation8 + $0x250] sm:$0xff]
    %v717 = vld [vmem:[#allocation8 + $0x258] sm:$0xff]
    %v718 = vld [vmem:[#allocation8 + $0x260] sm:$0xff]
    %v719 = vld [vmem:[#allocation8 + $0x268] sm:$0xff]
    %v720 = vld [vmem:[#allocation8 + $0x270] sm:$0xff]
    %v721 = vld [vmem:[#allocation8 + $0x278] sm:$0xff]
    %v722 = vld [vmem:[#allocation8 + $0x280] sm:$0xff]
    %v723 = vld [vmem:[#allocation8 + $0x288] sm:$0xff]
    %v724 = vld [vmem:[#allocation8 + $0x290] sm:$0xff]
    %v725 = vld [vmem:[#allocation8 + $0x298] sm:$0xff]
    %v726 = vld [vmem:[#allocation8 + $0x2a0] sm:$0xff]
    %v727 = vld [vmem:[#allocation8 + $0x2a8] sm:$0xff]
    %v728 = vld [vmem:[#allocation8 + $0x2b0] sm:$0xff]
    %v729 = vld [vmem:[#allocation8 + $0x2b8] sm:$0xff]
    %v730 = vld [vmem:[#allocation8 + $0x2c0] sm:$0xff]
    %v731 = vld [vmem:[#allocation8 + $0x2c8] sm:$0xff]
    %v732 = vld [vmem:[#allocation8 + $0x2d0] sm:$0xff]
    %v733 = vld [vmem:[#allocation8 + $0x2d8] sm:$0xff]
    %v734 = vld [vmem:[#allocation8 + $0x2e0] sm:$0xff]
    %v735 = vld [vmem:[#allocation8 + $0x2e8] sm:$0xff]
    %v736 = vld [vmem:[#allocation8 + $0x2f0] sm:$0xff]
    %v737 = vld [vmem:[#allocation8 + $0x2f8] sm:$0xff]
    %v738 = vld [vmem:[#allocation8 + $0x300] sm:$0xff]
    %v739 = vld [vmem:[#allocation8 + $0x308] sm:$0xff]
    %v740 = vld [vmem:[#allocation8 + $0x310] sm:$0xff]
    %v741 = vld [vmem:[#allocation8 + $0x318] sm:$0xff]
    %v742 = vld [vmem:[#allocation8 + $0x320] sm:$0xff]
    %v743 = vld [vmem:[#allocation8 + $0x328] sm:$0xff]
    %v744 = vld [vmem:[#allocation8 + $0x330] sm:$0xff]
    %v745 = vld [vmem:[#allocation8 + $0x338] sm:$0xff]
    %v746 = vld [vmem:[#allocation8 + $0x340] sm:$0xff]
    %v747 = vld [vmem:[#allocation8 + $0x348] sm:$0xff]
    %v748 = vld [vmem:[#allocation8 + $0x350] sm:$0xff]
    %v749 = vld [vmem:[#allocation8 + $0x358] sm:$0xff]
    %v750 = vld [vmem:[#allocation8 + $0x360] sm:$0xff]
    %v751 = vld [vmem:[#allocation8 + $0x368] sm:$0xff]
    %v752 = vld [vmem:[#allocation8 + $0x370] sm:$0xff]
    %v753 = vld [vmem:[#allocation8 + $0x378] sm:$0xff]
    %v754 = vld [vmem:[#allocation8 + $0x380] sm:$0xff]
    %v755 = vld [vmem:[#allocation8 + $0x388] sm:$0xff]
    %v756 = vld [vmem:[#allocation8 + $0x390] sm:$0xff]
    %v757 = vld [vmem:[#allocation8 + $0x398] sm:$0xff]
    %v758 = vld [vmem:[#allocation8 + $0x3a0] sm:$0xff]
    %v759 = vld [vmem:[#allocation8 + $0x3a8] sm:$0xff]
    %v760 = vld [vmem:[#allocation8 + $0x3b0] sm:$0xff]
    %v761 = vld [vmem:[#allocation8 + $0x3b8] sm:$0xff]
    %v762 = vld [vmem:[#allocation8 + $0x3c0] sm:$0xff]
    %v763 = vld [vmem:[#allocation8 + $0x3c8] sm:$0xff]
    %v764 = vld [vmem:[#allocation8 + $0x3d0] sm:$0xff]
    %v765 = vld [vmem:[#allocation8 + $0x3d8] sm:$0xff]
    %v766 = vld [vmem:[#allocation8 + $0x3e0] sm:$0xff]
    %v767 = vld [vmem:[#allocation8 + $0x3e8] sm:$0xff]
    %v768 = vld [vmem:[#allocation8 + $0x3f0] sm:$0xff]
    %v769 = vld [vmem:[#allocation8 + $0x3f8] sm:$0xff]
    %770 = vmatprep.subr.mxu0 %v643
    %771 = vmatpush1.msra.mxu0 %v642
    %772 = vmatprep.subr.mxu0 %v647
    %773 = vmatpush1.msra.mxu0 %v646
    %774 = vmatprep.subr.mxu0 %v651
    %775 = vmatpush1.msra.mxu0 %v650
    %776 = vmatprep.subr.mxu0 %v655
    %777 = vmatpush1.msra.mxu0 %v654
    %778 = vmatprep.subr.mxu0 %v659
    %779 = vmatpush1.msra.mxu0 %v658
    %780 = vmatprep.subr.mxu0 %v663
    %781 = vmatpush1.msra.mxu0 %v662
    %782 = vmatprep.subr.mxu0 %v667
    %783 = vmatpush1.msra.mxu0 %v666
    %784 = vmatprep.subr.mxu0 %v671
    %785 = vmatpush1.msra.mxu0 %v670
    %786 = vmatprep.subr.mxu0 %v675
    %787 = vmatpush1.msra.mxu0 %v674
    %788 = vmatprep.subr.mxu0 %v679
    %789 = vmatpush1.msra.mxu0 %v678
    %790 = vmatprep.subr.mxu0 %v683
    %791 = vmatpush1.msra.mxu0 %v682
    %792 = vmatprep.subr.mxu0 %v687
    %793 = vmatpush1.msra.mxu0 %v686
    %794 = vmatprep.subr.mxu0 %v691
    %795 = vmatpush1.msra.mxu0 %v690
    %796 = vmatprep.subr.mxu0 %v695
    %797 = vmatpush1.msra.mxu0 %v694
    %798 = vmatprep.subr.mxu0 %v699
    %799 = vmatpush1.msra.mxu0 %v698
    %800 = vmatprep.subr.mxu0 %v703
    %801 = vmatpush1.msra.mxu0 %v702
    %802 = vmatprep.subr.mxu0 %v707
    %803 = vmatpush1.msra.mxu0 %v706
    %804 = vmatprep.subr.mxu0 %v711
    %805 = vmatpush1.msra.mxu0 %v710
    %806 = vmatprep.subr.mxu0 %v715
    %807 = vmatpush1.msra.mxu0 %v714
    %808 = vmatprep.subr.mxu0 %v719
    %809 = vmatpush1.msra.mxu0 %v718
    %810 = vmatprep.subr.mxu0 %v723
    %811 = vmatpush1.msra.mxu0 %v722
    %812 = vmatprep.subr.mxu0 %v727
    %813 = vmatpush1.msra.mxu0 %v726
    %814 = vmatprep.subr.mxu0 %v731
    %815 = vmatpush1.msra.mxu0 %v730
    %816 = vmatprep.subr.mxu0 %v735
    %817 = vmatpush1.msra.mxu0 %v734
    %818 = vmatprep.subr.mxu0 %v739
    %819 = vmatpush1.msra.mxu0 %v738
    %820 = vmatprep.subr.mxu0 %v743
    %821 = vmatpush1.msra.mxu0 %v742
    %822 = vmatprep.subr.mxu0 %v747
    %823 = vmatpush1.msra.mxu0 %v746
    %824 = vmatprep.subr.mxu0 %v751
    %825 = vmatpush1.msra.mxu0 %v750
    %826 = vmatprep.subr.mxu0 %v755
    %827 = vmatpush1.msra.mxu0 %v754
    %828 = vmatprep.subr.mxu0 %v759
    %829 = vmatpush1.msra.mxu0 %v758
    %830 = vmatprep.subr.mxu0 %v763
    %831 = vmatpush1.msra.mxu0 %v762
    %832 = vmatprep.subr.mxu0 %v767
    %833 = vmatpush1.msra.mxu0 %v766
    %834 = vmatprep.mubr.f32.mxu0 0.0
    %835 = vmatmul.mubr.f32.gmra.mrb[0].mxu0 %v641
    %v836 = vpop.f32.mrb[0].mxu0
    %v837 = vadd.f32 %v414, %v836
    %v838 = vpop.f32.mrb[0].mxu0
    %v839 = vadd.f32 %v418, %v838
    %840 = vdwg.mxu0
    %841 = vmatprep.subr.mxu0 %v645
    %842 = vmatpush1.msra.mxu0 %v644
    %843 = vmatprep.subr.mxu0 %v649
    %844 = vmatpush1.msra.mxu0 %v648
    %845 = vmatprep.subr.mxu0 %v653
    %846 = vmatpush1.msra.mxu0 %v652
    %847 = vmatprep.subr.mxu0 %v657
    %848 = vmatpush1.msra.mxu0 %v656
    %849 = vmatprep.subr.mxu0 %v661
    %850 = vmatpush1.msra.mxu0 %v660
    %851 = vmatprep.subr.mxu0 %v665
    %852 = vmatpush1.msra.mxu0 %v664
    %853 = vmatprep.subr.mxu0 %v669
    %854 = vmatpush1.msra.mxu0 %v668
    %855 = vmatprep.subr.mxu0 %v673
    %856 = vmatpush1.msra.mxu0 %v672
    %857 = vmatprep.subr.mxu0 %v677
    %858 = vmatpush1.msra.mxu0 %v676
    %859 = vmatprep.subr.mxu0 %v681
    %860 = vmatpush1.msra.mxu0 %v680
    %861 = vmatprep.subr.mxu0 %v685
    %862 = vmatpush1.msra.mxu0 %v684
    %863 = vmatprep.subr.mxu0 %v689
    %864 = vmatpush1.msra.mxu0 %v688
    %865 = vmatprep.subr.mxu0 %v693
    %866 = vmatpush1.msra.mxu0 %v692
    %867 = vmatprep.subr.mxu0 %v697
    %868 = vmatpush1.msra.mxu0 %v696
    %869 = vmatprep.subr.mxu0 %v701
    %870 = vmatpush1.msra.mxu0 %v700
    %871 = vmatprep.subr.mxu0 %v705
    %872 = vmatpush1.msra.mxu0 %v704
    %873 = vmatprep.subr.mxu0 %v709
    %874 = vmatpush1.msra.mxu0 %v708
    %875 = vmatprep.subr.mxu0 %v713
    %876 = vmatpush1.msra.mxu0 %v712
    %877 = vmatprep.subr.mxu0 %v717
    %878 = vmatpush1.msra.mxu0 %v716
    %879 = vmatprep.subr.mxu0 %v721
    %880 = vmatpush1.msra.mxu0 %v720
    %881 = vmatprep.subr.mxu0 %v725
    %882 = vmatpush1.msra.mxu0 %v724
    %883 = vmatprep.subr.mxu0 %v729
    %884 = vmatpush1.msra.mxu0 %v728
    %885 = vmatprep.subr.mxu0 %v733
    %886 = vmatpush1.msra.mxu0 %v732
    %887 = vmatprep.subr.mxu0 %v737
    %888 = vmatpush1.msra.mxu0 %v736
    %889 = vmatprep.subr.mxu0 %v741
    %890 = vmatpush1.msra.mxu0 %v740
    %891 = vmatprep.subr.mxu0 %v745
    %892 = vmatpush1.msra.mxu0 %v744
    %893 = vmatprep.subr.mxu0 %v749
    %894 = vmatpush1.msra.mxu0 %v748
    %895 = vmatprep.subr.mxu0 %v753
    %896 = vmatpush1.msra.mxu0 %v752
    %897 = vmatprep.subr.mxu0 %v757
    %898 = vmatpush1.msra.mxu0 %v756
    %899 = vmatprep.subr.mxu0 %v761
    %900 = vmatpush1.msra.mxu0 %v760
    %901 = vmatprep.subr.mxu0 %v765
    %902 = vmatpush1.msra.mxu0 %v764
    %903 = vmatprep.subr.mxu0 %v769
    %904 = vmatpush1.msra.mxu0 %v768
    %905 = vmatprep.mubr.f32.mxu0 0.0
    %906 = vmatmul.mubr.f32.gmra.mrb[0].mxu0 %v641
    %v907 = vpop.f32.mrb[0].mxu0
    %v908 = vadd.f32 %v422, %v907
    %v909 = vpop.f32.mrb[0].mxu0
    %v910 = vadd.f32 %v426, %v909
    %911 = vdwg.mxu0
    %v912 = vxor.u32 %v837, 2147483648
    %v913 = vxor.u32 %v839, 2147483648
    %v914 = vmul.f32 %v912, 1.442695
    %v915 = vpow.pop %v914
    %v916 = vmul.f32 %v913, 1.442695
    %v917 = vpow.pop %v916
    %v918 = vadd.f32 %v915, 1.0
    %v919 = vadd.f32 %v917, 1.0
    %v920 = vrcp.pop %v918
    %v921 = vmul.f32 1.0, %v920
    %v922 = vrcp.pop %v919
    %v923 = vmul.f32 1.0, %v922
    %v924 = vmul.f32 %v921, %v910
    %v925 = vadd.f32 %v908, %v924
    %v926 = vtanh.pop %v925
    %v927 = vsub.f32 1.0, %v923
    %v928 = vmul.f32 %v927, %v926
    %v929 = vmul.f32 %v923, 0.0
    %v930 = vadd.f32 %v928, %v929
    %v931 = vmax.f32 %v930, 0.0
    %932 = vmatprep.subr.mxu0 %v432
    %933 = vmatpush1.msra.mxu0 %v431
    %934 = vmatprep.subr.mxu0 %v435
    %935 = vmatpush1.msra.mxu0 %v434
    %936 = vmatprep.subr.mxu0 %v438
    %937 = vmatpush1.msra.mxu0 %v437
    %938 = vmatprep.subr.mxu0 %v441
    %939 = vmatpush1.msra.mxu0 %v440
    %940 = vmatprep.subr.mxu0 %v444
    %941 = vmatpush1.msra.mxu0 %v443
    %942 = vmatprep.subr.mxu0 %v447
    %943 = vmatpush1.msra.mxu0 %v446
    %944 = vmatprep.subr.mxu0 %v450
    %945 = vmatpush1.msra.mxu0 %v449
    %946 = vmatprep.subr.mxu0 %v453
    %947 = vmatpush1.msra.mxu0 %v452
    %948 = vmatprep.subr.mxu0 %v456
    %949 = vmatpush1.msra.mxu0 %v455
    %950 = vmatprep.subr.mxu0 %v459
    %951 = vmatpush1.msra.mxu0 %v458
    %952 = vmatprep.subr.mxu0 %v462
    %953 = vmatpush1.msra.mxu0 %v461
    %954 = vmatprep.subr.mxu0 %v465
    %955 = vmatpush1.msra.mxu0 %v464
    %956 = vmatprep.subr.mxu0 %v468
    %957 = vmatpush1.msra.mxu0 %v467
    %958 = vmatprep.subr.mxu0 %v471
    %959 = vmatpush1.msra.mxu0 %v470
    %960 = vmatprep.subr.mxu0 %v474
    %961 = vmatpush1.msra.mxu0 %v473
    %962 = vmatprep.subr.mxu0 %v477
    %963 = vmatpush1.msra.mxu0 %v476
    %964 = vmatprep.subr.mxu0 0.0
    %965 = vmatpush1.msra.mxu0 0.0
    %966 = vmatprep.subr.mxu0 0.0
    %967 = vmatpush1.msra.mxu0 0.0
    %968 = vmatprep.subr.mxu0 0.0
    %969 = vmatpush1.msra.mxu0 0.0
    %970 = vmatprep.subr.mxu0 0.0
    %971 = vmatpush1.msra.mxu0 0.0
    %972 = vmatprep.subr.mxu0 0.0
    %973 = vmatpush1.msra.mxu0 0.0
    %974 = vmatprep.subr.mxu0 0.0
    %975 = vmatpush1.msra.mxu0 0.0
    %976 = vmatprep.subr.mxu0 0.0
    %977 = vmatpush1.msra.mxu0 0.0
    %978 = vmatprep.subr.mxu0 0.0
    %979 = vmatpush1.msra.mxu0 0.0
    %980 = vmatprep.subr.mxu0 0.0
    %981 = vmatpush1.msra.mxu0 0.0
    %982 = vmatprep.subr.mxu0 0.0
    %983 = vmatpush1.msra.mxu0 0.0
    %984 = vmatprep.subr.mxu0 0.0
    %985 = vmatpush1.msra.mxu0 0.0
    %986 = vmatprep.subr.mxu0 0.0
    %987 = vmatpush1.msra.mxu0 0.0
    %988 = vmatprep.subr.mxu0 0.0
    %989 = vmatpush1.msra.mxu0 0.0
    %990 = vmatprep.subr.mxu0 0.0
    %991 = vmatpush1.msra.mxu0 0.0
    %992 = vmatprep.subr.mxu0 0.0
    %993 = vmatpush1.msra.mxu0 0.0
    %994 = vmatprep.subr.mxu0 0.0
    %995 = vmatpush1.msra.mxu0 0.0
    %996 = vmatprep.mubr.f32.mxu0 0.0
    %997 = vmatmul.mubr.f32.gmra.mrb[0].mxu0 %v641
    %v998 = vpop.f32.mrb[0].mxu0
    %v999 = vadd.f32 %v397, %v998
    %v1000 = vpop.f32.mrb[0].mxu0
    %v1001 = vadd.f32 %v401, %v1000
    %1002 = vdwg.mxu0
    %1003 = vmatprep.subr.mxu0 0.0
    %1004 = vmatpush1.msra.mxu0 %v433
    %1005 = vmatprep.subr.mxu0 0.0
    %1006 = vmatpush1.msra.mxu0 %v436
    %1007 = vmatprep.subr.mxu0 0.0
    %1008 = vmatpush1.msra.mxu0 %v439
    %1009 = vmatprep.subr.mxu0 0.0
    %1010 = vmatpush1.msra.mxu0 %v442
    %1011 = vmatprep.subr.mxu0 0.0
    %1012 = vmatpush1.msra.mxu0 %v445
    %1013 = vmatprep.subr.mxu0 0.0
    %1014 = vmatpush1.msra.mxu0 %v448
    %1015 = vmatprep.subr.mxu0 0.0
    %1016 = vmatpush1.msra.mxu0 %v451
    %1017 = vmatprep.subr.mxu0 0.0
    %1018 = vmatpush1.msra.mxu0 %v454
    %1019 = vmatprep.subr.mxu0 0.0
    %1020 = vmatpush1.msra.mxu0 %v457
    %1021 = vmatprep.subr.mxu0 0.0
    %1022 = vmatpush1.msra.mxu0 %v460
    %1023 = vmatprep.subr.mxu0 0.0
    %1024 = vmatpush1.msra.mxu0 %v463
    %1025 = vmatprep.subr.mxu0 0.0
    %1026 = vmatpush1.msra.mxu0 %v466
    %1027 = vmatprep.subr.mxu0 0.0
    %1028 = vmatpush1.msra.mxu0 %v469
    %1029 = vmatprep.subr.mxu0 0.0
    %1030 = vmatpush1.msra.mxu0 %v472
    %1031 = vmatprep.subr.mxu0 0.0
    %1032 = vmatpush1.msra.mxu0 %v475
    %1033 = vmatprep.subr.mxu0 0.0
    %1034 = vmatpush1.msra.mxu0 %v478
    %1035 = vmatprep.subr.mxu0 0.0
    %1036 = vmatpush1.msra.mxu0 0.0
    %1037 = vmatprep.subr.mxu0 0.0
    %1038 = vmatpush1.msra.mxu0 0.0
    %1039 = vmatprep.subr.mxu0 0.0
    %1040 = vmatpush1.msra.mxu0 0.0
    %1041 = vmatprep.subr.mxu0 0.0
    %1042 = vmatpush1.msra.mxu0 0.0
    %1043 = vmatprep.subr.mxu0 0.0
    %1044 = vmatpush1.msra.mxu0 0.0
    %1045 = vmatprep.subr.mxu0 0.0
    %1046 = vmatpush1.msra.mxu0 0.0
    %1047 = vmatprep.subr.mxu0 0.0
    %1048 = vmatpush1.msra.mxu0 0.0
    %1049 = vmatprep.subr.mxu0 0.0
    %1050 = vmatpush1.msra.mxu0 0.0
    %1051 = vmatprep.subr.mxu0 0.0
    %1052 = vmatpush1.msra.mxu0 0.0
    %1053 = vmatprep.subr.mxu0 0.0
    %1054 = vmatpush1.msra.mxu0 0.0
    %1055 = vmatprep.subr.mxu0 0.0
    %1056 = vmatpush1.msra.mxu0 0.0
    %1057 = vmatprep.subr.mxu0 0.0
    %1058 = vmatpush1.msra.mxu0 0.0
    %1059 = vmatprep.subr.mxu0 0.0
    %1060 = vmatpush1.msra.mxu0 0.0
    %1061 = vmatprep.subr.mxu0 0.0
    %1062 = vmatpush1.msra.mxu0 0.0
    %1063 = vmatprep.subr.mxu0 0.0
    %1064 = vmatpush1.msra.mxu0 0.0
    %1065 = vmatprep.subr.mxu0 0.0
    %1066 = vmatpush1.msra.mxu0 0.0
    %1067 = vmatprep.mubr.f32.mxu0 0.0
    %1068 = vmatmul.mubr.f32.gmra.mrb[0].mxu0 %v641
    %v1069 = vpop.f32.mrb[0].mxu0
    %v1070 = vadd.f32 %v405, %v1069
    %v1071 = vpop.f32.mrb[0].mxu0
    %1072 = vdwg.mxu0
    %v1073 = vadd.f32 %v247, %v999
    %v1074 = vadd.f32 %v249, %v1001
    %v1075 = vxor.u32 %v1073, 2147483648
    %v1076 = vxor.u32 %v1074, 2147483648
    %v1077 = vmul.f32 %v1075, 1.442695
    %v1078 = vpow.pop %v1077
    %v1079 = vmul.f32 %v1076, 1.442695
    %v1080 = vpow.pop %v1079
    %v1081 = vadd.f32 %v1078, 1.0
    %v1082 = vadd.f32 %v1080, 1.0
    %v1083 = vrcp.pop %v1081
    %v1084 = vmul.f32 1.0, %v1083
    %v1085 = vrcp.pop %v1082
    %v1086 = vmul.f32 1.0, %v1085
    %v1087 = vmul.f32 %v1084, %v1070
    %v1088 = vadd.f32 %v359, %v1087
    %v1089 = vtanh.pop %v1088
    %v1090 = vsub.f32 1.0, %v1086
    %v1091 = vmul.f32 %v1090, %v1089
    %v1092 = vmul.f32 %v1086, %v641
    %v1093 = vadd.f32 %v1091, %v1092
    %v1094 = vmax.f32 %v1093, 0.0
    %1095 = vmatprep.subr.mxu0 %v643
    %1096 = vmatpush1.msra.mxu0 %v642
    %1097 = vmatprep.subr.mxu0 %v647
    %1098 = vmatpush1.msra.mxu0 %v646
    %1099 = vmatprep.subr.mxu0 %v651
    %1100 = vmatpush1.msra.mxu0 %v650
    %1101 = vmatprep.subr.mxu0 %v655
    %1102 = vmatpush1.msra.mxu0 %v654
    %1103 = vmatprep.subr.mxu0 %v659
    %1104 = vmatpush1.msra.mxu0 %v658
    %1105 = vmatprep.subr.mxu0 %v663
    %1106 = vmatpush1.msra.mxu0 %v662
    %1107 = vmatprep.subr.mxu0 %v667
    %1108 = vmatpush1.msra.mxu0 %v666
    %1109 = vmatprep.subr.mxu0 %v671
    %1110 = vmatpush1.msra.mxu0 %v670
    %1111 = vmatprep.subr.mxu0 %v675
    %1112 = vmatpush1.msra.mxu0 %v674
    %1113 = vmatprep.subr.mxu0 %v679
    %1114 = vmatpush1.msra.mxu0 %v678
    %1115 = vmatprep.subr.mxu0 %v683
    %1116 = vmatpush1.msra.mxu0 %v682
    %1117 = vmatprep.subr.mxu0 %v687
    %1118 = vmatpush1.msra.mxu0 %v686
    %1119 = vmatprep.subr.mxu0 %v691
    %1120 = vmatpush1.msra.mxu0 %v690
    %1121 = vmatprep.subr.mxu0 %v695
    %1122 = vmatpush1.msra.mxu0 %v694
    %1123 = vmatprep.subr.mxu0 %v699
    %1124 = vmatpush1.msra.mxu0 %v698
    %1125 = vmatprep.subr.mxu0 %v703
    %1126 = vmatpush1.msra.mxu0 %v702
    %1127 = vmatprep.subr.mxu0 %v707
    %1128 = vmatpush1.msra.mxu0 %v706
    %1129 = vmatprep.subr.mxu0 %v711
    %1130 = vmatpush1.msra.mxu0 %v710
    %1131 = vmatprep.subr.mxu0 %v715
    %1132 = vmatpush1.msra.mxu0 %v714
    %1133 = vmatprep.subr.mxu0 %v719
    %1134 = vmatpush1.msra.mxu0 %v718
    %1135 = vmatprep.subr.mxu0 %v723
    %1136 = vmatpush1.msra.mxu0 %v722
    %1137 = vmatprep.subr.mxu0 %v727
    %1138 = vmatpush1.msra.mxu0 %v726
    %1139 = vmatprep.subr.mxu0 %v731
    %1140 = vmatpush1.msra.mxu0 %v730
    %1141 = vmatprep.subr.mxu0 %v735
    %1142 = vmatpush1.msra.mxu0 %v734
    %1143 = vmatprep.subr.mxu0 %v739
    %1144 = vmatpush1.msra.mxu0 %v738
    %1145 = vmatprep.subr.mxu0 %v743
    %1146 = vmatpush1.msra.mxu0 %v742
    %1147 = vmatprep.subr.mxu0 %v747
    %1148 = vmatpush1.msra.mxu0 %v746
    %1149 = vmatprep.subr.mxu0 %v751
    %1150 = vmatpush1.msra.mxu0 %v750
    %1151 = vmatprep.subr.mxu0 %v755
    %1152 = vmatpush1.msra.mxu0 %v754
    %1153 = vmatprep.subr.mxu0 %v759
    %1154 = vmatpush1.msra.mxu0 %v758
    %1155 = vmatprep.subr.mxu0 %v763
    %1156 = vmatpush1.msra.mxu0 %v762
    %1157 = vmatprep.subr.mxu0 %v767
    %1158 = vmatpush1.msra.mxu0 %v766
    %1159 = vmatprep.mubr.f32.mxu0 %v931
    %1160 = vmatmul.mubr.f32.gmra.mrb[0].mxu0 %v1094
    %v1161 = vpop.f32.mrb[0].mxu0
    %v1162 = vadd.f32 %v414, %v1161
    %v1163 = vpop.f32.mrb[0].mxu0
    %v1164 = vadd.f32 %v418, %v1163
    %1165 = vdwg.mxu0
    %1166 = vmatprep.subr.mxu0 %v645
    %1167 = vmatpush1.msra.mxu0 %v644
    %1168 = vmatprep.subr.mxu0 %v649
    %1169 = vmatpush1.msra.mxu0 %v648
    %1170 = vmatprep.subr.mxu0 %v653
    %1171 = vmatpush1.msra.mxu0 %v652
    %1172 = vmatprep.subr.mxu0 %v657
    %1173 = vmatpush1.msra.mxu0 %v656
    %1174 = vmatprep.subr.mxu0 %v661
    %1175 = vmatpush1.msra.mxu0 %v660
    %1176 = vmatprep.subr.mxu0 %v665
    %1177 = vmatpush1.msra.mxu0 %v664
    %1178 = vmatprep.subr.mxu0 %v669
    %1179 = vmatpush1.msra.mxu0 %v668
    %1180 = vmatprep.subr.mxu0 %v673
    %1181 = vmatpush1.msra.mxu0 %v672
    %1182 = vmatprep.subr.mxu0 %v677
    %1183 = vmatpush1.msra.mxu0 %v676
    %1184 = vmatprep.subr.mxu0 %v681
    %1185 = vmatpush1.msra.mxu0 %v680
    %1186 = vmatprep.subr.mxu0 %v685
    %1187 = vmatpush1.msra.mxu0 %v684
    %1188 = vmatprep.subr.mxu0 %v689
    %1189 = vmatpush1.msra.mxu0 %v688
    %1190 = vmatprep.subr.mxu0 %v693
    %1191 = vmatpush1.msra.mxu0 %v692
    %1192 = vmatprep.subr.mxu0 %v697
    %1193 = vmatpush1.msra.mxu0 %v696
    %1194 = vmatprep.subr.mxu0 %v701
    %1195 = vmatpush1.msra.mxu0 %v700
    %1196 = vmatprep.subr.mxu0 %v705
    %1197 = vmatpush1.msra.mxu0 %v704
    %1198 = vmatprep.subr.mxu0 %v709
    %1199 = vmatpush1.msra.mxu0 %v708
    %1200 = vmatprep.subr.mxu0 %v713
    %1201 = vmatpush1.msra.mxu0 %v712
    %1202 = vmatprep.subr.mxu0 %v717
    %1203 = vmatpush1.msra.mxu0 %v716
    %1204 = vmatprep.subr.mxu0 %v721
    %1205 = vmatpush1.msra.mxu0 %v720
    %1206 = vmatprep.subr.mxu0 %v725
    %1207 = vmatpush1.msra.mxu0 %v724
    %1208 = vmatprep.subr.mxu0 %v729
    %1209 = vmatpush1.msra.mxu0 %v728
    %1210 = vmatprep.subr.mxu0 %v733
    %1211 = vmatpush1.msra.mxu0 %v732
    %1212 = vmatprep.subr.mxu0 %v737
    %1213 = vmatpush1.msra.mxu0 %v736
    %1214 = vmatprep.subr.mxu0 %v741
    %1215 = vmatpush1.msra.mxu0 %v740
    %1216 = vmatprep.subr.mxu0 %v745
    %1217 = vmatpush1.msra.mxu0 %v744
    %1218 = vmatprep.subr.mxu0 %v749
    %1219 = vmatpush1.msra.mxu0 %v748
    %1220 = vmatprep.subr.mxu0 %v753
    %1221 = vmatpush1.msra.mxu0 %v752
    %1222 = vmatprep.subr.mxu0 %v757
    %1223 = vmatpush1.msra.mxu0 %v756
    %1224 = vmatprep.subr.mxu0 %v761
    %1225 = vmatpush1.msra.mxu0 %v760
    %1226 = vmatprep.subr.mxu0 %v765
    %1227 = vmatpush1.msra.mxu0 %v764
    %1228 = vmatprep.subr.mxu0 %v769
    %1229 = vmatpush1.msra.mxu0 %v768
    %1230 = vmatprep.mubr.f32.mxu0 %v931
    %1231 = vmatmul.mubr.f32.gmra.mrb[0].mxu0 %v1094
    %v1232 = vpop.f32.mrb[0].mxu0
    %v1233 = vadd.f32 %v422, %v1232
    %v1234 = vpop.f32.mrb[0].mxu0
    %v1235 = vadd.f32 %v426, %v1234
    %1236 = vdwg.mxu0
    %v1237 = vxor.u32 %v1162, 2147483648
    %v1238 = vxor.u32 %v1164, 2147483648
    %v1239 = vmul.f32 %v1237, 1.442695
    %v1240 = vpow.pop %v1239
    %v1241 = vmul.f32 %v1238, 1.442695
    %v1242 = vpow.pop %v1241
    %v1243 = vadd.f32 %v1240, 1.0
    %v1244 = vadd.f32 %v1242, 1.0
    %v1245 = vrcp.pop %v1243
    %v1246 = vmul.f32 1.0, %v1245
    %v1247 = vrcp.pop %v1244
    %v1248 = vmul.f32 1.0, %v1247
    %v1249 = vmul.f32 %v1246, %v1235
    %v1250 = vadd.f32 %v1233, %v1249
    %v1251 = vtanh.pop %v1250
    %v1252 = vsub.f32 1.0, %v1248
    %v1253 = vmul.f32 %v1252, %v1251
    %v1254 = vmul.f32 %v1248, %v931
    %v1255 = vadd.f32 %v1253, %v1254
    %v1256 = vmax.f32 %v1255, 0.0
    %1257 = vmatprep.subr.mxu0 %v432
    %1258 = vmatpush1.msra.mxu0 %v431
    %1259 = vmatprep.subr.mxu0 %v435
    %1260 = vmatpush1.msra.mxu0 %v434
    %1261 = vmatprep.subr.mxu0 %v438
    %1262 = vmatpush1.msra.mxu0 %v437
    %1263 = vmatprep.subr.mxu0 %v441
    %1264 = vmatpush1.msra.mxu0 %v440
    %1265 = vmatprep.subr.mxu0 %v444
    %1266 = vmatpush1.msra.mxu0 %v443
    %1267 = vmatprep.subr.mxu0 %v447
    %1268 = vmatpush1.msra.mxu0 %v446
    %1269 = vmatprep.subr.mxu0 %v450
    %1270 = vmatpush1.msra.mxu0 %v449
    %1271 = vmatprep.subr.mxu0 %v453
    %1272 = vmatpush1.msra.mxu0 %v452
    %1273 = vmatprep.subr.mxu0 %v456
    %1274 = vmatpush1.msra.mxu0 %v455
    %1275 = vmatprep.subr.mxu0 %v459
    %1276 = vmatpush1.msra.mxu0 %v458
    %1277 = vmatprep.subr.mxu0 %v462
    %1278 = vmatpush1.msra.mxu0 %v461
    %1279 = vmatprep.subr.mxu0 %v465
    %1280 = vmatpush1.msra.mxu0 %v464
    %1281 = vmatprep.subr.mxu0 %v468
    %1282 = vmatpush1.msra.mxu0 %v467
    %1283 = vmatprep.subr.mxu0 %v471
    %1284 = vmatpush1.msra.mxu0 %v470
    %1285 = vmatprep.subr.mxu0 %v474
    %1286 = vmatpush1.msra.mxu0 %v473
    %1287 = vmatprep.subr.mxu0 %v477
    %1288 = vmatpush1.msra.mxu0 %v476
    %1289 = vmatprep.subr.mxu0 0.0
    %1290 = vmatpush1.msra.mxu0 0.0
    %1291 = vmatprep.subr.mxu0 0.0
    %1292 = vmatpush1.msra.mxu0 0.0
    %1293 = vmatprep.subr.mxu0 0.0
    %1294 = vmatpush1.msra.mxu0 0.0
    %1295 = vmatprep.subr.mxu0 0.0
    %1296 = vmatpush1.msra.mxu0 0.0
    %1297 = vmatprep.subr.mxu0 0.0
    %1298 = vmatpush1.msra.mxu0 0.0
    %1299 = vmatprep.subr.mxu0 0.0
    %1300 = vmatpush1.msra.mxu0 0.0
    %1301 = vmatprep.subr.mxu0 0.0
    %1302 = vmatpush1.msra.mxu0 0.0
    %1303 = vmatprep.subr.mxu0 0.0
    %1304 = vmatpush1.msra.mxu0 0.0
    %1305 = vmatprep.subr.mxu0 0.0
    %1306 = vmatpush1.msra.mxu0 0.0
    %1307 = vmatprep.subr.mxu0 0.0
    %1308 = vmatpush1.msra.mxu0 0.0
    %1309 = vmatprep.subr.mxu0 0.0
    %1310 = vmatpush1.msra.mxu0 0.0
    %1311 = vmatprep.subr.mxu0 0.0
    %1312 = vmatpush1.msra.mxu0 0.0
    %1313 = vmatprep.subr.mxu0 0.0
    %1314 = vmatpush1.msra.mxu0 0.0
    %1315 = vmatprep.subr.mxu0 0.0
    %1316 = vmatpush1.msra.mxu0 0.0
    %1317 = vmatprep.subr.mxu0 0.0
    %1318 = vmatpush1.msra.mxu0 0.0
    %1319 = vmatprep.subr.mxu0 0.0
    %1320 = vmatpush1.msra.mxu0 0.0
    %1321 = vmatprep.mubr.f32.mxu0 0.0
    %1322 = vmatmul.mubr.f32.gmra.mrb[0].mxu0 %v1094
    %v1323 = vpop.f32.mrb[0].mxu0
    %v1324 = vadd.f32 %v397, %v1323
    %v1325 = vpop.f32.mrb[0].mxu0
    %v1326 = vadd.f32 %v401, %v1325
    %1327 = vdwg.mxu0
    %1328 = vmatprep.subr.mxu0 0.0
    %1329 = vmatpush1.msra.mxu0 %v433
    %1330 = vmatprep.subr.mxu0 0.0
    %1331 = vmatpush1.msra.mxu0 %v436
    %1332 = vmatprep.subr.mxu0 0.0
    %1333 = vmatpush1.msra.mxu0 %v439
    %1334 = vmatprep.subr.mxu0 0.0
    %1335 = vmatpush1.msra.mxu0 %v442
    %1336 = vmatprep.subr.mxu0 0.0
    %1337 = vmatpush1.msra.mxu0 %v445
    %1338 = vmatprep.subr.mxu0 0.0
    %1339 = vmatpush1.msra.mxu0 %v448
    %1340 = vmatprep.subr.mxu0 0.0
    %1341 = vmatpush1.msra.mxu0 %v451
    %1342 = vmatprep.subr.mxu0 0.0
    %1343 = vmatpush1.msra.mxu0 %v454
    %1344 = vmatprep.subr.mxu0 0.0
    %1345 = vmatpush1.msra.mxu0 %v457
    %1346 = vmatprep.subr.mxu0 0.0
    %1347 = vmatpush1.msra.mxu0 %v460
    %1348 = vmatprep.subr.mxu0 0.0
    %1349 = vmatpush1.msra.mxu0 %v463
    %1350 = vmatprep.subr.mxu0 0.0
    %1351 = vmatpush1.msra.mxu0 %v466
    %1352 = vmatprep.subr.mxu0 0.0
    %1353 = vmatpush1.msra.mxu0 %v469
    %1354 = vmatprep.subr.mxu0 0.0
    %1355 = vmatpush1.msra.mxu0 %v472
    %1356 = vmatprep.subr.mxu0 0.0
    %1357 = vmatpush1.msra.mxu0 %v475
    %1358 = vmatprep.subr.mxu0 0.0
    %1359 = vmatpush1.msra.mxu0 %v478
    %1360 = vmatprep.subr.mxu0 0.0
    %1361 = vmatpush1.msra.mxu0 0.0
    %1362 = vmatprep.subr.mxu0 0.0
    %1363 = vmatpush1.msra.mxu0 0.0
    %1364 = vmatprep.subr.mxu0 0.0
    %1365 = vmatpush1.msra.mxu0 0.0
    %1366 = vmatprep.subr.mxu0 0.0
    %1367 = vmatpush1.msra.mxu0 0.0
    %1368 = vmatprep.subr.mxu0 0.0
    %1369 = vmatpush1.msra.mxu0 0.0
    %1370 = vmatprep.subr.mxu0 0.0
    %1371 = vmatpush1.msra.mxu0 0.0
    %1372 = vmatprep.subr.mxu0 0.0
    %1373 = vmatpush1.msra.mxu0 0.0
    %1374 = vmatprep.subr.mxu0 0.0
    %1375 = vmatpush1.msra.mxu0 0.0
    %1376 = vmatprep.subr.mxu0 0.0
    %1377 = vmatpush1.msra.mxu0 0.0
    %1378 = vmatprep.subr.mxu0 0.0
    %1379 = vmatpush1.msra.mxu0 0.0
    %1380 = vmatprep.subr.mxu0 0.0
    %1381 = vmatpush1.msra.mxu0 0.0
    %1382 = vmatprep.subr.mxu0 0.0
    %1383 = vmatpush1.msra.mxu0 0.0
    %1384 = vmatprep.subr.mxu0 0.0
    %1385 = vmatpush1.msra.mxu0 0.0
    %1386 = vmatprep.subr.mxu0 0.0
    %1387 = vmatpush1.msra.mxu0 0.0
    %1388 = vmatprep.subr.mxu0 0.0
    %1389 = vmatpush1.msra.mxu0 0.0
    %1390 = vmatprep.subr.mxu0 0.0
    %1391 = vmatpush1.msra.mxu0 0.0
    %1392 = vmatprep.mubr.f32.mxu0 0.0
    %1393 = vmatmul.mubr.f32.gmra.mrb[0].mxu0 %v1094
    %v1394 = vpop.f32.mrb[0].mxu0
    %v1395 = vadd.f32 %v405, %v1394
    %v1396 = vpop.f32.mrb[0].mxu0
    %1397 = vdwg.mxu0
    %v1398 = vadd.f32 %v253, %v1324
    %v1399 = vadd.f32 %v255, %v1326
    %v1400 = vxor.u32 %v1398, 2147483648
    %v1401 = vxor.u32 %v1399, 2147483648
    %v1402 = vmul.f32 %v1400, 1.442695
    %v1403 = vpow.pop %v1402
    %v1404 = vmul.f32 %v1401, 1.442695
    %v1405 = vpow.pop %v1404
    %v1406 = vadd.f32 %v1403, 1.0
    %v1407 = vadd.f32 %v1405, 1.0
    %v1408 = vrcp.pop %v1406
    %v1409 = vmul.f32 1.0, %v1408
    %v1410 = vrcp.pop %v1407
    %v1411 = vmul.f32 1.0, %v1410
    %v1412 = vmul.f32 %v1409, %v1395
    %v1413 = vadd.f32 %v364, %v1412
    %v1414 = vtanh.pop %v1413
    %v1415 = vsub.f32 1.0, %v1411
    %v1416 = vmul.f32 %v1415, %v1414
    %v1417 = vmul.f32 %v1411, %v1094
    %v1418 = vadd.f32 %v1416, %v1417
    %v1419 = vmax.f32 %v1418, 0.0
    %1420 = vmatprep.subr.mxu0 %v643
    %1421 = vmatpush1.msra.mxu0 %v642
    %1422 = vmatprep.subr.mxu0 %v647
    %1423 = vmatpush1.msra.mxu0 %v646
    %1424 = vmatprep.subr.mxu0 %v651
    %1425 = vmatpush1.msra.mxu0 %v650
    %1426 = vmatprep.subr.mxu0 %v655
    %1427 = vmatpush1.msra.mxu0 %v654
    %1428 = vmatprep.subr.mxu0 %v659
    %1429 = vmatpush1.msra.mxu0 %v658
    %1430 = vmatprep.subr.mxu0 %v663
    %1431 = vmatpush1.msra.mxu0 %v662
    %1432 = vmatprep.subr.mxu0 %v667
    %1433 = vmatpush1.msra.mxu0 %v666
    %1434 = vmatprep.subr.mxu0 %v671
    %1435 = vmatpush1.msra.mxu0 %v670
    %1436 = vmatprep.subr.mxu0 %v675
    %1437 = vmatpush1.msra.mxu0 %v674
    %1438 = vmatprep.subr.mxu0 %v679
    %1439 = vmatpush1.msra.mxu0 %v678
    %1440 = vmatprep.subr.mxu0 %v683
    %1441 = vmatpush1.msra.mxu0 %v682
    %1442 = vmatprep.subr.mxu0 %v687
    %1443 = vmatpush1.msra.mxu0 %v686
    %1444 = vmatprep.subr.mxu0 %v691
    %1445 = vmatpush1.msra.mxu0 %v690
    %1446 = vmatprep.subr.mxu0 %v695
    %1447 = vmatpush1.msra.mxu0 %v694
    %1448 = vmatprep.subr.mxu0 %v699
    %1449 = vmatpush1.msra.mxu0 %v698
    %1450 = vmatprep.subr.mxu0 %v703
    %1451 = vmatpush1.msra.mxu0 %v702
    %1452 = vmatprep.subr.mxu0 %v707
    %1453 = vmatpush1.msra.mxu0 %v706
    %1454 = vmatprep.subr.mxu0 %v711
    %1455 = vmatpush1.msra.mxu0 %v710
    %1456 = vmatprep.subr.mxu0 %v715
    %1457 = vmatpush1.msra.mxu0 %v714
    %1458 = vmatprep.subr.mxu0 %v719
    %1459 = vmatpush1.msra.mxu0 %v718
    %1460 = vmatprep.subr.mxu0 %v723
    %1461 = vmatpush1.msra.mxu0 %v722
    %1462 = vmatprep.subr.mxu0 %v727
    %1463 = vmatpush1.msra.mxu0 %v726
    %1464 = vmatprep.subr.mxu0 %v731
    %1465 = vmatpush1.msra.mxu0 %v730
    %1466 = vmatprep.subr.mxu0 %v735
    %1467 = vmatpush1.msra.mxu0 %v734
    %1468 = vmatprep.subr.mxu0 %v739
    %1469 = vmatpush1.msra.mxu0 %v738
    %1470 = vmatprep.subr.mxu0 %v743
    %1471 = vmatpush1.msra.mxu0 %v742
    %1472 = vmatprep.subr.mxu0 %v747
    %1473 = vmatpush1.msra.mxu0 %v746
    %1474 = vmatprep.subr.mxu0 %v751
    %1475 = vmatpush1.msra.mxu0 %v750
    %1476 = vmatprep.subr.mxu0 %v755
    %1477 = vmatpush1.msra.mxu0 %v754
    %1478 = vmatprep.subr.mxu0 %v759
    %1479 = vmatpush1.msra.mxu0 %v758
    %1480 = vmatprep.subr.mxu0 %v763
    %1481 = vmatpush1.msra.mxu0 %v762
    %1482 = vmatprep.subr.mxu0 %v767
    %1483 = vmatpush1.msra.mxu0 %v766
    %1484 = vmatprep.mubr.f32.mxu0 %v1256
    %1485 = vmatmul.mubr.f32.gmra.mrb[0].mxu0 %v1419
    %v1486 = vpop.f32.mrb[0].mxu0
    %v1487 = vadd.f32 %v414, %v1486
    %v1488 = vpop.f32.mrb[0].mxu0
    %v1489 = vadd.f32 %v418, %v1488
    %1490 = vdwg.mxu0
    %1491 = vmatprep.subr.mxu0 %v645
    %1492 = vmatpush1.msra.mxu0 %v644
    %1493 = vmatprep.subr.mxu0 %v649
    %1494 = vmatpush1.msra.mxu0 %v648
    %1495 = vmatprep.subr.mxu0 %v653
    %1496 = vmatpush1.msra.mxu0 %v652
    %1497 = vmatprep.subr.mxu0 %v657
    %1498 = vmatpush1.msra.mxu0 %v656
    %1499 = vmatprep.subr.mxu0 %v661
    %1500 = vmatpush1.msra.mxu0 %v660
    %1501 = vmatprep.subr.mxu0 %v665
    %1502 = vmatpush1.msra.mxu0 %v664
    %1503 = vmatprep.subr.mxu0 %v669
    %1504 = vmatpush1.msra.mxu0 %v668
    %1505 = vmatprep.subr.mxu0 %v673
    %1506 = vmatpush1.msra.mxu0 %v672
    %1507 = vmatprep.subr.mxu0 %v677
    %1508 = vmatpush1.msra.mxu0 %v676
    %1509 = vmatprep.subr.mxu0 %v681
    %1510 = vmatpush1.msra.mxu0 %v680
    %1511 = vmatprep.subr.mxu0 %v685
    %1512 = vmatpush1.msra.mxu0 %v684
    %1513 = vmatprep.subr.mxu0 %v689
    %1514 = vmatpush1.msra.mxu0 %v688
    %1515 = vmatprep.subr.mxu0 %v693
    %1516 = vmatpush1.msra.mxu0 %v692
    %1517 = vmatprep.subr.mxu0 %v697
    %1518 = vmatpush1.msra.mxu0 %v696
    %1519 = vmatprep.subr.mxu0 %v701
    %1520 = vmatpush1.msra.mxu0 %v700
    %1521 = vmatprep.subr.mxu0 %v705
    %1522 = vmatpush1.msra.mxu0 %v704
    %1523 = vmatprep.subr.mxu0 %v709
    %1524 = vmatpush1.msra.mxu0 %v708
    %1525 = vmatprep.subr.mxu0 %v713
    %1526 = vmatpush1.msra.mxu0 %v712
    %1527 = vmatprep.subr.mxu0 %v717
    %1528 = vmatpush1.msra.mxu0 %v716
    %1529 = vmatprep.subr.mxu0 %v721
    %1530 = vmatpush1.msra.mxu0 %v720
    %1531 = vmatprep.subr.mxu0 %v725
    %1532 = vmatpush1.msra.mxu0 %v724
    %1533 = vmatprep.subr.mxu0 %v729
    %1534 = vmatpush1.msra.mxu0 %v728
    %1535 = vmatprep.subr.mxu0 %v733
    %1536 = vmatpush1.msra.mxu0 %v732
    %1537 = vmatprep.subr.mxu0 %v737
    %1538 = vmatpush1.msra.mxu0 %v736
    %1539 = vmatprep.subr.mxu0 %v741
    %1540 = vmatpush1.msra.mxu0 %v740
    %1541 = vmatprep.subr.mxu0 %v745
    %1542 = vmatpush1.msra.mxu0 %v744
    %1543 = vmatprep.subr.mxu0 %v749
    %1544 = vmatpush1.msra.mxu0 %v748
    %1545 = vmatprep.subr.mxu0 %v753
    %1546 = vmatpush1.msra.mxu0 %v752
    %1547 = vmatprep.subr.mxu0 %v757
    %1548 = vmatpush1.msra.mxu0 %v756
    %1549 = vmatprep.subr.mxu0 %v761
    %1550 = vmatpush1.msra.mxu0 %v760
    %1551 = vmatprep.subr.mxu0 %v765
    %1552 = vmatpush1.msra.mxu0 %v764
    %1553 = vmatprep.subr.mxu0 %v769
    %1554 = vmatpush1.msra.mxu0 %v768
    %1555 = vmatprep.mubr.f32.mxu0 %v1256
    %1556 = vmatmul.mubr.f32.gmra.mrb[0].mxu0 %v1419
    %v1557 = vpop.f32.mrb[0].mxu0
    %v1558 = vadd.f32 %v422, %v1557
    %v1559 = vpop.f32.mrb[0].mxu0
    %v1560 = vadd.f32 %v426, %v1559
    %1561 = vdwg.mxu0
    %v1562 = vxor.u32 %v1487, 2147483648
    %v1563 = vxor.u32 %v1489, 2147483648
    %v1564 = vmul.f32 %v1562, 1.442695
    %v1565 = vpow.pop %v1564
    %v1566 = vmul.f32 %v1563, 1.442695
    %v1567 = vpow.pop %v1566
    %v1568 = vadd.f32 %v1565, 1.0
    %v1569 = vadd.f32 %v1567, 1.0
    %v1570 = vrcp.pop %v1568
    %v1571 = vmul.f32 1.0, %v1570
    %v1572 = vrcp.pop %v1569
    %v1573 = vmul.f32 1.0, %v1572
    %v1574 = vmul.f32 %v1571, %v1560
    %v1575 = vadd.f32 %v1558, %v1574
    %v1576 = vtanh.pop %v1575
    %v1577 = vsub.f32 1.0, %v1573
    %v1578 = vmul.f32 %v1577, %v1576
    %v1579 = vmul.f32 %v1573, %v1256
    %v1580 = vadd.f32 %v1578, %v1579
    %v1581 = vmax.f32 %v1580, 0.0
    %1582 = vmatprep.subr.mxu0 %v432
    %1583 = vmatpush1.msra.mxu0 %v431
    %1584 = vmatprep.subr.mxu0 %v435
    %1585 = vmatpush1.msra.mxu0 %v434
    %1586 = vmatprep.subr.mxu0 %v438
    %1587 = vmatpush1.msra.mxu0 %v437
    %1588 = vmatprep.subr.mxu0 %v441
    %1589 = vmatpush1.msra.mxu0 %v440
    %1590 = vmatprep.subr.mxu0 %v444
    %1591 = vmatpush1.msra.mxu0 %v443
    %1592 = vmatprep.subr.mxu0 %v447
    %1593 = vmatpush1.msra.mxu0 %v446
    %1594 = vmatprep.subr.mxu0 %v450
    %1595 = vmatpush1.msra.mxu0 %v449
    %1596 = vmatprep.subr.mxu0 %v453
    %1597 = vmatpush1.msra.mxu0 %v452
    %1598 = vmatprep.subr.mxu0 %v456
    %1599 = vmatpush1.msra.mxu0 %v455
    %1600 = vmatprep.subr.mxu0 %v459
    %1601 = vmatpush1.msra.mxu0 %v458
    %1602 = vmatprep.subr.mxu0 %v462
    %1603 = vmatpush1.msra.mxu0 %v461
    %1604 = vmatprep.subr.mxu0 %v465
    %1605 = vmatpush1.msra.mxu0 %v464
    %1606 = vmatprep.subr.mxu0 %v468
    %1607 = vmatpush1.msra.mxu0 %v467
    %1608 = vmatprep.subr.mxu0 %v471
    %1609 = vmatpush1.msra.mxu0 %v470
    %1610 = vmatprep.subr.mxu0 %v474
    %1611 = vmatpush1.msra.mxu0 %v473
    %1612 = vmatprep.subr.mxu0 %v477
    %1613 = vmatpush1.msra.mxu0 %v476
    %1614 = vmatprep.subr.mxu0 0.0
    %1615 = vmatpush1.msra.mxu0 0.0
    %1616 = vmatprep.subr.mxu0 0.0
    %1617 = vmatpush1.msra.mxu0 0.0
    %1618 = vmatprep.subr.mxu0 0.0
    %1619 = vmatpush1.msra.mxu0 0.0
    %1620 = vmatprep.subr.mxu0 0.0
    %1621 = vmatpush1.msra.mxu0 0.0
    %1622 = vmatprep.subr.mxu0 0.0
    %1623 = vmatpush1.msra.mxu0 0.0
    %1624 = vmatprep.subr.mxu0 0.0
    %1625 = vmatpush1.msra.mxu0 0.0
    %1626 = vmatprep.subr.mxu0 0.0
    %1627 = vmatpush1.msra.mxu0 0.0
    %1628 = vmatprep.subr.mxu0 0.0
    %1629 = vmatpush1.msra.mxu0 0.0
    %1630 = vmatprep.subr.mxu0 0.0
    %1631 = vmatpush1.msra.mxu0 0.0
    %1632 = vmatprep.subr.mxu0 0.0
    %1633 = vmatpush1.msra.mxu0 0.0
    %1634 = vmatprep.subr.mxu0 0.0
    %1635 = vmatpush1.msra.mxu0 0.0
    %1636 = vmatprep.subr.mxu0 0.0
    %1637 = vmatpush1.msra.mxu0 0.0
    %1638 = vmatprep.subr.mxu0 0.0
    %1639 = vmatpush1.msra.mxu0 0.0
    %1640 = vmatprep.subr.mxu0 0.0
    %1641 = vmatpush1.msra.mxu0 0.0
    %1642 = vmatprep.subr.mxu0 0.0
    %1643 = vmatpush1.msra.mxu0 0.0
    %1644 = vmatprep.subr.mxu0 0.0
    %1645 = vmatpush1.msra.mxu0 0.0
    %1646 = vmatprep.mubr.f32.mxu0 0.0
    %1647 = vmatmul.mubr.f32.gmra.mrb[0].mxu0 %v1419
    %v1648 = vpop.f32.mrb[0].mxu0
    %v1649 = vadd.f32 %v397, %v1648
    %v1650 = vpop.f32.mrb[0].mxu0
    %v1651 = vadd.f32 %v401, %v1650
    %1652 = vdwg.mxu0
    %1653 = vmatprep.subr.mxu0 0.0
    %1654 = vmatpush1.msra.mxu0 %v433
    %1655 = vmatprep.subr.mxu0 0.0
    %1656 = vmatpush1.msra.mxu0 %v436
    %1657 = vmatprep.subr.mxu0 0.0
    %1658 = vmatpush1.msra.mxu0 %v439
    %1659 = vmatprep.subr.mxu0 0.0
    %1660 = vmatpush1.msra.mxu0 %v442
    %1661 = vmatprep.subr.mxu0 0.0
    %1662 = vmatpush1.msra.mxu0 %v445
    %1663 = vmatprep.subr.mxu0 0.0
    %1664 = vmatpush1.msra.mxu0 %v448
    %1665 = vmatprep.subr.mxu0 0.0
    %1666 = vmatpush1.msra.mxu0 %v451
    %1667 = vmatprep.subr.mxu0 0.0
    %1668 = vmatpush1.msra.mxu0 %v454
    %1669 = vmatprep.subr.mxu0 0.0
    %1670 = vmatpush1.msra.mxu0 %v457
    %1671 = vmatprep.subr.mxu0 0.0
    %1672 = vmatpush1.msra.mxu0 %v460
    %1673 = vmatprep.subr.mxu0 0.0
    %1674 = vmatpush1.msra.mxu0 %v463
    %1675 = vmatprep.subr.mxu0 0.0
    %1676 = vmatpush1.msra.mxu0 %v466
    %1677 = vmatprep.subr.mxu0 0.0
    %1678 = vmatpush1.msra.mxu0 %v469
    %1679 = vmatprep.subr.mxu0 0.0
    %1680 = vmatpush1.msra.mxu0 %v472
    %1681 = vmatprep.subr.mxu0 0.0
    %1682 = vmatpush1.msra.mxu0 %v475
    %1683 = vmatprep.subr.mxu0 0.0
    %1684 = vmatpush1.msra.mxu0 %v478
    %1685 = vmatprep.subr.mxu0 0.0
    %1686 = vmatpush1.msra.mxu0 0.0
    %1687 = vmatprep.subr.mxu0 0.0
    %1688 = vmatpush1.msra.mxu0 0.0
    %1689 = vmatprep.subr.mxu0 0.0
    %1690 = vmatpush1.msra.mxu0 0.0
    %1691 = vmatprep.subr.mxu0 0.0
    %1692 = vmatpush1.msra.mxu0 0.0
    %1693 = vmatprep.subr.mxu0 0.0
    %1694 = vmatpush1.msra.mxu0 0.0
    %1695 = vmatprep.subr.mxu0 0.0
    %1696 = vmatpush1.msra.mxu0 0.0
    %1697 = vmatprep.subr.mxu0 0.0
    %1698 = vmatpush1.msra.mxu0 0.0
    %1699 = vmatprep.subr.mxu0 0.0
    %1700 = vmatpush1.msra.mxu0 0.0
    %1701 = vmatprep.subr.mxu0 0.0
    %1702 = vmatpush1.msra.mxu0 0.0
    %1703 = vmatprep.subr.mxu0 0.0
    %1704 = vmatpush1.msra.mxu0 0.0
    %1705 = vmatprep.subr.mxu0 0.0
    %1706 = vmatpush1.msra.mxu0 0.0
    %1707 = vmatprep.subr.mxu0 0.0
    %1708 = vmatpush1.msra.mxu0 0.0
    %1709 = vmatprep.subr.mxu0 0.0
    %1710 = vmatpush1.msra.mxu0 0.0
    %1711 = vmatprep.subr.mxu0 0.0
    %1712 = vmatpush1.msra.mxu0 0.0
    %1713 = vmatprep.subr.mxu0 0.0
    %1714 = vmatpush1.msra.mxu0 0.0
    %1715 = vmatprep.subr.mxu0 0.0
    %1716 = vmatpush1.msra.mxu0 0.0
    %1717 = vmatprep.mubr.f32.mxu0 0.0
    %1718 = vmatmul.mubr.f32.gmra.mrb[0].mxu0 %v1419
    %v1719 = vpop.f32.mrb[0].mxu0
    %v1720 = vadd.f32 %v405, %v1719
    %v1721 = vpop.f32.mrb[0].mxu0
    %1722 = vdwg.mxu0
    %v1723 = vadd.f32 %v259, %v1649
    %v1724 = vadd.f32 %v261, %v1651
    %v1725 = vxor.u32 %v1723, 2147483648
    %v1726 = vxor.u32 %v1724, 2147483648
    %v1727 = vmul.f32 %v1725, 1.442695
    %v1728 = vpow.pop %v1727
    %v1729 = vmul.f32 %v1726, 1.442695
    %v1730 = vpow.pop %v1729
    %v1731 = vadd.f32 %v1728, 1.0
    %v1732 = vadd.f32 %v1730, 1.0
    %v1733 = vrcp.pop %v1731
    %v1734 = vmul.f32 1.0, %v1733
    %v1735 = vrcp.pop %v1732
    %v1736 = vmul.f32 1.0, %v1735
    %v1737 = vmul.f32 %v1734, %v1720
    %v1738 = vadd.f32 %v369, %v1737
    %v1739 = vtanh.pop %v1738
    %v1740 = vsub.f32 1.0, %v1736
    %v1741 = vmul.f32 %v1740, %v1739
    %v1742 = vmul.f32 %v1736, %v1419
    %v1743 = vadd.f32 %v1741, %v1742
    %v1744 = vmax.f32 %v1743, 0.0
    %1745 = vmatprep.subr.mxu0 %v643
    %1746 = vmatpush1.msra.mxu0 %v642
    %1747 = vmatprep.subr.mxu0 %v647
    %1748 = vmatpush1.msra.mxu0 %v646
    %1749 = vmatprep.subr.mxu0 %v651
    %1750 = vmatpush1.msra.mxu0 %v650
    %1751 = vmatprep.subr.mxu0 %v655
    %1752 = vmatpush1.msra.mxu0 %v654
    %1753 = vmatprep.subr.mxu0 %v659
    %1754 = vmatpush1.msra.mxu0 %v658
    %1755 = vmatprep.subr.mxu0 %v663
    %1756 = vmatpush1.msra.mxu0 %v662
    %1757 = vmatprep.subr.mxu0 %v667
    %1758 = vmatpush1.msra.mxu0 %v666
    %1759 = vmatprep.subr.mxu0 %v671
    %1760 = vmatpush1.msra.mxu0 %v670
    %1761 = vmatprep.subr.mxu0 %v675
    %1762 = vmatpush1.msra.mxu0 %v674
    %1763 = vmatprep.subr.mxu0 %v679
    %1764 = vmatpush1.msra.mxu0 %v678
    %1765 = vmatprep.subr.mxu0 %v683
    %1766 = vmatpush1.msra.mxu0 %v682
    %1767 = vmatprep.subr.mxu0 %v687
    %1768 = vmatpush1.msra.mxu0 %v686
    %1769 = vmatprep.subr.mxu0 %v691
    %1770 = vmatpush1.msra.mxu0 %v690
    %1771 = vmatprep.subr.mxu0 %v695
    %1772 = vmatpush1.msra.mxu0 %v694
    %1773 = vmatprep.subr.mxu0 %v699
    %1774 = vmatpush1.msra.mxu0 %v698
    %1775 = vmatprep.subr.mxu0 %v703
    %1776 = vmatpush1.msra.mxu0 %v702
    %1777 = vmatprep.subr.mxu0 %v707
    %1778 = vmatpush1.msra.mxu0 %v706
    %1779 = vmatprep.subr.mxu0 %v711
    %1780 = vmatpush1.msra.mxu0 %v710
    %1781 = vmatprep.subr.mxu0 %v715
    %1782 = vmatpush1.msra.mxu0 %v714
    %1783 = vmatprep.subr.mxu0 %v719
    %1784 = vmatpush1.msra.mxu0 %v718
    %1785 = vmatprep.subr.mxu0 %v723
    %1786 = vmatpush1.msra.mxu0 %v722
    %1787 = vmatprep.subr.mxu0 %v727
    %1788 = vmatpush1.msra.mxu0 %v726
    %1789 = vmatprep.subr.mxu0 %v731
    %1790 = vmatpush1.msra.mxu0 %v730
    %1791 = vmatprep.subr.mxu0 %v735
    %1792 = vmatpush1.msra.mxu0 %v734
    %1793 = vmatprep.subr.mxu0 %v739
    %1794 = vmatpush1.msra.mxu0 %v738
    %1795 = vmatprep.subr.mxu0 %v743
    %1796 = vmatpush1.msra.mxu0 %v742
    %1797 = vmatprep.subr.mxu0 %v747
    %1798 = vmatpush1.msra.mxu0 %v746
    %1799 = vmatprep.subr.mxu0 %v751
    %1800 = vmatpush1.msra.mxu0 %v750
    %1801 = vmatprep.subr.mxu0 %v755
    %1802 = vmatpush1.msra.mxu0 %v754
    %1803 = vmatprep.subr.mxu0 %v759
    %1804 = vmatpush1.msra.mxu0 %v758
    %1805 = vmatprep.subr.mxu0 %v763
    %1806 = vmatpush1.msra.mxu0 %v762
    %1807 = vmatprep.subr.mxu0 %v767
    %1808 = vmatpush1.msra.mxu0 %v766
    %1809 = vmatprep.mubr.f32.mxu0 %v1581
    %1810 = vmatmul.mubr.f32.gmra.mrb[0].mxu0 %v1744
    %v1811 = vpop.f32.mrb[0].mxu0
    %v1812 = vadd.f32 %v414, %v1811
    %v1813 = vpop.f32.mrb[0].mxu0
    %v1814 = vadd.f32 %v418, %v1813
    %1815 = vdwg.mxu0
    %1816 = vmatprep.subr.mxu0 %v645
    %1817 = vmatpush1.msra.mxu0 %v644
    %1818 = vmatprep.subr.mxu0 %v649
    %1819 = vmatpush1.msra.mxu0 %v648
    %1820 = vmatprep.subr.mxu0 %v653
    %1821 = vmatpush1.msra.mxu0 %v652
    %1822 = vmatprep.subr.mxu0 %v657
    %1823 = vmatpush1.msra.mxu0 %v656
    %1824 = vmatprep.subr.mxu0 %v661
    %1825 = vmatpush1.msra.mxu0 %v660
    %1826 = vmatprep.subr.mxu0 %v665
    %1827 = vmatpush1.msra.mxu0 %v664
    %1828 = vmatprep.subr.mxu0 %v669
    %1829 = vmatpush1.msra.mxu0 %v668
    %1830 = vmatprep.subr.mxu0 %v673
    %1831 = vmatpush1.msra.mxu0 %v672
    %1832 = vmatprep.subr.mxu0 %v677
    %1833 = vmatpush1.msra.mxu0 %v676
    %1834 = vmatprep.subr.mxu0 %v681
    %1835 = vmatpush1.msra.mxu0 %v680
    %1836 = vmatprep.subr.mxu0 %v685
    %1837 = vmatpush1.msra.mxu0 %v684
    %1838 = vmatprep.subr.mxu0 %v689
    %1839 = vmatpush1.msra.mxu0 %v688
    %1840 = vmatprep.subr.mxu0 %v693
    %1841 = vmatpush1.msra.mxu0 %v692
    %1842 = vmatprep.subr.mxu0 %v697
    %1843 = vmatpush1.msra.mxu0 %v696
    %1844 = vmatprep.subr.mxu0 %v701
    %1845 = vmatpush1.msra.mxu0 %v700
    %1846 = vmatprep.subr.mxu0 %v705
    %1847 = vmatpush1.msra.mxu0 %v704
    %1848 = vmatprep.subr.mxu0 %v709
    %1849 = vmatpush1.msra.mxu0 %v708
    %1850 = vmatprep.subr.mxu0 %v713
    %1851 = vmatpush1.msra.mxu0 %v712
    %1852 = vmatprep.subr.mxu0 %v717
    %1853 = vmatpush1.msra.mxu0 %v716
    %1854 = vmatprep.subr.mxu0 %v721
    %1855 = vmatpush1.msra.mxu0 %v720
    %1856 = vmatprep.subr.mxu0 %v725
    %1857 = vmatpush1.msra.mxu0 %v724
    %1858 = vmatprep.subr.mxu0 %v729
    %1859 = vmatpush1.msra.mxu0 %v728
    %1860 = vmatprep.subr.mxu0 %v733
    %1861 = vmatpush1.msra.mxu0 %v732
    %1862 = vmatprep.subr.mxu0 %v737
    %1863 = vmatpush1.msra.mxu0 %v736
    %1864 = vmatprep.subr.mxu0 %v741
    %1865 = vmatpush1.msra.mxu0 %v740
    %1866 = vmatprep.subr.mxu0 %v745
    %1867 = vmatpush1.msra.mxu0 %v744
    %1868 = vmatprep.subr.mxu0 %v749
    %1869 = vmatpush1.msra.mxu0 %v748
    %1870 = vmatprep.subr.mxu0 %v753
    %1871 = vmatpush1.msra.mxu0 %v752
    %1872 = vmatprep.subr.mxu0 %v757
    %1873 = vmatpush1.msra.mxu0 %v756
    %1874 = vmatprep.subr.mxu0 %v761
    %1875 = vmatpush1.msra.mxu0 %v760
    %1876 = vmatprep.subr.mxu0 %v765
    %1877 = vmatpush1.msra.mxu0 %v764
    %1878 = vmatprep.subr.mxu0 %v769
    %1879 = vmatpush1.msra.mxu0 %v768
    %1880 = vmatprep.mubr.f32.mxu0 %v1581
    %1881 = vmatmul.mubr.f32.gmra.mrb[0].mxu0 %v1744
    %v1882 = vpop.f32.mrb[0].mxu0
    %v1883 = vadd.f32 %v422, %v1882
    %v1884 = vpop.f32.mrb[0].mxu0
    %v1885 = vadd.f32 %v426, %v1884
    %1886 = vdwg.mxu0
    %v1887 = vxor.u32 %v1812, 2147483648
    %v1888 = vxor.u32 %v1814, 2147483648
    %v1889 = vmul.f32 %v1887, 1.442695
    %v1890 = vpow.pop %v1889
    %v1891 = vmul.f32 %v1888, 1.442695
    %v1892 = vpow.pop %v1891
    %v1893 = vadd.f32 %v1890, 1.0
    %v1894 = vadd.f32 %v1892, 1.0
    %v1895 = vrcp.pop %v1893
    %v1896 = vmul.f32 1.0, %v1895
    %v1897 = vrcp.pop %v1894
    %v1898 = vmul.f32 1.0, %v1897
    %v1899 = vmul.f32 %v1896, %v1885
    %v1900 = vadd.f32 %v1883, %v1899
    %v1901 = vtanh.pop %v1900
    %v1902 = vsub.f32 1.0, %v1898
    %v1903 = vmul.f32 %v1902, %v1901
    %v1904 = vmul.f32 %v1898, %v1581
    %v1905 = vadd.f32 %v1903, %v1904
    %v1906 = vmax.f32 %v1905, 0.0
    %1907 = vmatprep.subr.mxu0 %v432
    %1908 = vmatpush1.msra.mxu0 %v431
    %1909 = vmatprep.subr.mxu0 %v435
    %1910 = vmatpush1.msra.mxu0 %v434
    %1911 = vmatprep.subr.mxu0 %v438
    %1912 = vmatpush1.msra.mxu0 %v437
    %1913 = vmatprep.subr.mxu0 %v441
    %1914 = vmatpush1.msra.mxu0 %v440
    %1915 = vmatprep.subr.mxu0 %v444
    %1916 = vmatpush1.msra.mxu0 %v443
    %1917 = vmatprep.subr.mxu0 %v447
    %1918 = vmatpush1.msra.mxu0 %v446
    %1919 = vmatprep.subr.mxu0 %v450
    %1920 = vmatpush1.msra.mxu0 %v449
    %1921 = vmatprep.subr.mxu0 %v453
    %1922 = vmatpush1.msra.mxu0 %v452
    %1923 = vmatprep.subr.mxu0 %v456
    %1924 = vmatpush1.msra.mxu0 %v455
    %1925 = vmatprep.subr.mxu0 %v459
    %1926 = vmatpush1.msra.mxu0 %v458
    %1927 = vmatprep.subr.mxu0 %v462
    %1928 = vmatpush1.msra.mxu0 %v461
    %1929 = vmatprep.subr.mxu0 %v465
    %1930 = vmatpush1.msra.mxu0 %v464
    %1931 = vmatprep.subr.mxu0 %v468
    %1932 = vmatpush1.msra.mxu0 %v467
    %1933 = vmatprep.subr.mxu0 %v471
    %1934 = vmatpush1.msra.mxu0 %v470
    %1935 = vmatprep.subr.mxu0 %v474
    %1936 = vmatpush1.msra.mxu0 %v473
    %1937 = vmatprep.subr.mxu0 %v477
    %1938 = vmatpush1.msra.mxu0 %v476
    %1939 = vmatprep.subr.mxu0 0.0
    %1940 = vmatpush1.msra.mxu0 0.0
    %1941 = vmatprep.subr.mxu0 0.0
    %1942 = vmatpush1.msra.mxu0 0.0
    %1943 = vmatprep.subr.mxu0 0.0
    %1944 = vmatpush1.msra.mxu0 0.0
    %1945 = vmatprep.subr.mxu0 0.0
    %1946 = vmatpush1.msra.mxu0 0.0
    %1947 = vmatprep.subr.mxu0 0.0
    %1948 = vmatpush1.msra.mxu0 0.0
    %1949 = vmatprep.subr.mxu0 0.0
    %1950 = vmatpush1.msra.mxu0 0.0
    %1951 = vmatprep.subr.mxu0 0.0
    %1952 = vmatpush1.msra.mxu0 0.0
    %1953 = vmatprep.subr.mxu0 0.0
    %1954 = vmatpush1.msra.mxu0 0.0
    %1955 = vmatprep.subr.mxu0 0.0
    %1956 = vmatpush1.msra.mxu0 0.0
    %1957 = vmatprep.subr.mxu0 0.0
    %1958 = vmatpush1.msra.mxu0 0.0
    %1959 = vmatprep.subr.mxu0 0.0
    %1960 = vmatpush1.msra.mxu0 0.0
    %1961 = vmatprep.subr.mxu0 0.0
    %1962 = vmatpush1.msra.mxu0 0.0
    %1963 = vmatprep.subr.mxu0 0.0
    %1964 = vmatpush1.msra.mxu0 0.0
    %1965 = vmatprep.subr.mxu0 0.0
    %1966 = vmatpush1.msra.mxu0 0.0
    %1967 = vmatprep.subr.mxu0 0.0
    %1968 = vmatpush1.msra.mxu0 0.0
    %1969 = vmatprep.subr.mxu0 0.0
    %1970 = vmatpush1.msra.mxu0 0.0
    %1971 = vmatprep.mubr.f32.mxu0 0.0
    %1972 = vmatmul.mubr.f32.gmra.mrb[0].mxu0 %v1744
    %v1973 = vpop.f32.mrb[0].mxu0
    %v1974 = vadd.f32 %v397, %v1973
    %v1975 = vpop.f32.mrb[0].mxu0
    %v1976 = vadd.f32 %v401, %v1975
    %1977 = vdwg.mxu0
    %1978 = vmatprep.subr.mxu0 0.0
    %1979 = vmatpush1.msra.mxu0 %v433
    %1980 = vmatprep.subr.mxu0 0.0
    %1981 = vmatpush1.msra.mxu0 %v436
    %1982 = vmatprep.subr.mxu0 0.0
    %1983 = vmatpush1.msra.mxu0 %v439
    %1984 = vmatprep.subr.mxu0 0.0
    %1985 = vmatpush1.msra.mxu0 %v442
    %1986 = vmatprep.subr.mxu0 0.0
    %1987 = vmatpush1.msra.mxu0 %v445
    %1988 = vmatprep.subr.mxu0 0.0
    %1989 = vmatpush1.msra.mxu0 %v448
    %1990 = vmatprep.subr.mxu0 0.0
    %1991 = vmatpush1.msra.mxu0 %v451
    %1992 = vmatprep.subr.mxu0 0.0
    %1993 = vmatpush1.msra.mxu0 %v454
    %1994 = vmatprep.subr.mxu0 0.0
    %1995 = vmatpush1.msra.mxu0 %v457
    %1996 = vmatprep.subr.mxu0 0.0
    %1997 = vmatpush1.msra.mxu0 %v460
    %1998 = vmatprep.subr.mxu0 0.0
    %1999 = vmatpush1.msra.mxu0 %v463
    %2000 = vmatprep.subr.mxu0 0.0
    %2001 = vmatpush1.msra.mxu0 %v466
    %2002 = vmatprep.subr.mxu0 0.0
    %2003 = vmatpush1.msra.mxu0 %v469
    %2004 = vmatprep.subr.mxu0 0.0
    %2005 = vmatpush1.msra.mxu0 %v472
    %2006 = vmatprep.subr.mxu0 0.0
    %2007 = vmatpush1.msra.mxu0 %v475
    %2008 = vmatprep.subr.mxu0 0.0
    %2009 = vmatpush1.msra.mxu0 %v478
    %2010 = vmatprep.subr.mxu0 0.0
    %2011 = vmatpush1.msra.mxu0 0.0
    %2012 = vmatprep.subr.mxu0 0.0
    %2013 = vmatpush1.msra.mxu0 0.0
    %2014 = vmatprep.subr.mxu0 0.0
    %2015 = vmatpush1.msra.mxu0 0.0
    %2016 = vmatprep.subr.mxu0 0.0
    %2017 = vmatpush1.msra.mxu0 0.0
    %2018 = vmatprep.subr.mxu0 0.0
    %2019 = vmatpush1.msra.mxu0 0.0
    %2020 = vmatprep.subr.mxu0 0.0
    %2021 = vmatpush1.msra.mxu0 0.0
    %2022 = vmatprep.subr.mxu0 0.0
    %2023 = vmatpush1.msra.mxu0 0.0
    %2024 = vmatprep.subr.mxu0 0.0
    %2025 = vmatpush1.msra.mxu0 0.0
    %2026 = vmatprep.subr.mxu0 0.0
    %2027 = vmatpush1.msra.mxu0 0.0
    %2028 = vmatprep.subr.mxu0 0.0
    %2029 = vmatpush1.msra.mxu0 0.0
    %2030 = vmatprep.subr.mxu0 0.0
    %2031 = vmatpush1.msra.mxu0 0.0
    %2032 = vmatprep.subr.mxu0 0.0
    %2033 = vmatpush1.msra.mxu0 0.0
    %2034 = vmatprep.subr.mxu0 0.0
    %2035 = vmatpush1.msra.mxu0 0.0
    %2036 = vmatprep.subr.mxu0 0.0
    %2037 = vmatpush1.msra.mxu0 0.0
    %2038 = vmatprep.subr.mxu0 0.0
    %2039 = vmatpush1.msra.mxu0 0.0
    %2040 = vmatprep.subr.mxu0 0.0
    %2041 = vmatpush1.msra.mxu0 0.0
    %2042 = vmatprep.mubr.f32.mxu0 0.0
    %2043 = vmatmul.mubr.f32.gmra.mrb[0].mxu0 %v1744
    %v2044 = vpop.f32.mrb[0].mxu0
    %v2045 = vadd.f32 %v405, %v2044
    %v2046 = vpop.f32.mrb[0].mxu0
    %2047 = vdwg.mxu0
    %v2048 = vadd.f32 %v265, %v1974
    %v2049 = vadd.f32 %v267, %v1976
    %v2050 = vxor.u32 %v2048, 2147483648
    %v2051 = vxor.u32 %v2049, 2147483648
    %v2052 = vmul.f32 %v2050, 1.442695
    %v2053 = vpow.pop %v2052
    %v2054 = vmul.f32 %v2051, 1.442695
    %v2055 = vpow.pop %v2054
    %v2056 = vadd.f32 %v2053, 1.0
    %v2057 = vadd.f32 %v2055, 1.0
    %v2058 = vrcp.pop %v2056
    %v2059 = vmul.f32 1.0, %v2058
    %v2060 = vrcp.pop %v2057
    %v2061 = vmul.f32 1.0, %v2060
    %v2062 = vmul.f32 %v2059, %v2045
    %v2063 = vadd.f32 %v374, %v2062
    %v2064 = vtanh.pop %v2063
    %v2065 = vsub.f32 1.0, %v2061
    %v2066 = vmul.f32 %v2065, %v2064
    %v2067 = vmul.f32 %v2061, %v1744
    %v2068 = vadd.f32 %v2066, %v2067
    %v2069 = vmax.f32 %v2068, 0.0
    %2070 = vmatprep.subr.mxu0 %v643
    %2071 = vmatpush1.msra.mxu0 %v642
    %2072 = vmatprep.subr.mxu0 %v647
    %2073 = vmatpush1.msra.mxu0 %v646
    %2074 = vmatprep.subr.mxu0 %v651
    %2075 = vmatpush1.msra.mxu0 %v650
    %2076 = vmatprep.subr.mxu0 %v655
    %2077 = vmatpush1.msra.mxu0 %v654
    %2078 = vmatprep.subr.mxu0 %v659
    %2079 = vmatpush1.msra.mxu0 %v658
    %2080 = vmatprep.subr.mxu0 %v663
    %2081 = vmatpush1.msra.mxu0 %v662
    %2082 = vmatprep.subr.mxu0 %v667
    %2083 = vmatpush1.msra.mxu0 %v666
    %2084 = vmatprep.subr.mxu0 %v671
    %2085 = vmatpush1.msra.mxu0 %v670
    %2086 = vmatprep.subr.mxu0 %v675
    %2087 = vmatpush1.msra.mxu0 %v674
    %2088 = vmatprep.subr.mxu0 %v679
    %2089 = vmatpush1.msra.mxu0 %v678
    %2090 = vmatprep.subr.mxu0 %v683
    %2091 = vmatpush1.msra.mxu0 %v682
    %2092 = vmatprep.subr.mxu0 %v687
    %2093 = vmatpush1.msra.mxu0 %v686
    %2094 = vmatprep.subr.mxu0 %v691
    %2095 = vmatpush1.msra.mxu0 %v690
    %2096 = vmatprep.subr.mxu0 %v695
    %2097 = vmatpush1.msra.mxu0 %v694
    %2098 = vmatprep.subr.mxu0 %v699
    %2099 = vmatpush1.msra.mxu0 %v698
    %2100 = vmatprep.subr.mxu0 %v703
    %2101 = vmatpush1.msra.mxu0 %v702
    %2102 = vmatprep.subr.mxu0 %v707
    %2103 = vmatpush1.msra.mxu0 %v706
    %2104 = vmatprep.subr.mxu0 %v711
    %2105 = vmatpush1.msra.mxu0 %v710
    %2106 = vmatprep.subr.mxu0 %v715
    %2107 = vmatpush1.msra.mxu0 %v714
    %2108 = vmatprep.subr.mxu0 %v719
    %2109 = vmatpush1.msra.mxu0 %v718
    %2110 = vmatprep.subr.mxu0 %v723
    %2111 = vmatpush1.msra.mxu0 %v722
    %2112 = vmatprep.subr.mxu0 %v727
    %2113 = vmatpush1.msra.mxu0 %v726
    %2114 = vmatprep.subr.mxu0 %v731
    %2115 = vmatpush1.msra.mxu0 %v730
    %2116 = vmatprep.subr.mxu0 %v735
    %2117 = vmatpush1.msra.mxu0 %v734
    %2118 = vmatprep.subr.mxu0 %v739
    %2119 = vmatpush1.msra.mxu0 %v738
    %2120 = vmatprep.subr.mxu0 %v743
    %2121 = vmatpush1.msra.mxu0 %v742
    %2122 = vmatprep.subr.mxu0 %v747
    %2123 = vmatpush1.msra.mxu0 %v746
    %2124 = vmatprep.subr.mxu0 %v751
    %2125 = vmatpush1.msra.mxu0 %v750
    %2126 = vmatprep.subr.mxu0 %v755
    %2127 = vmatpush1.msra.mxu0 %v754
    %2128 = vmatprep.subr.mxu0 %v759
    %2129 = vmatpush1.msra.mxu0 %v758
    %2130 = vmatprep.subr.mxu0 %v763
    %2131 = vmatpush1.msra.mxu0 %v762
    %2132 = vmatprep.subr.mxu0 %v767
    %2133 = vmatpush1.msra.mxu0 %v766
    %2134 = vmatprep.mubr.f32.mxu0 %v1906
    %2135 = vmatmul.mubr.f32.gmra.mrb[0].mxu0 %v2069
    %v2136 = vpop.f32.mrb[0].mxu0
    %v2137 = vadd.f32 %v414, %v2136
    %v2138 = vpop.f32.mrb[0].mxu0
    %v2139 = vadd.f32 %v418, %v2138
    %2140 = vdwg.mxu0
    %2141 = vmatprep.subr.mxu0 %v645
    %2142 = vmatpush1.msra.mxu0 %v644
    %2143 = vmatprep.subr.mxu0 %v649
    %2144 = vmatpush1.msra.mxu0 %v648
    %2145 = vmatprep.subr.mxu0 %v653
    %2146 = vmatpush1.msra.mxu0 %v652
    %2147 = vmatprep.subr.mxu0 %v657
    %2148 = vmatpush1.msra.mxu0 %v656
    %2149 = vmatprep.subr.mxu0 %v661
    %2150 = vmatpush1.msra.mxu0 %v660
    %2151 = vmatprep.subr.mxu0 %v665
    %2152 = vmatpush1.msra.mxu0 %v664
    %2153 = vmatprep.subr.mxu0 %v669
    %2154 = vmatpush1.msra.mxu0 %v668
    %2155 = vmatprep.subr.mxu0 %v673
    %2156 = vmatpush1.msra.mxu0 %v672
    %2157 = vmatprep.subr.mxu0 %v677
    %2158 = vmatpush1.msra.mxu0 %v676
    %2159 = vmatprep.subr.mxu0 %v681
    %2160 = vmatpush1.msra.mxu0 %v680
    %2161 = vmatprep.subr.mxu0 %v685
    %2162 = vmatpush1.msra.mxu0 %v684
    %2163 = vmatprep.subr.mxu0 %v689
    %2164 = vmatpush1.msra.mxu0 %v688
    %2165 = vmatprep.subr.mxu0 %v693
    %2166 = vmatpush1.msra.mxu0 %v692
    %2167 = vmatprep.subr.mxu0 %v697
    %2168 = vmatpush1.msra.mxu0 %v696
    %2169 = vmatprep.subr.mxu0 %v701
    %2170 = vmatpush1.msra.mxu0 %v700
    %2171 = vmatprep.subr.mxu0 %v705
    %2172 = vmatpush1.msra.mxu0 %v704
    %2173 = vmatprep.subr.mxu0 %v709
    %2174 = vmatpush1.msra.mxu0 %v708
    %2175 = vmatprep.subr.mxu0 %v713
    %2176 = vmatpush1.msra.mxu0 %v712
    %2177 = vmatprep.subr.mxu0 %v717
    %2178 = vmatpush1.msra.mxu0 %v716
    %2179 = vmatprep.subr.mxu0 %v721
    %2180 = vmatpush1.msra.mxu0 %v720
    %2181 = vmatprep.subr.mxu0 %v725
    %2182 = vmatpush1.msra.mxu0 %v724
    %2183 = vmatprep.subr.mxu0 %v729
    %2184 = vmatpush1.msra.mxu0 %v728
    %2185 = vmatprep.subr.mxu0 %v733
    %2186 = vmatpush1.msra.mxu0 %v732
    %2187 = vmatprep.subr.mxu0 %v737
    %2188 = vmatpush1.msra.mxu0 %v736
    %2189 = vmatprep.subr.mxu0 %v741
    %2190 = vmatpush1.msra.mxu0 %v740
    %2191 = vmatprep.subr.mxu0 %v745
    %2192 = vmatpush1.msra.mxu0 %v744
    %2193 = vmatprep.subr.mxu0 %v749
    %2194 = vmatpush1.msra.mxu0 %v748
    %2195 = vmatprep.subr.mxu0 %v753
    %2196 = vmatpush1.msra.mxu0 %v752
    %2197 = vmatprep.subr.mxu0 %v757
    %2198 = vmatpush1.msra.mxu0 %v756
    %2199 = vmatprep.subr.mxu0 %v761
    %2200 = vmatpush1.msra.mxu0 %v760
    %2201 = vmatprep.subr.mxu0 %v765
    %2202 = vmatpush1.msra.mxu0 %v764
    %2203 = vmatprep.subr.mxu0 %v769
    %2204 = vmatpush1.msra.mxu0 %v768
    %2205 = vmatprep.mubr.f32.mxu0 %v1906
    %2206 = vmatmul.mubr.f32.gmra.mrb[0].mxu0 %v2069
    %v2207 = vpop.f32.mrb[0].mxu0
    %v2208 = vadd.f32 %v422, %v2207
    %v2209 = vpop.f32.mrb[0].mxu0
    %v2210 = vadd.f32 %v426, %v2209
    %2211 = vdwg.mxu0
    %v2212 = vxor.u32 %v2137, 2147483648
    %v2213 = vxor.u32 %v2139, 2147483648
    %v2214 = vmul.f32 %v2212, 1.442695
    %v2215 = vpow.pop %v2214
    %v2216 = vmul.f32 %v2213, 1.442695
    %v2217 = vpow.pop %v2216
    %v2218 = vadd.f32 %v2215, 1.0
    %v2219 = vadd.f32 %v2217, 1.0
    %v2220 = vrcp.pop %v2218
    %v2221 = vmul.f32 1.0, %v2220
    %v2222 = vrcp.pop %v2219
    %v2223 = vmul.f32 1.0, %v2222
    %v2224 = vmul.f32 %v2221, %v2210
    %v2225 = vadd.f32 %v2208, %v2224
    %v2226 = vtanh.pop %v2225
    %v2227 = vsub.f32 1.0, %v2223
    %v2228 = vmul.f32 %v2227, %v2226
    %v2229 = vmul.f32 %v2223, %v1906
    %v2230 = vadd.f32 %v2228, %v2229
    %v2231 = vmax.f32 %v2230, 0.0
    %2232 = vmatprep.subr.mxu0 %v432
    %2233 = vmatpush1.msra.mxu0 %v431
    %2234 = vmatprep.subr.mxu0 %v435
    %2235 = vmatpush1.msra.mxu0 %v434
    %2236 = vmatprep.subr.mxu0 %v438
    %2237 = vmatpush1.msra.mxu0 %v437
    %2238 = vmatprep.subr.mxu0 %v441
    %2239 = vmatpush1.msra.mxu0 %v440
    %2240 = vmatprep.subr.mxu0 %v444
    %2241 = vmatpush1.msra.mxu0 %v443
    %2242 = vmatprep.subr.mxu0 %v447
    %2243 = vmatpush1.msra.mxu0 %v446
    %2244 = vmatprep.subr.mxu0 %v450
    %2245 = vmatpush1.msra.mxu0 %v449
    %2246 = vmatprep.subr.mxu0 %v453
    %2247 = vmatpush1.msra.mxu0 %v452
    %2248 = vmatprep.subr.mxu0 %v456
    %2249 = vmatpush1.msra.mxu0 %v455
    %2250 = vmatprep.subr.mxu0 %v459
    %2251 = vmatpush1.msra.mxu0 %v458
    %2252 = vmatprep.subr.mxu0 %v462
    %2253 = vmatpush1.msra.mxu0 %v461
    %2254 = vmatprep.subr.mxu0 %v465
    %2255 = vmatpush1.msra.mxu0 %v464
    %2256 = vmatprep.subr.mxu0 %v468
    %2257 = vmatpush1.msra.mxu0 %v467
    %2258 = vmatprep.subr.mxu0 %v471
    %2259 = vmatpush1.msra.mxu0 %v470
    %2260 = vmatprep.subr.mxu0 %v474
    %2261 = vmatpush1.msra.mxu0 %v473
    %2262 = vmatprep.subr.mxu0 %v477
    %2263 = vmatpush1.msra.mxu0 %v476
    %2264 = vmatprep.subr.mxu0 0.0
    %2265 = vmatpush1.msra.mxu0 0.0
    %2266 = vmatprep.subr.mxu0 0.0
    %2267 = vmatpush1.msra.mxu0 0.0
    %2268 = vmatprep.subr.mxu0 0.0
    %2269 = vmatpush1.msra.mxu0 0.0
    %2270 = vmatprep.subr.mxu0 0.0
    %2271 = vmatpush1.msra.mxu0 0.0
    %2272 = vmatprep.subr.mxu0 0.0
    %2273 = vmatpush1.msra.mxu0 0.0
    %2274 = vmatprep.subr.mxu0 0.0
    %2275 = vmatpush1.msra.mxu0 0.0
    %2276 = vmatprep.subr.mxu0 0.0
    %2277 = vmatpush1.msra.mxu0 0.0
    %2278 = vmatprep.subr.mxu0 0.0
    %2279 = vmatpush1.msra.mxu0 0.0
    %2280 = vmatprep.subr.mxu0 0.0
    %2281 = vmatpush1.msra.mxu0 0.0
    %2282 = vmatprep.subr.mxu0 0.0
    %2283 = vmatpush1.msra.mxu0 0.0
    %2284 = vmatprep.subr.mxu0 0.0
    %2285 = vmatpush1.msra.mxu0 0.0
    %2286 = vmatprep.subr.mxu0 0.0
    %2287 = vmatpush1.msra.mxu0 0.0
    %2288 = vmatprep.subr.mxu0 0.0
    %2289 = vmatpush1.msra.mxu0 0.0
    %2290 = vmatprep.subr.mxu0 0.0
    %2291 = vmatpush1.msra.mxu0 0.0
    %2292 = vmatprep.subr.mxu0 0.0
    %2293 = vmatpush1.msra.mxu0 0.0
    %2294 = vmatprep.subr.mxu0 0.0
    %2295 = vmatpush1.msra.mxu0 0.0
    %2296 = vmatprep.mubr.f32.mxu0 0.0
    %2297 = vmatmul.mubr.f32.gmra.mrb[0].mxu0 %v2069
    %v2298 = vpop.f32.mrb[0].mxu0
    %v2299 = vadd.f32 %v397, %v2298
    %v2300 = vpop.f32.mrb[0].mxu0
    %v2301 = vadd.f32 %v401, %v2300
    %2302 = vdwg.mxu0
    %2303 = vmatprep.subr.mxu0 0.0
    %2304 = vmatpush1.msra.mxu0 %v433
    %2305 = vmatprep.subr.mxu0 0.0
    %2306 = vmatpush1.msra.mxu0 %v436
    %2307 = vmatprep.subr.mxu0 0.0
    %2308 = vmatpush1.msra.mxu0 %v439
    %2309 = vmatprep.subr.mxu0 0.0
    %2310 = vmatpush1.msra.mxu0 %v442
    %2311 = vmatprep.subr.mxu0 0.0
    %2312 = vmatpush1.msra.mxu0 %v445
    %2313 = vmatprep.subr.mxu0 0.0
    %2314 = vmatpush1.msra.mxu0 %v448
    %2315 = vmatprep.subr.mxu0 0.0
    %2316 = vmatpush1.msra.mxu0 %v451
    %2317 = vmatprep.subr.mxu0 0.0
    %2318 = vmatpush1.msra.mxu0 %v454
    %2319 = vmatprep.subr.mxu0 0.0
    %2320 = vmatpush1.msra.mxu0 %v457
    %2321 = vmatprep.subr.mxu0 0.0
    %2322 = vmatpush1.msra.mxu0 %v460
    %2323 = vmatprep.subr.mxu0 0.0
    %2324 = vmatpush1.msra.mxu0 %v463
    %2325 = vmatprep.subr.mxu0 0.0
    %2326 = vmatpush1.msra.mxu0 %v466
    %2327 = vmatprep.subr.mxu0 0.0
    %2328 = vmatpush1.msra.mxu0 %v469
    %2329 = vmatprep.subr.mxu0 0.0
    %2330 = vmatpush1.msra.mxu0 %v472
    %2331 = vmatprep.subr.mxu0 0.0
    %2332 = vmatpush1.msra.mxu0 %v475
    %2333 = vmatprep.subr.mxu0 0.0
    %2334 = vmatpush1.msra.mxu0 %v478
    %2335 = vmatprep.subr.mxu0 0.0
    %2336 = vmatpush1.msra.mxu0 0.0
    %2337 = vmatprep.subr.mxu0 0.0
    %2338 = vmatpush1.msra.mxu0 0.0
    %2339 = vmatprep.subr.mxu0 0.0
    %2340 = vmatpush1.msra.mxu0 0.0
    %2341 = vmatprep.subr.mxu0 0.0
    %2342 = vmatpush1.msra.mxu0 0.0
    %2343 = vmatprep.subr.mxu0 0.0
    %2344 = vmatpush1.msra.mxu0 0.0
    %2345 = vmatprep.subr.mxu0 0.0
    %2346 = vmatpush1.msra.mxu0 0.0
    %2347 = vmatprep.subr.mxu0 0.0
    %2348 = vmatpush1.msra.mxu0 0.0
    %2349 = vmatprep.subr.mxu0 0.0
    %2350 = vmatpush1.msra.mxu0 0.0
    %2351 = vmatprep.subr.mxu0 0.0
    %2352 = vmatpush1.msra.mxu0 0.0
    %2353 = vmatprep.subr.mxu0 0.0
    %2354 = vmatpush1.msra.mxu0 0.0
    %2355 = vmatprep.subr.mxu0 0.0
    %2356 = vmatpush1.msra.mxu0 0.0
    %2357 = vmatprep.subr.mxu0 0.0
    %2358 = vmatpush1.msra.mxu0 0.0
    %2359 = vmatprep.subr.mxu0 0.0
    %2360 = vmatpush1.msra.mxu0 0.0
    %2361 = vmatprep.subr.mxu0 0.0
    %2362 = vmatpush1.msra.mxu0 0.0
    %2363 = vmatprep.subr.mxu0 0.0
    %2364 = vmatpush1.msra.mxu0 0.0
    %2365 = vmatprep.subr.mxu0 0.0
    %2366 = vmatpush1.msra.mxu0 0.0
    %2367 = vmatprep.mubr.f32.mxu0 0.0
    %2368 = vmatmul.mubr.f32.gmra.mrb[0].mxu0 %v2069
    %v2369 = vpop.f32.mrb[0].mxu0
    %v2370 = vadd.f32 %v405, %v2369
    %v2371 = vpop.f32.mrb[0].mxu0
    %2372 = vdwg.mxu0
    %v2373 = vadd.f32 %v271, %v2299
    %v2374 = vadd.f32 %v273, %v2301
    %v2375 = vxor.u32 %v2373, 2147483648
    %v2376 = vxor.u32 %v2374, 2147483648
    %v2377 = vmul.f32 %v2375, 1.442695
    %v2378 = vpow.pop %v2377
    %v2379 = vmul.f32 %v2376, 1.442695
    %v2380 = vpow.pop %v2379
    %v2381 = vadd.f32 %v2378, 1.0
    %v2382 = vadd.f32 %v2380, 1.0
    %v2383 = vrcp.pop %v2381
    %v2384 = vmul.f32 1.0, %v2383
    %v2385 = vrcp.pop %v2382
    %v2386 = vmul.f32 1.0, %v2385
    %v2387 = vmul.f32 %v2384, %v2370
    %v2388 = vadd.f32 %v379, %v2387
    %v2389 = vtanh.pop %v2388
    %v2390 = vsub.f32 1.0, %v2386
    %v2391 = vmul.f32 %v2390, %v2389
    %v2392 = vmul.f32 %v2386, %v2069
    %v2393 = vadd.f32 %v2391, %v2392
    %v2394 = vmax.f32 %v2393, 0.0
    %2395 = vmatprep.subr.mxu0 %v643
    %2396 = vmatpush1.msra.mxu0 %v642
    %2397 = vmatprep.subr.mxu0 %v647
    %2398 = vmatpush1.msra.mxu0 %v646
    %2399 = vmatprep.subr.mxu0 %v651
    %2400 = vmatpush1.msra.mxu0 %v650
    %2401 = vmatprep.subr.mxu0 %v655
    %2402 = vmatpush1.msra.mxu0 %v654
    %2403 = vmatprep.subr.mxu0 %v659
    %2404 = vmatpush1.msra.mxu0 %v658
    %2405 = vmatprep.subr.mxu0 %v663
    %2406 = vmatpush1.msra.mxu0 %v662
    %2407 = vmatprep.subr.mxu0 %v667
    %2408 = vmatpush1.msra.mxu0 %v666
    %2409 = vmatprep.subr.mxu0 %v671
    %2410 = vmatpush1.msra.mxu0 %v670
    %2411 = vmatprep.subr.mxu0 %v675
    %2412 = vmatpush1.msra.mxu0 %v674
    %2413 = vmatprep.subr.mxu0 %v679
    %2414 = vmatpush1.msra.mxu0 %v678
    %2415 = vmatprep.subr.mxu0 %v683
    %2416 = vmatpush1.msra.mxu0 %v682
    %2417 = vmatprep.subr.mxu0 %v687
    %2418 = vmatpush1.msra.mxu0 %v686
    %2419 = vmatprep.subr.mxu0 %v691
    %2420 = vmatpush1.msra.mxu0 %v690
    %2421 = vmatprep.subr.mxu0 %v695
    %2422 = vmatpush1.msra.mxu0 %v694
    %2423 = vmatprep.subr.mxu0 %v699
    %2424 = vmatpush1.msra.mxu0 %v698
    %2425 = vmatprep.subr.mxu0 %v703
    %2426 = vmatpush1.msra.mxu0 %v702
    %2427 = vmatprep.subr.mxu0 %v707
    %2428 = vmatpush1.msra.mxu0 %v706
    %2429 = vmatprep.subr.mxu0 %v711
    %2430 = vmatpush1.msra.mxu0 %v710
    %2431 = vmatprep.subr.mxu0 %v715
    %2432 = vmatpush1.msra.mxu0 %v714
    %2433 = vmatprep.subr.mxu0 %v719
    %2434 = vmatpush1.msra.mxu0 %v718
    %2435 = vmatprep.subr.mxu0 %v723
    %2436 = vmatpush1.msra.mxu0 %v722
    %2437 = vmatprep.subr.mxu0 %v727
    %2438 = vmatpush1.msra.mxu0 %v726
    %2439 = vmatprep.subr.mxu0 %v731
    %2440 = vmatpush1.msra.mxu0 %v730
    %2441 = vmatprep.subr.mxu0 %v735
    %2442 = vmatpush1.msra.mxu0 %v734
    %2443 = vmatprep.subr.mxu0 %v739
    %2444 = vmatpush1.msra.mxu0 %v738
    %2445 = vmatprep.subr.mxu0 %v743
    %2446 = vmatpush1.msra.mxu0 %v742
    %2447 = vmatprep.subr.mxu0 %v747
    %2448 = vmatpush1.msra.mxu0 %v746
    %2449 = vmatprep.subr.mxu0 %v751
    %2450 = vmatpush1.msra.mxu0 %v750
    %2451 = vmatprep.subr.mxu0 %v755
    %2452 = vmatpush1.msra.mxu0 %v754
    %2453 = vmatprep.subr.mxu0 %v759
    %2454 = vmatpush1.msra.mxu0 %v758
    %2455 = vmatprep.subr.mxu0 %v763
    %2456 = vmatpush1.msra.mxu0 %v762
    %2457 = vmatprep.subr.mxu0 %v767
    %2458 = vmatpush1.msra.mxu0 %v766
    %2459 = vmatprep.mubr.f32.mxu0 %v2231
    %2460 = vmatmul.mubr.f32.gmra.mrb[0].mxu0 %v2394
    %v2461 = vpop.f32.mrb[0].mxu0
    %v2462 = vadd.f32 %v414, %v2461
    %v2463 = vpop.f32.mrb[0].mxu0
    %v2464 = vadd.f32 %v418, %v2463
    %2465 = vdwg.mxu0
    %2466 = vmatprep.subr.mxu0 %v645
    %2467 = vmatpush1.msra.mxu0 %v644
    %2468 = vmatprep.subr.mxu0 %v649
    %2469 = vmatpush1.msra.mxu0 %v648
    %2470 = vmatprep.subr.mxu0 %v653
    %2471 = vmatpush1.msra.mxu0 %v652
    %2472 = vmatprep.subr.mxu0 %v657
    %2473 = vmatpush1.msra.mxu0 %v656
    %2474 = vmatprep.subr.mxu0 %v661
    %2475 = vmatpush1.msra.mxu0 %v660
    %2476 = vmatprep.subr.mxu0 %v665
    %2477 = vmatpush1.msra.mxu0 %v664
    %2478 = vmatprep.subr.mxu0 %v669
    %2479 = vmatpush1.msra.mxu0 %v668
    %2480 = vmatprep.subr.mxu0 %v673
    %2481 = vmatpush1.msra.mxu0 %v672
    %2482 = vmatprep.subr.mxu0 %v677
    %2483 = vmatpush1.msra.mxu0 %v676
    %2484 = vmatprep.subr.mxu0 %v681
    %2485 = vmatpush1.msra.mxu0 %v680
    %2486 = vmatprep.subr.mxu0 %v685
    %2487 = vmatpush1.msra.mxu0 %v684
    %2488 = vmatprep.subr.mxu0 %v689
    %2489 = vmatpush1.msra.mxu0 %v688
    %2490 = vmatprep.subr.mxu0 %v693
    %2491 = vmatpush1.msra.mxu0 %v692
    %2492 = vmatprep.subr.mxu0 %v697
    %2493 = vmatpush1.msra.mxu0 %v696
    %2494 = vmatprep.subr.mxu0 %v701
    %2495 = vmatpush1.msra.mxu0 %v700
    %2496 = vmatprep.subr.mxu0 %v705
    %2497 = vmatpush1.msra.mxu0 %v704
    %2498 = vmatprep.subr.mxu0 %v709
    %2499 = vmatpush1.msra.mxu0 %v708
    %2500 = vmatprep.subr.mxu0 %v713
    %2501 = vmatpush1.msra.mxu0 %v712
    %2502 = vmatprep.subr.mxu0 %v717
    %2503 = vmatpush1.msra.mxu0 %v716
    %2504 = vmatprep.subr.mxu0 %v721
    %2505 = vmatpush1.msra.mxu0 %v720
    %2506 = vmatprep.subr.mxu0 %v725
    %2507 = vmatpush1.msra.mxu0 %v724
    %2508 = vmatprep.subr.mxu0 %v729
    %2509 = vmatpush1.msra.mxu0 %v728
    %2510 = vmatprep.subr.mxu0 %v733
    %2511 = vmatpush1.msra.mxu0 %v732
    %2512 = vmatprep.subr.mxu0 %v737
    %2513 = vmatpush1.msra.mxu0 %v736
    %2514 = vmatprep.subr.mxu0 %v741
    %2515 = vmatpush1.msra.mxu0 %v740
    %2516 = vmatprep.subr.mxu0 %v745
    %2517 = vmatpush1.msra.mxu0 %v744
    %2518 = vmatprep.subr.mxu0 %v749
    %2519 = vmatpush1.msra.mxu0 %v748
    %2520 = vmatprep.subr.mxu0 %v753
    %2521 = vmatpush1.msra.mxu0 %v752
    %2522 = vmatprep.subr.mxu0 %v757
    %2523 = vmatpush1.msra.mxu0 %v756
    %2524 = vmatprep.subr.mxu0 %v761
    %2525 = vmatpush1.msra.mxu0 %v760
    %2526 = vmatprep.subr.mxu0 %v765
    %2527 = vmatpush1.msra.mxu0 %v764
    %2528 = vmatprep.subr.mxu0 %v769
    %2529 = vmatpush1.msra.mxu0 %v768
    %2530 = vmatprep.mubr.f32.mxu0 %v2231
    %2531 = vmatmul.mubr.f32.gmra.mrb[0].mxu0 %v2394
    %v2532 = vpop.f32.mrb[0].mxu0
    %v2533 = vadd.f32 %v422, %v2532
    %v2534 = vpop.f32.mrb[0].mxu0
    %v2535 = vadd.f32 %v426, %v2534
    %2536 = vdwg.mxu0
    %v2537 = vxor.u32 %v2462, 2147483648
    %v2538 = vxor.u32 %v2464, 2147483648
    %v2539 = vmul.f32 %v2537, 1.442695
    %v2540 = vpow.pop %v2539
    %v2541 = vmul.f32 %v2538, 1.442695
    %v2542 = vpow.pop %v2541
    %v2543 = vadd.f32 %v2540, 1.0
    %v2544 = vadd.f32 %v2542, 1.0
    %v2545 = vrcp.pop %v2543
    %v2546 = vmul.f32 1.0, %v2545
    %v2547 = vrcp.pop %v2544
    %v2548 = vmul.f32 1.0, %v2547
    %v2549 = vmul.f32 %v2546, %v2535
    %v2550 = vadd.f32 %v2533, %v2549
    %v2551 = vtanh.pop %v2550
    %v2552 = vsub.f32 1.0, %v2548
    %v2553 = vmul.f32 %v2552, %v2551
    %v2554 = vmul.f32 %v2548, %v2231
    %v2555 = vadd.f32 %v2553, %v2554
    %v2556 = vmax.f32 %v2555, 0.0
    %2557 = vmatprep.subr.mxu0 %v432
    %2558 = vmatpush1.msra.mxu0 %v431
    %2559 = vmatprep.subr.mxu0 %v435
    %2560 = vmatpush1.msra.mxu0 %v434
    %2561 = vmatprep.subr.mxu0 %v438
    %2562 = vmatpush1.msra.mxu0 %v437
    %2563 = vmatprep.subr.mxu0 %v441
    %2564 = vmatpush1.msra.mxu0 %v440
    %2565 = vmatprep.subr.mxu0 %v444
    %2566 = vmatpush1.msra.mxu0 %v443
    %2567 = vmatprep.subr.mxu0 %v447
    %2568 = vmatpush1.msra.mxu0 %v446
    %2569 = vmatprep.subr.mxu0 %v450
    %2570 = vmatpush1.msra.mxu0 %v449
    %2571 = vmatprep.subr.mxu0 %v453
    %2572 = vmatpush1.msra.mxu0 %v452
    %2573 = vmatprep.subr.mxu0 %v456
    %2574 = vmatpush1.msra.mxu0 %v455
    %2575 = vmatprep.subr.mxu0 %v459
    %2576 = vmatpush1.msra.mxu0 %v458
    %2577 = vmatprep.subr.mxu0 %v462
    %2578 = vmatpush1.msra.mxu0 %v461
    %2579 = vmatprep.subr.mxu0 %v465
    %2580 = vmatpush1.msra.mxu0 %v464
    %2581 = vmatprep.subr.mxu0 %v468
    %2582 = vmatpush1.msra.mxu0 %v467
    %2583 = vmatprep.subr.mxu0 %v471
    %2584 = vmatpush1.msra.mxu0 %v470
    %2585 = vmatprep.subr.mxu0 %v474
    %2586 = vmatpush1.msra.mxu0 %v473
    %2587 = vmatprep.subr.mxu0 %v477
    %2588 = vmatpush1.msra.mxu0 %v476
    %2589 = vmatprep.subr.mxu0 0.0
    %2590 = vmatpush1.msra.mxu0 0.0
    %2591 = vmatprep.subr.mxu0 0.0
    %2592 = vmatpush1.msra.mxu0 0.0
    %2593 = vmatprep.subr.mxu0 0.0
    %2594 = vmatpush1.msra.mxu0 0.0
    %2595 = vmatprep.subr.mxu0 0.0
    %2596 = vmatpush1.msra.mxu0 0.0
    %2597 = vmatprep.subr.mxu0 0.0
    %2598 = vmatpush1.msra.mxu0 0.0
    %2599 = vmatprep.subr.mxu0 0.0
    %2600 = vmatpush1.msra.mxu0 0.0
    %2601 = vmatprep.subr.mxu0 0.0
    %2602 = vmatpush1.msra.mxu0 0.0
    %2603 = vmatprep.subr.mxu0 0.0
    %2604 = vmatpush1.msra.mxu0 0.0
    %2605 = vmatprep.subr.mxu0 0.0
    %2606 = vmatpush1.msra.mxu0 0.0
    %2607 = vmatprep.subr.mxu0 0.0
    %2608 = vmatpush1.msra.mxu0 0.0
    %2609 = vmatprep.subr.mxu0 0.0
    %2610 = vmatpush1.msra.mxu0 0.0
    %2611 = vmatprep.subr.mxu0 0.0
    %2612 = vmatpush1.msra.mxu0 0.0
    %2613 = vmatprep.subr.mxu0 0.0
    %2614 = vmatpush1.msra.mxu0 0.0
    %2615 = vmatprep.subr.mxu0 0.0
    %2616 = vmatpush1.msra.mxu0 0.0
    %2617 = vmatprep.subr.mxu0 0.0
    %2618 = vmatpush1.msra.mxu0 0.0
    %2619 = vmatprep.subr.mxu0 0.0
    %2620 = vmatpush1.msra.mxu0 0.0
    %2621 = vmatprep.mubr.f32.mxu0 0.0
    %2622 = vmatmul.mubr.f32.gmra.mrb[0].mxu0 %v2394
    %v2623 = vpop.f32.mrb[0].mxu0
    %v2624 = vadd.f32 %v397, %v2623
    %v2625 = vpop.f32.mrb[0].mxu0
    %v2626 = vadd.f32 %v401, %v2625
    %2627 = vdwg.mxu0
    %2628 = vmatprep.subr.mxu0 0.0
    %2629 = vmatpush1.msra.mxu0 %v433
    %2630 = vmatprep.subr.mxu0 0.0
    %2631 = vmatpush1.msra.mxu0 %v436
    %2632 = vmatprep.subr.mxu0 0.0
    %2633 = vmatpush1.msra.mxu0 %v439
    %2634 = vmatprep.subr.mxu0 0.0
    %2635 = vmatpush1.msra.mxu0 %v442
    %2636 = vmatprep.subr.mxu0 0.0
    %2637 = vmatpush1.msra.mxu0 %v445
    %2638 = vmatprep.subr.mxu0 0.0
    %2639 = vmatpush1.msra.mxu0 %v448
    %2640 = vmatprep.subr.mxu0 0.0
    %2641 = vmatpush1.msra.mxu0 %v451
    %2642 = vmatprep.subr.mxu0 0.0
    %2643 = vmatpush1.msra.mxu0 %v454
    %2644 = vmatprep.subr.mxu0 0.0
    %2645 = vmatpush1.msra.mxu0 %v457
    %2646 = vmatprep.subr.mxu0 0.0
    %2647 = vmatpush1.msra.mxu0 %v460
    %2648 = vmatprep.subr.mxu0 0.0
    %2649 = vmatpush1.msra.mxu0 %v463
    %2650 = vmatprep.subr.mxu0 0.0
    %2651 = vmatpush1.msra.mxu0 %v466
    %2652 = vmatprep.subr.mxu0 0.0
    %2653 = vmatpush1.msra.mxu0 %v469
    %2654 = vmatprep.subr.mxu0 0.0
    %2655 = vmatpush1.msra.mxu0 %v472
    %2656 = vmatprep.subr.mxu0 0.0
    %2657 = vmatpush1.msra.mxu0 %v475
    %2658 = vmatprep.subr.mxu0 0.0
    %2659 = vmatpush1.msra.mxu0 %v478
    %2660 = vmatprep.subr.mxu0 0.0
    %2661 = vmatpush1.msra.mxu0 0.0
    %2662 = vmatprep.subr.mxu0 0.0
    %2663 = vmatpush1.msra.mxu0 0.0
    %2664 = vmatprep.subr.mxu0 0.0
    %2665 = vmatpush1.msra.mxu0 0.0
    %2666 = vmatprep.subr.mxu0 0.0
    %2667 = vmatpush1.msra.mxu0 0.0
    %2668 = vmatprep.subr.mxu0 0.0
    %2669 = vmatpush1.msra.mxu0 0.0
    %2670 = vmatprep.subr.mxu0 0.0
    %2671 = vmatpush1.msra.mxu0 0.0
    %2672 = vmatprep.subr.mxu0 0.0
    %2673 = vmatpush1.msra.mxu0 0.0
    %2674 = vmatprep.subr.mxu0 0.0
    %2675 = vmatpush1.msra.mxu0 0.0
    %2676 = vmatprep.subr.mxu0 0.0
    %2677 = vmatpush1.msra.mxu0 0.0
    %2678 = vmatprep.subr.mxu0 0.0
    %2679 = vmatpush1.msra.mxu0 0.0
    %2680 = vmatprep.subr.mxu0 0.0
    %2681 = vmatpush1.msra.mxu0 0.0
    %2682 = vmatprep.subr.mxu0 0.0
    %2683 = vmatpush1.msra.mxu0 0.0
    %2684 = vmatprep.subr.mxu0 0.0
    %2685 = vmatpush1.msra.mxu0 0.0
    %2686 = vmatprep.subr.mxu0 0.0
    %2687 = vmatpush1.msra.mxu0 0.0
    %2688 = vmatprep.subr.mxu0 0.0
    %2689 = vmatpush1.msra.mxu0 0.0
    %2690 = vmatprep.subr.mxu0 0.0
    %2691 = vmatpush1.msra.mxu0 0.0
    %2692 = vmatprep.mubr.f32.mxu0 0.0
    %2693 = vmatmul.mubr.f32.gmra.mrb[0].mxu0 %v2394
    %v2694 = vpop.f32.mrb[0].mxu0
    %v2695 = vadd.f32 %v405, %v2694
    %v2696 = vpop.f32.mrb[0].mxu0
    %2697 = vdwg.mxu0
    %v2698 = vadd.f32 %v277, %v2624
    %v2699 = vadd.f32 %v279, %v2626
    %v2700 = vxor.u32 %v2698, 2147483648
    %v2701 = vxor.u32 %v2699, 2147483648
    %v2702 = vmul.f32 %v2700, 1.442695
    %v2703 = vpow.pop %v2702
    %v2704 = vmul.f32 %v2701, 1.442695
    %v2705 = vpow.pop %v2704
    %v2706 = vadd.f32 %v2703, 1.0
    %v2707 = vadd.f32 %v2705, 1.0
    %v2708 = vrcp.pop %v2706
    %v2709 = vmul.f32 1.0, %v2708
    %v2710 = vrcp.pop %v2707
    %v2711 = vmul.f32 1.0, %v2710
    %v2712 = vmul.f32 %v2709, %v2695
    %v2713 = vadd.f32 %v384, %v2712
    %v2714 = vtanh.pop %v2713
    %v2715 = vsub.f32 1.0, %v2711
    %v2716 = vmul.f32 %v2715, %v2714
    %v2717 = vmul.f32 %v2711, %v2394
    %v2718 = vadd.f32 %v2716, %v2717
    %v2719 = vmax.f32 %v2718, 0.0
    %2720 = vmatprep.subr.mxu0 %v643
    %2721 = vmatpush1.msra.mxu0 %v642
    %2722 = vmatprep.subr.mxu0 %v647
    %2723 = vmatpush1.msra.mxu0 %v646
    %2724 = vmatprep.subr.mxu0 %v651
    %2725 = vmatpush1.msra.mxu0 %v650
    %2726 = vmatprep.subr.mxu0 %v655
    %2727 = vmatpush1.msra.mxu0 %v654
    %2728 = vmatprep.subr.mxu0 %v659
    %2729 = vmatpush1.msra.mxu0 %v658
    %2730 = vmatprep.subr.mxu0 %v663
    %2731 = vmatpush1.msra.mxu0 %v662
    %2732 = vmatprep.subr.mxu0 %v667
    %2733 = vmatpush1.msra.mxu0 %v666
    %2734 = vmatprep.subr.mxu0 %v671
    %2735 = vmatpush1.msra.mxu0 %v670
    %2736 = vmatprep.subr.mxu0 %v675
    %2737 = vmatpush1.msra.mxu0 %v674
    %2738 = vmatprep.subr.mxu0 %v679
    %2739 = vmatpush1.msra.mxu0 %v678
    %2740 = vmatprep.subr.mxu0 %v683
    %2741 = vmatpush1.msra.mxu0 %v682
    %2742 = vmatprep.subr.mxu0 %v687
    %2743 = vmatpush1.msra.mxu0 %v686
    %2744 = vmatprep.subr.mxu0 %v691
    %2745 = vmatpush1.msra.mxu0 %v690
    %2746 = vmatprep.subr.mxu0 %v695
    %2747 = vmatpush1.msra.mxu0 %v694
    %2748 = vmatprep.subr.mxu0 %v699
    %2749 = vmatpush1.msra.mxu0 %v698
    %2750 = vmatprep.subr.mxu0 %v703
    %2751 = vmatpush1.msra.mxu0 %v702
    %2752 = vmatprep.subr.mxu0 %v707
    %2753 = vmatpush1.msra.mxu0 %v706
    %2754 = vmatprep.subr.mxu0 %v711
    %2755 = vmatpush1.msra.mxu0 %v710
    %2756 = vmatprep.subr.mxu0 %v715
    %2757 = vmatpush1.msra.mxu0 %v714
    %2758 = vmatprep.subr.mxu0 %v719
    %2759 = vmatpush1.msra.mxu0 %v718
    %2760 = vmatprep.subr.mxu0 %v723
    %2761 = vmatpush1.msra.mxu0 %v722
    %2762 = vmatprep.subr.mxu0 %v727
    %2763 = vmatpush1.msra.mxu0 %v726
    %2764 = vmatprep.subr.mxu0 %v731
    %2765 = vmatpush1.msra.mxu0 %v730
    %2766 = vmatprep.subr.mxu0 %v735
    %2767 = vmatpush1.msra.mxu0 %v734
    %2768 = vmatprep.subr.mxu0 %v739
    %2769 = vmatpush1.msra.mxu0 %v738
    %2770 = vmatprep.subr.mxu0 %v743
    %2771 = vmatpush1.msra.mxu0 %v742
    %2772 = vmatprep.subr.mxu0 %v747
    %2773 = vmatpush1.msra.mxu0 %v746
    %2774 = vmatprep.subr.mxu0 %v751
    %2775 = vmatpush1.msra.mxu0 %v750
    %2776 = vmatprep.subr.mxu0 %v755
    %2777 = vmatpush1.msra.mxu0 %v754
    %2778 = vmatprep.subr.mxu0 %v759
    %2779 = vmatpush1.msra.mxu0 %v758
    %2780 = vmatprep.subr.mxu0 %v763
    %2781 = vmatpush1.msra.mxu0 %v762
    %2782 = vmatprep.subr.mxu0 %v767
    %2783 = vmatpush1.msra.mxu0 %v766
    %2784 = vmatprep.mubr.f32.mxu0 %v2556
    %2785 = vmatmul.mubr.f32.gmra.mrb[0].mxu0 %v2719
    %v2786 = vpop.f32.mrb[0].mxu0
    %v2787 = vadd.f32 %v414, %v2786
    %v2788 = vpop.f32.mrb[0].mxu0
    %v2789 = vadd.f32 %v418, %v2788
    %2790 = vdwg.mxu0
    %2791 = vmatprep.subr.mxu0 %v645
    %2792 = vmatpush1.msra.mxu0 %v644
    %2793 = vmatprep.subr.mxu0 %v649
    %2794 = vmatpush1.msra.mxu0 %v648
    %2795 = vmatprep.subr.mxu0 %v653
    %2796 = vmatpush1.msra.mxu0 %v652
    %2797 = vmatprep.subr.mxu0 %v657
    %2798 = vmatpush1.msra.mxu0 %v656
    %2799 = vmatprep.subr.mxu0 %v661
    %2800 = vmatpush1.msra.mxu0 %v660
    %2801 = vmatprep.subr.mxu0 %v665
    %2802 = vmatpush1.msra.mxu0 %v664
    %2803 = vmatprep.subr.mxu0 %v669
    %2804 = vmatpush1.msra.mxu0 %v668
    %2805 = vmatprep.subr.mxu0 %v673
    %2806 = vmatpush1.msra.mxu0 %v672
    %2807 = vmatprep.subr.mxu0 %v677
    %2808 = vmatpush1.msra.mxu0 %v676
    %2809 = vmatprep.subr.mxu0 %v681
    %2810 = vmatpush1.msra.mxu0 %v680
    %2811 = vmatprep.subr.mxu0 %v685
    %2812 = vmatpush1.msra.mxu0 %v684
    %2813 = vmatprep.subr.mxu0 %v689
    %2814 = vmatpush1.msra.mxu0 %v688
    %2815 = vmatprep.subr.mxu0 %v693
    %2816 = vmatpush1.msra.mxu0 %v692
    %2817 = vmatprep.subr.mxu0 %v697
    %2818 = vmatpush1.msra.mxu0 %v696
    %2819 = vmatprep.subr.mxu0 %v701
    %2820 = vmatpush1.msra.mxu0 %v700
    %2821 = vmatprep.subr.mxu0 %v705
    %2822 = vmatpush1.msra.mxu0 %v704
    %2823 = vmatprep.subr.mxu0 %v709
    %2824 = vmatpush1.msra.mxu0 %v708
    %2825 = vmatprep.subr.mxu0 %v713
    %2826 = vmatpush1.msra.mxu0 %v712
    %2827 = vmatprep.subr.mxu0 %v717
    %2828 = vmatpush1.msra.mxu0 %v716
    %2829 = vmatprep.subr.mxu0 %v721
    %2830 = vmatpush1.msra.mxu0 %v720
    %2831 = vmatprep.subr.mxu0 %v725
    %2832 = vmatpush1.msra.mxu0 %v724
    %2833 = vmatprep.subr.mxu0 %v729
    %2834 = vmatpush1.msra.mxu0 %v728
    %2835 = vmatprep.subr.mxu0 %v733
    %2836 = vmatpush1.msra.mxu0 %v732
    %2837 = vmatprep.subr.mxu0 %v737
    %2838 = vmatpush1.msra.mxu0 %v736
    %2839 = vmatprep.subr.mxu0 %v741
    %2840 = vmatpush1.msra.mxu0 %v740
    %2841 = vmatprep.subr.mxu0 %v745
    %2842 = vmatpush1.msra.mxu0 %v744
    %2843 = vmatprep.subr.mxu0 %v749
    %2844 = vmatpush1.msra.mxu0 %v748
    %2845 = vmatprep.subr.mxu0 %v753
    %2846 = vmatpush1.msra.mxu0 %v752
    %2847 = vmatprep.subr.mxu0 %v757
    %2848 = vmatpush1.msra.mxu0 %v756
    %2849 = vmatprep.subr.mxu0 %v761
    %2850 = vmatpush1.msra.mxu0 %v760
    %2851 = vmatprep.subr.mxu0 %v765
    %2852 = vmatpush1.msra.mxu0 %v764
    %2853 = vmatprep.subr.mxu0 %v769
    %2854 = vmatpush1.msra.mxu0 %v768
    %2855 = vmatprep.mubr.f32.mxu0 %v2556
    %2856 = vmatmul.mubr.f32.gmra.mrb[0].mxu0 %v2719
    %v2857 = vpop.f32.mrb[0].mxu0
    %v2858 = vadd.f32 %v422, %v2857
    %v2859 = vpop.f32.mrb[0].mxu0
    %v2860 = vadd.f32 %v426, %v2859
    %2861 = vdwg.mxu0
    %v2862 = vxor.u32 %v2787, 2147483648
    %v2863 = vxor.u32 %v2789, 2147483648
    %v2864 = vmul.f32 %v2862, 1.442695
    %v2865 = vpow.pop %v2864
    %v2866 = vmul.f32 %v2863, 1.442695
    %v2867 = vpow.pop %v2866
    %v2868 = vadd.f32 %v2865, 1.0
    %v2869 = vadd.f32 %v2867, 1.0
    %v2870 = vrcp.pop %v2868
    %v2871 = vmul.f32 1.0, %v2870
    %v2872 = vrcp.pop %v2869
    %v2873 = vmul.f32 1.0, %v2872
    %v2874 = vmul.f32 %v2871, %v2860
    %v2875 = vadd.f32 %v2858, %v2874
    %v2876 = vtanh.pop %v2875
    %v2877 = vsub.f32 1.0, %v2873
    %v2878 = vmul.f32 %v2877, %v2876
    %v2879 = vmul.f32 %v2873, %v2556
    %v2880 = vadd.f32 %v2878, %v2879
    %v2881 = vmax.f32 %v2880, 0.0
    %2882 = vmatprep.subr.mxu0 %v432
    %2883 = vmatpush1.msra.mxu0 %v431
    %2884 = vmatprep.subr.mxu0 %v435
    %2885 = vmatpush1.msra.mxu0 %v434
    %2886 = vmatprep.subr.mxu0 %v438
    %2887 = vmatpush1.msra.mxu0 %v437
    %2888 = vmatprep.subr.mxu0 %v441
    %2889 = vmatpush1.msra.mxu0 %v440
    %2890 = vmatprep.subr.mxu0 %v444
    %2891 = vmatpush1.msra.mxu0 %v443
    %2892 = vmatprep.subr.mxu0 %v447
    %2893 = vmatpush1.msra.mxu0 %v446
    %2894 = vmatprep.subr.mxu0 %v450
    %2895 = vmatpush1.msra.mxu0 %v449
    %2896 = vmatprep.subr.mxu0 %v453
    %2897 = vmatpush1.msra.mxu0 %v452
    %2898 = vmatprep.subr.mxu0 %v456
    %2899 = vmatpush1.msra.mxu0 %v455
    %2900 = vmatprep.subr.mxu0 %v459
    %2901 = vmatpush1.msra.mxu0 %v458
    %2902 = vmatprep.subr.mxu0 %v462
    %2903 = vmatpush1.msra.mxu0 %v461
    %2904 = vmatprep.subr.mxu0 %v465
    %2905 = vmatpush1.msra.mxu0 %v464
    %2906 = vmatprep.subr.mxu0 %v468
    %2907 = vmatpush1.msra.mxu0 %v467
    %2908 = vmatprep.subr.mxu0 %v471
    %2909 = vmatpush1.msra.mxu0 %v470
    %2910 = vmatprep.subr.mxu0 %v474
    %2911 = vmatpush1.msra.mxu0 %v473
    %2912 = vmatprep.subr.mxu0 %v477
    %2913 = vmatpush1.msra.mxu0 %v476
    %2914 = vmatprep.subr.mxu0 0.0
    %2915 = vmatpush1.msra.mxu0 0.0
    %2916 = vmatprep.subr.mxu0 0.0
    %2917 = vmatpush1.msra.mxu0 0.0
    %2918 = vmatprep.subr.mxu0 0.0
    %2919 = vmatpush1.msra.mxu0 0.0
    %2920 = vmatprep.subr.mxu0 0.0
    %2921 = vmatpush1.msra.mxu0 0.0
    %2922 = vmatprep.subr.mxu0 0.0
    %2923 = vmatpush1.msra.mxu0 0.0
    %2924 = vmatprep.subr.mxu0 0.0
    %2925 = vmatpush1.msra.mxu0 0.0
    %2926 = vmatprep.subr.mxu0 0.0
    %2927 = vmatpush1.msra.mxu0 0.0
    %2928 = vmatprep.subr.mxu0 0.0
    %2929 = vmatpush1.msra.mxu0 0.0
    %2930 = vmatprep.subr.mxu0 0.0
    %2931 = vmatpush1.msra.mxu0 0.0
    %2932 = vmatprep.subr.mxu0 0.0
    %2933 = vmatpush1.msra.mxu0 0.0
    %2934 = vmatprep.subr.mxu0 0.0
    %2935 = vmatpush1.msra.mxu0 0.0
    %2936 = vmatprep.subr.mxu0 0.0
    %2937 = vmatpush1.msra.mxu0 0.0
    %2938 = vmatprep.subr.mxu0 0.0
    %2939 = vmatpush1.msra.mxu0 0.0
    %2940 = vmatprep.subr.mxu0 0.0
    %2941 = vmatpush1.msra.mxu0 0.0
    %2942 = vmatprep.subr.mxu0 0.0
    %2943 = vmatpush1.msra.mxu0 0.0
    %2944 = vmatprep.subr.mxu0 0.0
    %2945 = vmatpush1.msra.mxu0 0.0
    %2946 = vmatprep.mubr.f32.mxu0 0.0
    %2947 = vmatmul.mubr.f32.gmra.mrb[0].mxu0 %v2719
    %v2948 = vpop.f32.mrb[0].mxu0
    %v2949 = vadd.f32 %v397, %v2948
    %v2950 = vpop.f32.mrb[0].mxu0
    %v2951 = vadd.f32 %v401, %v2950
    %2952 = vdwg.mxu0
    %2953 = vmatprep.subr.mxu0 0.0
    %2954 = vmatpush1.msra.mxu0 %v433
    %2955 = vmatprep.subr.mxu0 0.0
    %2956 = vmatpush1.msra.mxu0 %v436
    %2957 = vmatprep.subr.mxu0 0.0
    %2958 = vmatpush1.msra.mxu0 %v439
    %2959 = vmatprep.subr.mxu0 0.0
    %2960 = vmatpush1.msra.mxu0 %v442
    %2961 = vmatprep.subr.mxu0 0.0
    %2962 = vmatpush1.msra.mxu0 %v445
    %2963 = vmatprep.subr.mxu0 0.0
    %2964 = vmatpush1.msra.mxu0 %v448
    %2965 = vmatprep.subr.mxu0 0.0
    %2966 = vmatpush1.msra.mxu0 %v451
    %2967 = vmatprep.subr.mxu0 0.0
    %2968 = vmatpush1.msra.mxu0 %v454
    %2969 = vmatprep.subr.mxu0 0.0
    %2970 = vmatpush1.msra.mxu0 %v457
    %2971 = vmatprep.subr.mxu0 0.0
    %2972 = vmatpush1.msra.mxu0 %v460
    %2973 = vmatprep.subr.mxu0 0.0
    %2974 = vmatpush1.msra.mxu0 %v463
    %2975 = vmatprep.subr.mxu0 0.0
    %2976 = vmatpush1.msra.mxu0 %v466
    %2977 = vmatprep.subr.mxu0 0.0
    %2978 = vmatpush1.msra.mxu0 %v469
    %2979 = vmatprep.subr.mxu0 0.0
    %2980 = vmatpush1.msra.mxu0 %v472
    %2981 = vmatprep.subr.mxu0 0.0
    %2982 = vmatpush1.msra.mxu0 %v475
    %2983 = vmatprep.subr.mxu0 0.0
    %2984 = vmatpush1.msra.mxu0 %v478
    %2985 = vmatprep.subr.mxu0 0.0
    %2986 = vmatpush1.msra.mxu0 0.0
    %2987 = vmatprep.subr.mxu0 0.0
    %2988 = vmatpush1.msra.mxu0 0.0
    %2989 = vmatprep.subr.mxu0 0.0
    %2990 = vmatpush1.msra.mxu0 0.0
    %2991 = vmatprep.subr.mxu0 0.0
    %2992 = vmatpush1.msra.mxu0 0.0
    %2993 = vmatprep.subr.mxu0 0.0
    %2994 = vmatpush1.msra.mxu0 0.0
    %2995 = vmatprep.subr.mxu0 0.0
    %2996 = vmatpush1.msra.mxu0 0.0
    %2997 = vmatprep.subr.mxu0 0.0
    %2998 = vmatpush1.msra.mxu0 0.0
    %2999 = vmatprep.subr.mxu0 0.0
    %3000 = vmatpush1.msra.mxu0 0.0
    %3001 = vmatprep.subr.mxu0 0.0
    %3002 = vmatpush1.msra.mxu0 0.0
    %3003 = vmatprep.subr.mxu0 0.0
    %3004 = vmatpush1.msra.mxu0 0.0
    %3005 = vmatprep.subr.mxu0 0.0
    %3006 = vmatpush1.msra.mxu0 0.0
    %3007 = vmatprep.subr.mxu0 0.0
    %3008 = vmatpush1.msra.mxu0 0.0
    %3009 = vmatprep.subr.mxu0 0.0
    %3010 = vmatpush1.msra.mxu0 0.0
    %3011 = vmatprep.subr.mxu0 0.0
    %3012 = vmatpush1.msra.mxu0 0.0
    %3013 = vmatprep.subr.mxu0 0.0
    %3014 = vmatpush1.msra.mxu0 0.0
    %3015 = vmatprep.subr.mxu0 0.0
    %3016 = vmatpush1.msra.mxu0 0.0
    %3017 = vmatprep.mubr.f32.mxu0 0.0
    %3018 = vmatmul.mubr.f32.gmra.mrb[0].mxu0 %v2719
    %v3019 = vpop.f32.mrb[0].mxu0
    %v3020 = vadd.f32 %v405, %v3019
    %v3021 = vpop.f32.mrb[0].mxu0
    %3022 = vdwg.mxu0
    %v3023 = vadd.f32 %v283, %v2949
    %v3024 = vadd.f32 %v285, %v2951
    %v3025 = vxor.u32 %v3023, 2147483648
    %v3026 = vxor.u32 %v3024, 2147483648
    %v3027 = vmul.f32 %v3025, 1.442695
    %v3028 = vpow.pop %v3027
    %v3029 = vmul.f32 %v3026, 1.442695
    %v3030 = vpow.pop %v3029
    %v3031 = vadd.f32 %v3028, 1.0
    %v3032 = vadd.f32 %v3030, 1.0
    %v3033 = vrcp.pop %v3031
    %v3034 = vmul.f32 1.0, %v3033
    %v3035 = vrcp.pop %v3032
    %v3036 = vmul.f32 1.0, %v3035
    %v3037 = vmul.f32 %v3034, %v3020
    %v3038 = vadd.f32 %v389, %v3037
    %v3039 = vtanh.pop %v3038
    %v3040 = vsub.f32 1.0, %v3036
    %v3041 = vmul.f32 %v3040, %v3039
    %v3042 = vmul.f32 %v3036, %v2719
    %v3043 = vadd.f32 %v3041, %v3042
    %v3044 = vmax.f32 %v3043, 0.0
    %3045 = vmatprep.subr.mxu0 %v643
    %3046 = vmatpush1.msra.mxu0 %v642
    %3047 = vmatprep.subr.mxu0 %v647
    %3048 = vmatpush1.msra.mxu0 %v646
    %3049 = vmatprep.subr.mxu0 %v651
    %3050 = vmatpush1.msra.mxu0 %v650
    %3051 = vmatprep.subr.mxu0 %v655
    %3052 = vmatpush1.msra.mxu0 %v654
    %3053 = vmatprep.subr.mxu0 %v659
    %3054 = vmatpush1.msra.mxu0 %v658
    %3055 = vmatprep.subr.mxu0 %v663
    %3056 = vmatpush1.msra.mxu0 %v662
    %3057 = vmatprep.subr.mxu0 %v667
    %3058 = vmatpush1.msra.mxu0 %v666
    %3059 = vmatprep.subr.mxu0 %v671
    %3060 = vmatpush1.msra.mxu0 %v670
    %3061 = vmatprep.subr.mxu0 %v675
    %3062 = vmatpush1.msra.mxu0 %v674
    %3063 = vmatprep.subr.mxu0 %v679
    %3064 = vmatpush1.msra.mxu0 %v678
    %3065 = vmatprep.subr.mxu0 %v683
    %3066 = vmatpush1.msra.mxu0 %v682
    %3067 = vmatprep.subr.mxu0 %v687
    %3068 = vmatpush1.msra.mxu0 %v686
    %3069 = vmatprep.subr.mxu0 %v691
    %3070 = vmatpush1.msra.mxu0 %v690
    %3071 = vmatprep.subr.mxu0 %v695
    %3072 = vmatpush1.msra.mxu0 %v694
    %3073 = vmatprep.subr.mxu0 %v699
    %3074 = vmatpush1.msra.mxu0 %v698
    %3075 = vmatprep.subr.mxu0 %v703
    %3076 = vmatpush1.msra.mxu0 %v702
    %3077 = vmatprep.subr.mxu0 %v707
    %3078 = vmatpush1.msra.mxu0 %v706
    %3079 = vmatprep.subr.mxu0 %v711
    %3080 = vmatpush1.msra.mxu0 %v710
    %3081 = vmatprep.subr.mxu0 %v715
    %3082 = vmatpush1.msra.mxu0 %v714
    %3083 = vmatprep.subr.mxu0 %v719
    %3084 = vmatpush1.msra.mxu0 %v718
    %3085 = vmatprep.subr.mxu0 %v723
    %3086 = vmatpush1.msra.mxu0 %v722
    %3087 = vmatprep.subr.mxu0 %v727
    %3088 = vmatpush1.msra.mxu0 %v726
    %3089 = vmatprep.subr.mxu0 %v731
    %3090 = vmatpush1.msra.mxu0 %v730
    %3091 = vmatprep.subr.mxu0 %v735
    %3092 = vmatpush1.msra.mxu0 %v734
    %3093 = vmatprep.subr.mxu0 %v739
    %3094 = vmatpush1.msra.mxu0 %v738
    %3095 = vmatprep.subr.mxu0 %v743
    %3096 = vmatpush1.msra.mxu0 %v742
    %3097 = vmatprep.subr.mxu0 %v747
    %3098 = vmatpush1.msra.mxu0 %v746
    %3099 = vmatprep.subr.mxu0 %v751
    %3100 = vmatpush1.msra.mxu0 %v750
    %3101 = vmatprep.subr.mxu0 %v755
    %3102 = vmatpush1.msra.mxu0 %v754
    %3103 = vmatprep.subr.mxu0 %v759
    %3104 = vmatpush1.msra.mxu0 %v758
    %3105 = vmatprep.subr.mxu0 %v763
    %3106 = vmatpush1.msra.mxu0 %v762
    %3107 = vmatprep.subr.mxu0 %v767
    %3108 = vmatpush1.msra.mxu0 %v766
    %3109 = vmatprep.mubr.f32.mxu0 %v2881
    %3110 = vmatmul.mubr.f32.gmra.mrb[0].mxu0 %v3044
    %v3111 = vpop.f32.mrb[0].mxu0
    %v3112 = vadd.f32 %v414, %v3111
    %v3113 = vpop.f32.mrb[0].mxu0
    %v3114 = vadd.f32 %v418, %v3113
    %3115 = vdwg.mxu0
    %3116 = vmatprep.subr.mxu0 %v645
    %3117 = vmatpush1.msra.mxu0 %v644
    %3118 = vmatprep.subr.mxu0 %v649
    %3119 = vmatpush1.msra.mxu0 %v648
    %3120 = vmatprep.subr.mxu0 %v653
    %3121 = vmatpush1.msra.mxu0 %v652
    %3122 = vmatprep.subr.mxu0 %v657
    %3123 = vmatpush1.msra.mxu0 %v656
    %3124 = vmatprep.subr.mxu0 %v661
    %3125 = vmatpush1.msra.mxu0 %v660
    %3126 = vmatprep.subr.mxu0 %v665
    %3127 = vmatpush1.msra.mxu0 %v664
    %3128 = vmatprep.subr.mxu0 %v669
    %3129 = vmatpush1.msra.mxu0 %v668
    %3130 = vmatprep.subr.mxu0 %v673
    %3131 = vmatpush1.msra.mxu0 %v672
    %3132 = vmatprep.subr.mxu0 %v677
    %3133 = vmatpush1.msra.mxu0 %v676
    %3134 = vmatprep.subr.mxu0 %v681
    %3135 = vmatpush1.msra.mxu0 %v680
    %3136 = vmatprep.subr.mxu0 %v685
    %3137 = vmatpush1.msra.mxu0 %v684
    %3138 = vmatprep.subr.mxu0 %v689
    %3139 = vmatpush1.msra.mxu0 %v688
    %3140 = vmatprep.subr.mxu0 %v693
    %3141 = vmatpush1.msra.mxu0 %v692
    %3142 = vmatprep.subr.mxu0 %v697
    %3143 = vmatpush1.msra.mxu0 %v696
    %3144 = vmatprep.subr.mxu0 %v701
    %3145 = vmatpush1.msra.mxu0 %v700
    %3146 = vmatprep.subr.mxu0 %v705
    %3147 = vmatpush1.msra.mxu0 %v704
    %3148 = vmatprep.subr.mxu0 %v709
    %3149 = vmatpush1.msra.mxu0 %v708
    %3150 = vmatprep.subr.mxu0 %v713
    %3151 = vmatpush1.msra.mxu0 %v712
    %3152 = vmatprep.subr.mxu0 %v717
    %3153 = vmatpush1.msra.mxu0 %v716
    %3154 = vmatprep.subr.mxu0 %v721
    %3155 = vmatpush1.msra.mxu0 %v720
    %3156 = vmatprep.subr.mxu0 %v725
    %3157 = vmatpush1.msra.mxu0 %v724
    %3158 = vmatprep.subr.mxu0 %v729
    %3159 = vmatpush1.msra.mxu0 %v728
    %3160 = vmatprep.subr.mxu0 %v733
    %3161 = vmatpush1.msra.mxu0 %v732
    %3162 = vmatprep.subr.mxu0 %v737
    %3163 = vmatpush1.msra.mxu0 %v736
    %3164 = vmatprep.subr.mxu0 %v741
    %3165 = vmatpush1.msra.mxu0 %v740
    %3166 = vmatprep.subr.mxu0 %v745
    %3167 = vmatpush1.msra.mxu0 %v744
    %3168 = vmatprep.subr.mxu0 %v749
    %3169 = vmatpush1.msra.mxu0 %v748
    %3170 = vmatprep.subr.mxu0 %v753
    %3171 = vmatpush1.msra.mxu0 %v752
    %3172 = vmatprep.subr.mxu0 %v757
    %3173 = vmatpush1.msra.mxu0 %v756
    %3174 = vmatprep.subr.mxu0 %v761
    %3175 = vmatpush1.msra.mxu0 %v760
    %3176 = vmatprep.subr.mxu0 %v765
    %3177 = vmatpush1.msra.mxu0 %v764
    %3178 = vmatprep.subr.mxu0 %v769
    %3179 = vmatpush1.msra.mxu0 %v768
    %3180 = vmatprep.mubr.f32.mxu0 %v2881
    %3181 = vmatmul.mubr.f32.gmra.mrb[0].mxu0 %v3044
    %v3182 = vpop.f32.mrb[0].mxu0
    %v3183 = vadd.f32 %v422, %v3182
    %v3184 = vpop.f32.mrb[0].mxu0
    %v3185 = vadd.f32 %v426, %v3184
    %3186 = vdwg.mxu0
    %v3187 = vxor.u32 %v3112, 2147483648
    %v3188 = vxor.u32 %v3114, 2147483648
    %v3189 = vmul.f32 %v3187, 1.442695
    %v3190 = vpow.pop %v3189
    %v3191 = vmul.f32 %v3188, 1.442695
    %v3192 = vpow.pop %v3191
    %v3193 = vadd.f32 %v3190, 1.0
    %v3194 = vadd.f32 %v3192, 1.0
    %v3195 = vrcp.pop %v3193
    %v3196 = vmul.f32 1.0, %v3195
    %v3197 = vrcp.pop %v3194
    %v3198 = vmul.f32 1.0, %v3197
    %v3199 = vmul.f32 %v3196, %v3185
    %v3200 = vadd.f32 %v3183, %v3199
    %v3201 = vtanh.pop %v3200
    %v3202 = vsub.f32 1.0, %v3198
    %v3203 = vmul.f32 %v3202, %v3201
    %v3204 = vmul.f32 %v3198, %v2881
    %v3205 = vadd.f32 %v3203, %v3204
    %v3206 = vmax.f32 %v3205, 0.0
    %v3207 = vld [vmem:[#allocation10] sm:$0xff]
    %v3208 = vld [vmem:[#allocation10 + $0x8] sm:$0xff]
    %v3209 = vld [vmem:[#allocation10 + $0x10] sm:$0xff]
    %v3210 = vld [vmem:[#allocation10 + $0x18] sm:$0xff]
    %v3211 = vld [vmem:[#allocation10 + $0x20] sm:$0xff]
    %v3212 = vld [vmem:[#allocation10 + $0x28] sm:$0xff]
    %v3213 = vld [vmem:[#allocation10 + $0x30] sm:$0xff]
    %v3214 = vld [vmem:[#allocation10 + $0x38] sm:$0xff]
    %v3215 = vld [vmem:[#allocation10 + $0x40] sm:$0xff]
    %v3216 = vld [vmem:[#allocation10 + $0x48] sm:$0xff]
    %v3217 = vld [vmem:[#allocation10 + $0x50] sm:$0xff]
    %v3218 = vld [vmem:[#allocation10 + $0x58] sm:$0xff]
    %v3219 = vld [vmem:[#allocation10 + $0x60] sm:$0xff]
    %v3220 = vld [vmem:[#allocation10 + $0x68] sm:$0xff]
    %v3221 = vld [vmem:[#allocation10 + $0x70] sm:$0xff]
    %v3222 = vld [vmem:[#allocation10 + $0x78] sm:$0xff]
    %v3223 = vld [vmem:[%s8] sm:$0x1]
    %v3225 = vlaneseq
    %v3226 = vshrl.u32 %v3225, 7
    %v3227 = vsub.s32 0, %v3226
    %v3228 = vrot.slane %v3223, %v3227
    %3230 = vmatprep.subr.mxu0 0.0
    %3231 = vmatpush1.msra.mxu0 %v3207
    %3232 = vmatprep.subr.mxu0 0.0
    %3233 = vmatpush1.msra.mxu0 %v3208
    %3234 = vmatprep.subr.mxu0 0.0
    %3235 = vmatpush1.msra.mxu0 %v3209
    %3236 = vmatprep.subr.mxu0 0.0
    %3237 = vmatpush1.msra.mxu0 %v3210
    %3238 = vmatprep.subr.mxu0 0.0
    %3239 = vmatpush1.msra.mxu0 %v3211
    %3240 = vmatprep.subr.mxu0 0.0
    %3241 = vmatpush1.msra.mxu0 %v3212
    %3242 = vmatprep.subr.mxu0 0.0
    %3243 = vmatpush1.msra.mxu0 %v3213
    %3244 = vmatprep.subr.mxu0 0.0
    %3245 = vmatpush1.msra.mxu0 %v3214
    %3246 = vmatprep.subr.mxu0 0.0
    %3247 = vmatpush1.msra.mxu0 %v3215
    %3248 = vmatprep.subr.mxu0 0.0
    %3249 = vmatpush1.msra.mxu0 %v3216
    %3250 = vmatprep.subr.mxu0 0.0
    %3251 = vmatpush1.msra.mxu0 %v3217
    %3252 = vmatprep.subr.mxu0 0.0
    %3253 = vmatpush1.msra.mxu0 %v3218
    %3254 = vmatprep.subr.mxu0 0.0
    %3255 = vmatpush1.msra.mxu0 %v3219
    %3256 = vmatprep.subr.mxu0 0.0
    %3257 = vmatpush1.msra.mxu0 %v3220
    %3258 = vmatprep.subr.mxu0 0.0
    %3259 = vmatpush1.msra.mxu0 %v3221
    %3260 = vmatprep.subr.mxu0 0.0
    %3261 = vmatpush1.msra.mxu0 %v3222
    %3262 = vmatprep.subr.mxu0 0.0
    %3263 = vmatpush1.msra.mxu0 0.0
    %3264 = vmatprep.subr.mxu0 0.0
    %3265 = vmatpush1.msra.mxu0 0.0
    %3266 = vmatprep.subr.mxu0 0.0
    %3267 = vmatpush1.msra.mxu0 0.0
    %3268 = vmatprep.subr.mxu0 0.0
    %3269 = vmatpush1.msra.mxu0 0.0
    %3270 = vmatprep.subr.mxu0 0.0
    %3271 = vmatpush1.msra.mxu0 0.0
    %3272 = vmatprep.subr.mxu0 0.0
    %3273 = vmatpush1.msra.mxu0 0.0
    %3274 = vmatprep.subr.mxu0 0.0
    %3275 = vmatpush1.msra.mxu0 0.0
    %3276 = vmatprep.subr.mxu0 0.0
    %3277 = vmatpush1.msra.mxu0 0.0
    %3278 = vmatprep.subr.mxu0 0.0
    %3279 = vmatpush1.msra.mxu0 0.0
    %3280 = vmatprep.subr.mxu0 0.0
    %3281 = vmatpush1.msra.mxu0 0.0
    %3282 = vmatprep.subr.mxu0 0.0
    %3283 = vmatpush1.msra.mxu0 0.0
    %3284 = vmatprep.subr.mxu0 0.0
    %3285 = vmatpush1.msra.mxu0 0.0
    %3286 = vmatprep.subr.mxu0 0.0
    %3287 = vmatpush1.msra.mxu0 0.0
    %3288 = vmatprep.subr.mxu0 0.0
    %3289 = vmatpush1.msra.mxu0 0.0
    %3290 = vmatprep.subr.mxu0 0.0
    %3291 = vmatpush1.msra.mxu0 0.0
    %3292 = vmatprep.subr.mxu0 0.0
    %3293 = vmatpush1.msra.mxu0 0.0
    %3294 = vmatprep.mubr.f32.mxu0 0.0
    %3295 = vmatmul.mubr.f32.gmra.mrb[0].mxu0 %v3206
    %v3296 = vpop.f32.mrb[0].mxu0
    %v3297 = vadd.f32 %v3228, %v3296
    %v3298 = vpop.f32.mrb[0].mxu0
    %3299 = vdwg.mxu0
    %3300 = vst [vmem:[#allocation11] sm:$0xff] %v3297
    // Predicated region
    $region58: #{tpu_custom_call.1} parent=1 // pred_check
      _
    $region59: #{tpu_custom_call.1} parent=1 // pred_check_branch
      %3302 = sbr.rel (0) target = $region61
    $region60: #{tpu_custom_call.1} parent=1 // pred_region
      %s3304 = ssub.s32 128, 128
      %3305 = vsyncadd [#allocation4], %s3304
      %s3307 = sshll.u32 [#allocation11], 4
      %s3308 = int_to_ptr.vmem [resolvable:$true] %s3307
      %3310 = dma.vmem_to_hbm [thread:$0]  %s3308, 128, %s9, [#allocation4]
    $region61: #{tpu_custom_call.1} parent=1 // pred_fallthru
      _
    // Predicated region
    $region62: #{tpu_custom_call.1} parent=1 // pred_check
      _
    $region63: #{tpu_custom_call.1} parent=1 // pred_check_branch
      %3312 = sbr.rel (0) target = $region65
    $region64: #{tpu_custom_call.1} parent=1 // pred_region
      %3313 = dma.done [#allocation4], 128
    $region65: #{tpu_custom_call.1} parent=1 // pred_fallthru
      _
    %3314 = vsyncpa [#allocation3], 1
    %3315 = vsyncpa [#allocation6], 1
    %3316 = vsyncpa [#allocation9], 1
    %3317 = vsyncpa [#allocation4], 1

</llo_original>
